<compile_context>
chip_gen: v7x
topology: tpu7x:2x2x1
jax: 0.10.0
libtpu: 0.0.40
codegen_flags: <defaults>
</compile_context>

<pallas_src>
import math
import functools

import jax
import jax.numpy as jnp
from jax.experimental import pallas as pl
from jax.experimental.pallas import tpu as pltpu

DECK_SIZE = 12
EMB_DIM = 128

# Small, forward-consistent config (model_dim % heads == 0).
CFG = dict(model_dim=128, heads=4, dim_feedforward=256, layers=2)

# Decks per grid step (upper bound). 32 * 12 = 384 token rows per step, which
# fills the MXU M dimension on v5e/v6e/v7x while keeping VMEM use at ~2-3 MiB.
MAX_DECKS_PER_STEP = 32


def _silu(x):
    return x * jax.nn.sigmoid(x)


def _gelu(x):
    # exact (erf) GELU, matching PyTorch activation='gelu'
    return 0.5 * x * (1.0 + jax.lax.erf(x * (1.0 / math.sqrt(2.0))))


def _layer_norm(x, g, b, eps=1e-5):
    mu = jnp.mean(x, axis=-1, keepdims=True)
    var = jnp.mean((x - mu) ** 2, axis=-1, keepdims=True)
    return (x - mu) * jax.lax.rsqrt(var + eps) * g + b


def _make_kernel(S, E, D, H, FF, L, BB):
    dh = D // H
    N = BB * S

    def kernel(h_ref, neg_mask_ref,
               iw, ib, wqkv, bqkv, wo, bo,
               wff1, bff1, wff2, bff2, lnp, ow, ob,
               out_ref):
        dot = functools.partial(jnp.dot, preferred_element_type=jnp.float32)
        bf16 = lambda a: a.astype(jnp.bfloat16)

        # Block-diagonal additive mask: a token attends only within its deck.
        neg_mask = neg_mask_ref[...]                              # (N, N) f32

        h = h_ref[...]                                            # (N, E) f32
        # ---- input projection ----
        src = dot(bf16(h), iw[...]) + ib[...]                     # (N, D) f32

        # ---- transformer encoder (post-LN; dropout == identity) ----
        # TODO(synk): dropout (p=0.1) inside TransformerEncoderLayer is identity here (eval mode).
        for layer in range(L):
            wqkv_l = wqkv[layer]                                  # (D, 3D) bf16
            bqkv_l = bqkv[layer]                                  # (1, 3D) f32
            wo_l = wo[layer]                                      # (D, D)  bf16
            bo_l = bo[layer]                                      # (1, D)  f32
            wff1_l = wff1[layer]                                  # (D, FF) bf16
            bff1_l = bff1[layer]                                  # (1, FF) f32
            wff2_l = wff2[layer]                                  # (FF, D) bf16
            bff2_l = bff2[layer]                                  # (1, D)  f32
            ln_l = lnp[layer]                                     # (4, D)  f32

            qkv = dot(bf16(src), wqkv_l) + bqkv_l                 # (N, 3D) f32
            q = bf16(qkv[:, 0:D])        # attention scale pre-folded into Wq
            k = bf16(qkv[:, D:2 * D])
            v = bf16(qkv[:, 2 * D:3 * D])

            attn = jnp.zeros((N, D), jnp.float32)
            for hh in range(H):
                lo, hi = hh * dh, (hh + 1) * dh
                s = jax.lax.dot_general(
                    q[:, lo:hi], k[:, lo:hi], (((1,), (1,)), ((), ())),
                    preferred_element_type=jnp.float32)           # (N, N)
                s = s + neg_mask
                s = s - jnp.max(s, axis=-1, keepdims=True)
                p = jnp.exp(s)
                p = p * pl.reciprocal(jnp.sum(p, axis=-1, keepdims=True),
                                      approx=True)
                oh = dot(bf16(p), v[:, lo:hi])                    # (N, dh)
                # fold head output straight through the matching W_o rows
                attn = attn + dot(bf16(oh), wo_l[lo:hi, :])       # (N, D)
            attn = attn + bo_l

            src = _layer_norm(src + attn, ln_l[0:1, :], ln_l[1:2, :])
            ff = _gelu(dot(bf16(src), wff1_l) + bff1_l)           # (N, FF)
            ff = dot(bf16(ff), wff2_l) + bff2_l                   # (N, D)
            src = _layer_norm(src + ff, ln_l[2:3, :], ln_l[3:4, :])

        # ---- output projection ----
        out_ref[...] = dot(bf16(src), ow[...]) + ob[...]          # (N, E) f32

    return kernel


def init_params(key, cfg):
    D = cfg["model_dim"]
    FF = cfg["dim_feedforward"]
    L = cfg["layers"]
    shapes = {
        "tw1": (EMB_DIM, FF), "tb1": (1, FF),
        "tw2": (FF, EMB_DIM), "tb2": (1, EMB_DIM),
        "mw1": (1, EMB_DIM), "mb1": (1, EMB_DIM),
        "mw2": (EMB_DIM, EMB_DIM), "mb2": (1, EMB_DIM),
        "ftab": (5, EMB_DIM),
        "iw": (EMB_DIM, D), "ib": (1, D),
        "wqkv": (L, D, 3 * D), "bqkv": (L, 3 * D),
        "wo": (L, D, D), "bo": (L, D),
        "wff1": (L, D, FF), "bff1": (L, FF),
        "wff2": (L, FF, D), "bff2": (L, D),
        "ow": (D, EMB_DIM), "ob": (1, EMB_DIM),
    }
    keys = jax.random.split(key, len(shapes))
    params = {n: jax.random.normal(k, s, jnp.float32) * 0.02
              for (n, s), k in zip(shapes.items(), keys)}
    params["ln1g"] = jnp.ones((L, D), jnp.float32)
    params["ln1b"] = jnp.zeros((L, D), jnp.float32)
    params["ln2g"] = jnp.ones((L, D), jnp.float32)
    params["ln2b"] = jnp.zeros((L, D), jnp.float32)
    return params


def _prep_kernel_weights(params, cfg):
    """Fold attention scale into W_q/b_q, cast matmul weights to bf16, pack LN
    params, and make every bias lane-dense 2-D/3-D."""
    D = cfg["model_dim"]
    H = cfg["heads"]
    dh = D // H
    scale = 1.0 / math.sqrt(dh)

    wqkv = params["wqkv"].at[:, :, :D].multiply(scale)            # fold 1/sqrt(dh)
    bqkv = params["bqkv"].at[:, :D].multiply(scale)

    lnp = jnp.stack([params["ln1g"], params["ln1b"],
                     params["ln2g"], params["ln2b"]], axis=1)     # (L, 4, D) f32

    bf = lambda a: a.astype(jnp.bfloat16)
    return [
        bf(params["iw"]), params["ib"],
        bf(wqkv), bqkv[:, None, :],
        bf(params["wo"]), params["bo"][:, None, :],
        bf(params["wff1"]), params["bff1"][:, None, :],
        bf(params["wff2"]), params["bff2"][:, None, :],
        lnp,
        bf(params["ow"]), params["ob"],
    ]


def stormbound_forward(x_t, t, mask, faction, params, cfg):
    B = x_t.shape[0]
    D = cfg["model_dim"]
    H = cfg["heads"]
    FF = cfg["dim_feedforward"]
    L = cfg["layers"]

    x_t = x_t.astype(jnp.float32)
    mask = mask.astype(jnp.float32)

    # ---- conditioning (tiny MLPs / gathers) computed in plain XLA ----
    half = EMB_DIM // 2
    freqs = jnp.exp(-math.log(10000.0) *
                    jnp.arange(half, dtype=jnp.float32) / (half - 1))
    args = t.astype(jnp.float32)[:, None] * freqs[None, :]
    sin_emb = jnp.concatenate([jnp.sin(args), jnp.cos(args)], axis=-1)    # (B, 128)
    time_emb = (_silu(sin_emb @ params["tw1"] + params["tb1"])
                @ params["tw2"] + params["tb2"])                          # (B, 128)
    mask_emb = (_silu(mask * params["mw1"] + params["mb1"])
                @ params["mw2"] + params["mb2"])                          # (B, 12, 128)
    fac_emb = params["ftab"][faction]                                     # (B, 128)
    h = x_t + time_emb[:, None, :] + mask_emb + fac_emb[:, None, :]       # (B, 12, 128)

    # ---- batch decks into large token blocks for the kernel ----
    BB = min(MAX_DECKS_PER_STEP, 2 * pl.cdiv(B, 2))   # even => (BB*12) % 8 == 0
    B_pad = pl.cdiv(B, BB) * BB
    if B_pad != B:
        h = jnp.pad(h, ((0, B_pad - B), (0, 0), (0, 0)))
    h_tok = h.reshape(B_pad * DECK_SIZE, EMB_DIM)                         # (B_pad*12, 128)

    N = BB * DECK_SIZE
    deck_ids = jnp.arange(N, dtype=jnp.int32) // DECK_SIZE
    neg_mask = jnp.where(deck_ids[:, None] == deck_ids[None, :],
                         0.0, -1e30).astype(jnp.float32)                  # (N, N)

    kernel = _make_kernel(DECK_SIZE, EMB_DIM, D, H, FF, L, BB)
    weights = _prep_kernel_weights(params, cfg)

    vmem_full = pl.BlockSpec(memory_space=pltpu.MemorySpace.VMEM)
    tok_spec = pl.BlockSpec((N, EMB_DIM), lambda i: (i, 0))

    out_tok = pl.pallas_call(
        kernel,
        out_shape=jax.ShapeDtypeStruct((B_pad * DECK_SIZE, EMB_DIM), jnp.float32),
        grid=(B_pad // BB,),
        in_specs=[tok_spec, vmem_full] + [vmem_full] * len(weights),
        out_specs=tok_spec,
        compiler_params=pltpu.CompilerParams(
            dimension_semantics=("parallel",)),
    )(h_tok, neg_mask, *weights)

    return out_tok.reshape(B_pad, DECK_SIZE, EMB_DIM)[:B]


if __name__ == "__main__":
    key = jax.random.PRNGKey(0)
    kx, kt, km, kf, kp = jax.random.split(key, 5)

    B = 2
    x_t = jax.random.normal(kx, (B, DECK_SIZE, EMB_DIM), jnp.float32)
    t = jax.random.randint(kt, (B,), 0, 1000)
    mask = (jax.random.uniform(km, (B, DECK_SIZE, 1)) > 0.5).astype(jnp.float32)
    faction = jax.random.randint(kf, (B,), 0, 5)

    params = init_params(kp, CFG)

    out = stormbound_forward(x_t, t, mask, faction, params, CFG)
    out = jax.block_until_ready(out)
    assert out.shape == (B, DECK_SIZE, EMB_DIM)
    assert bool(jnp.all(jnp.isfinite(out)))
    print("KERNEL_OK")
</pallas_src>

<mosaic_0001>
module attributes {stable_mosaic.version = 11 : i64} {
  func.func @kernel(%arg0: i32, %arg1: memref<24x128xf32, #tpu.memory_space<vmem>>, %arg2: memref<24x24xf32, #tpu.memory_space<vmem>>, %arg3: memref<128x128xbf16, #tpu.memory_space<vmem>>, %arg4: memref<1x128xf32, #tpu.memory_space<vmem>>, %arg5: memref<2x128x384xbf16, #tpu.memory_space<vmem>>, %arg6: memref<2x1x384xf32, #tpu.memory_space<vmem>>, %arg7: memref<2x128x128xbf16, #tpu.memory_space<vmem>>, %arg8: memref<2x1x128xf32, #tpu.memory_space<vmem>>, %arg9: memref<2x128x256xbf16, #tpu.memory_space<vmem>>, %arg10: memref<2x1x256xf32, #tpu.memory_space<vmem>>, %arg11: memref<2x256x128xbf16, #tpu.memory_space<vmem>>, %arg12: memref<2x1x128xf32, #tpu.memory_space<vmem>>, %arg13: memref<2x4x128xf32, #tpu.memory_space<vmem>>, %arg14: memref<128x128xbf16, #tpu.memory_space<vmem>>, %arg15: memref<1x128xf32, #tpu.memory_space<vmem>>, %arg16: memref<24x128xf32, #tpu.memory_space<vmem>>) attributes {dimension_semantics = [#tpu.dimension_semantics<parallel>], iteration_bounds = array<i64: 1>, scalar_prefetch = 0 : i64, scratch_operands = 0 : i64, tpu.core_type = #tpu.core_type<tc>, window_params = [{transform_indices = @transform_0, window_bounds = array<i64: 24, 128>}, {pipeline_mode = #tpu.pipeline_mode<synchronous>, transform_indices = @transform_1, window_bounds = array<i64: 24, 24>}, {pipeline_mode = #tpu.pipeline_mode<synchronous>, transform_indices = @transform_2, window_bounds = array<i64: 128, 128>}, {pipeline_mode = #tpu.pipeline_mode<synchronous>, transform_indices = @transform_3, window_bounds = array<i64: 1, 128>}, {pipeline_mode = #tpu.pipeline_mode<synchronous>, transform_indices = @transform_4, window_bounds = array<i64: 2, 128, 384>}, {pipeline_mode = #tpu.pipeline_mode<synchronous>, transform_indices = @transform_5, window_bounds = array<i64: 2, 1, 384>}, {pipeline_mode = #tpu.pipeline_mode<synchronous>, transform_indices = @transform_6, window_bounds = array<i64: 2, 128, 128>}, {pipeline_mode = #tpu.pipeline_mode<synchronous>, transform_indices = @transform_7, window_bounds = array<i64: 2, 1, 128>}, {pipeline_mode = #tpu.pipeline_mode<synchronous>, transform_indices = @transform_8, window_bounds = array<i64: 2, 128, 256>}, {pipeline_mode = #tpu.pipeline_mode<synchronous>, transform_indices = @transform_9, window_bounds = array<i64: 2, 1, 256>}, {pipeline_mode = #tpu.pipeline_mode<synchronous>, transform_indices = @transform_10, window_bounds = array<i64: 2, 256, 128>}, {pipeline_mode = #tpu.pipeline_mode<synchronous>, transform_indices = @transform_11, window_bounds = array<i64: 2, 1, 128>}, {pipeline_mode = #tpu.pipeline_mode<synchronous>, transform_indices = @transform_12, window_bounds = array<i64: 2, 4, 128>}, {pipeline_mode = #tpu.pipeline_mode<synchronous>, transform_indices = @transform_13, window_bounds = array<i64: 128, 128>}, {pipeline_mode = #tpu.pipeline_mode<synchronous>, transform_indices = @transform_14, window_bounds = array<i64: 1, 128>}, {transform_indices = @transform_15, window_bounds = array<i64: 24, 128>}]} {
    %c0 = arith.constant 0 : index
    %c0_0 = arith.constant 0 : index
    %0 = vector.load %arg2[%c0, %c0_0] : memref<24x24xf32, #tpu.memory_space<vmem>>, vector<24x24xf32>
    %c0_1 = arith.constant 0 : index
    %c0_2 = arith.constant 0 : index
    %1 = vector.load %arg1[%c0_1, %c0_2] : memref<24x128xf32, #tpu.memory_space<vmem>>, vector<24x128xf32>
    %2 = arith.truncf %1 : vector<24x128xf32> to vector<24x128xbf16>
    %c0_3 = arith.constant 0 : index
    %c0_4 = arith.constant 0 : index
    %3 = vector.load %arg3[%c0_3, %c0_4] : memref<128x128xbf16, #tpu.memory_space<vmem>>, vector<128x128xbf16>
    %cst = arith.constant dense<0.000000e+00> : vector<24x128xf32>
    %4 = tpu.matmul %2, %3, %cst {dimension_numbers = #tpu.dot_dimension_numbers<[1], [0], [0], [1], [0, 0, 1, 1], [], []>} : vector<24x128xbf16>, vector<128x128xbf16>, vector<24x128xf32> -> vector<24x128xf32>
    %c0_5 = arith.constant 0 : index
    %c0_6 = arith.constant 0 : index
    %5 = vector.load %arg4[%c0_5, %c0_6] : memref<1x128xf32, #tpu.memory_space<vmem>>, vector<1x128xf32>
    %6 = vector.broadcast %5 : vector<1x128xf32> to vector<24x128xf32>
    %7 = arith.addf %4, %6 : vector<24x128xf32>
    %c0_7 = arith.constant 0 : index
    %c0_8 = arith.constant 0 : index
    %c0_9 = arith.constant 0 : index
    %8 = vector.load %arg5[%c0_7, %c0_8, %c0_9] : memref<2x128x384xbf16, #tpu.memory_space<vmem>>, vector<1x128x384xbf16>
    %9 = vector.shape_cast %8 : vector<1x128x384xbf16> to vector<128x384xbf16>
    %c0_10 = arith.constant 0 : index
    %c0_11 = arith.constant 0 : index
    %c0_12 = arith.constant 0 : index
    %10 = vector.load %arg6[%c0_10, %c0_11, %c0_12] : memref<2x1x384xf32, #tpu.memory_space<vmem>>, vector<1x1x384xf32>
    %11 = vector.shape_cast %10 : vector<1x1x384xf32> to vector<1x384xf32>
    %c0_13 = arith.constant 0 : index
    %c0_14 = arith.constant 0 : index
    %c0_15 = arith.constant 0 : index
    %12 = vector.load %arg7[%c0_13, %c0_14, %c0_15] : memref<2x128x128xbf16, #tpu.memory_space<vmem>>, vector<1x128x128xbf16>
    %13 = vector.shape_cast %12 : vector<1x128x128xbf16> to vector<128x128xbf16>
    %c0_16 = arith.constant 0 : index
    %c0_17 = arith.constant 0 : index
    %c0_18 = arith.constant 0 : index
    %14 = vector.load %arg8[%c0_16, %c0_17, %c0_18] : memref<2x1x128xf32, #tpu.memory_space<vmem>>, vector<1x1x128xf32>
    %15 = vector.shape_cast %14 : vector<1x1x128xf32> to vector<1x128xf32>
    %c0_19 = arith.constant 0 : index
    %c0_20 = arith.constant 0 : index
    %c0_21 = arith.constant 0 : index
    %16 = vector.load %arg9[%c0_19, %c0_20, %c0_21] : memref<2x128x256xbf16, #tpu.memory_space<vmem>>, vector<1x128x256xbf16>
    %17 = vector.shape_cast %16 : vector<1x128x256xbf16> to vector<128x256xbf16>
    %c0_22 = arith.constant 0 : index
    %c0_23 = arith.constant 0 : index
    %c0_24 = arith.constant 0 : index
    %18 = vector.load %arg10[%c0_22, %c0_23, %c0_24] : memref<2x1x256xf32, #tpu.memory_space<vmem>>, vector<1x1x256xf32>
    %19 = vector.shape_cast %18 : vector<1x1x256xf32> to vector<1x256xf32>
    %c0_25 = arith.constant 0 : index
    %c0_26 = arith.constant 0 : index
    %c0_27 = arith.constant 0 : index
    %20 = vector.load %arg11[%c0_25, %c0_26, %c0_27] : memref<2x256x128xbf16, #tpu.memory_space<vmem>>, vector<1x256x128xbf16>
    %21 = vector.shape_cast %20 : vector<1x256x128xbf16> to vector<256x128xbf16>
    %c0_28 = arith.constant 0 : index
    %c0_29 = arith.constant 0 : index
    %c0_30 = arith.constant 0 : index
    %22 = vector.load %arg12[%c0_28, %c0_29, %c0_30] : memref<2x1x128xf32, #tpu.memory_space<vmem>>, vector<1x1x128xf32>
    %23 = vector.shape_cast %22 : vector<1x1x128xf32> to vector<1x128xf32>
    %c0_31 = arith.constant 0 : index
    %c0_32 = arith.constant 0 : index
    %c0_33 = arith.constant 0 : index
    %24 = vector.load %arg13[%c0_31, %c0_32, %c0_33] : memref<2x4x128xf32, #tpu.memory_space<vmem>>, vector<1x4x128xf32>
    %25 = vector.shape_cast %24 : vector<1x4x128xf32> to vector<4x128xf32>
    %26 = arith.truncf %7 : vector<24x128xf32> to vector<24x128xbf16>
    %cst_34 = arith.constant dense<0.000000e+00> : vector<24x384xf32>
    %27 = tpu.matmul %26, %9, %cst_34 {dimension_numbers = #tpu.dot_dimension_numbers<[1], [0], [0], [1], [0, 0, 1, 1], [], []>} : vector<24x128xbf16>, vector<128x384xbf16>, vector<24x384xf32> -> vector<24x384xf32>
    %28 = vector.broadcast %11 : vector<1x384xf32> to vector<24x384xf32>
    %29 = arith.addf %27, %28 : vector<24x384xf32>
    %30 = vector.extract_strided_slice %29 {offsets = [0, 0], sizes = [24, 128], strides = [1, 1]} : vector<24x384xf32> to vector<24x128xf32>
    %31 = arith.truncf %30 : vector<24x128xf32> to vector<24x128xbf16>
    %32 = vector.extract_strided_slice %29 {offsets = [0, 128], sizes = [24, 128], strides = [1, 1]} : vector<24x384xf32> to vector<24x128xf32>
    %33 = arith.truncf %32 : vector<24x128xf32> to vector<24x128xbf16>
    %34 = vector.extract_strided_slice %29 {offsets = [0, 256], sizes = [24, 128], strides = [1, 1]} : vector<24x384xf32> to vector<24x128xf32>
    %35 = arith.truncf %34 : vector<24x128xf32> to vector<24x128xbf16>
    %cst_35 = arith.constant 0.000000e+00 : f32
    %36 = vector.broadcast %cst_35 : f32 to vector<24x128xf32>
    %37 = vector.extract_strided_slice %31 {offsets = [0, 0], sizes = [24, 32], strides = [1, 1]} : vector<24x128xbf16> to vector<24x32xbf16>
    %38 = vector.extract_strided_slice %33 {offsets = [0, 0], sizes = [24, 32], strides = [1, 1]} : vector<24x128xbf16> to vector<24x32xbf16>
    %cst_36 = arith.constant dense<0.000000e+00> : vector<24x24xf32>
    %39 = tpu.matmul %37, %38, %cst_36 {dimension_numbers = #tpu.dot_dimension_numbers<[1], [1], [0], [0], [0, 0, 1, 0], [], []>} : vector<24x32xbf16>, vector<24x32xbf16>, vector<24x24xf32> -> vector<24x24xf32>
    %40 = arith.addf %39, %0 : vector<24x24xf32>
    %cst_37 = arith.constant dense<0xFF800000> : vector<24xf32>
    %41 = vector.multi_reduction <maximumf>, %40, %cst_37 [1] : vector<24x24xf32> to vector<24xf32>
    %42 = vector.shape_cast %41 : vector<24xf32> to vector<24x1xf32>
    %43 = vector.broadcast %42 : vector<24x1xf32> to vector<24x24xf32>
    %44 = arith.subf %40, %43 : vector<24x24xf32>
    %45 = math.exp %44 : vector<24x24xf32>
    %cst_38 = arith.constant dense<0.000000e+00> : vector<24xf32>
    %46 = vector.multi_reduction <add>, %45, %cst_38 [1] : vector<24x24xf32> to vector<24xf32>
    %47 = vector.shape_cast %46 : vector<24xf32> to vector<24x1xf32>
    %48 = tpu.reciprocal %47 {approx = true} : vector<24x1xf32> -> vector<24x1xf32>
    %49 = vector.broadcast %48 : vector<24x1xf32> to vector<24x24xf32>
    %50 = arith.mulf %45, %49 : vector<24x24xf32>
    %51 = arith.truncf %50 : vector<24x24xf32> to vector<24x24xbf16>
    %52 = vector.extract_strided_slice %35 {offsets = [0, 0], sizes = [24, 32], strides = [1, 1]} : vector<24x128xbf16> to vector<24x32xbf16>
    %cst_39 = arith.constant dense<0.000000e+00> : vector<24x32xf32>
    %53 = tpu.matmul %51, %52, %cst_39 {dimension_numbers = #tpu.dot_dimension_numbers<[1], [0], [0], [1], [0, 0, 1, 1], [], []>} : vector<24x24xbf16>, vector<24x32xbf16>, vector<24x32xf32> -> vector<24x32xf32>
    %54 = arith.truncf %53 : vector<24x32xf32> to vector<24x32xbf16>
    %55 = vector.extract_strided_slice %13 {offsets = [0, 0], sizes = [32, 128], strides = [1, 1]} : vector<128x128xbf16> to vector<32x128xbf16>
    %cst_40 = arith.constant dense<0.000000e+00> : vector<24x128xf32>
    %56 = tpu.matmul %54, %55, %cst_40 {dimension_numbers = #tpu.dot_dimension_numbers<[1], [0], [0], [1], [0, 0, 1, 1], [], []>} : vector<24x32xbf16>, vector<32x128xbf16>, vector<24x128xf32> -> vector<24x128xf32>
    %57 = arith.addf %36, %56 : vector<24x128xf32>
    %58 = vector.extract_strided_slice %31 {offsets = [0, 32], sizes = [24, 32], strides = [1, 1]} : vector<24x128xbf16> to vector<24x32xbf16>
    %59 = vector.extract_strided_slice %33 {offsets = [0, 32], sizes = [24, 32], strides = [1, 1]} : vector<24x128xbf16> to vector<24x32xbf16>
    %cst_41 = arith.constant dense<0.000000e+00> : vector<24x24xf32>
    %60 = tpu.matmul %58, %59, %cst_41 {dimension_numbers = #tpu.dot_dimension_numbers<[1], [1], [0], [0], [0, 0, 1, 0], [], []>} : vector<24x32xbf16>, vector<24x32xbf16>, vector<24x24xf32> -> vector<24x24xf32>
    %61 = arith.addf %60, %0 : vector<24x24xf32>
    %cst_42 = arith.constant dense<0xFF800000> : vector<24xf32>
    %62 = vector.multi_reduction <maximumf>, %61, %cst_42 [1] : vector<24x24xf32> to vector<24xf32>
    %63 = vector.shape_cast %62 : vector<24xf32> to vector<24x1xf32>
    %64 = vector.broadcast %63 : vector<24x1xf32> to vector<24x24xf32>
    %65 = arith.subf %61, %64 : vector<24x24xf32>
    %66 = math.exp %65 : vector<24x24xf32>
    %cst_43 = arith.constant dense<0.000000e+00> : vector<24xf32>
    %67 = vector.multi_reduction <add>, %66, %cst_43 [1] : vector<24x24xf32> to vector<24xf32>
    %68 = vector.shape_cast %67 : vector<24xf32> to vector<24x1xf32>
    %69 = tpu.reciprocal %68 {approx = true} : vector<24x1xf32> -> vector<24x1xf32>
    %70 = vector.broadcast %69 : vector<24x1xf32> to vector<24x24xf32>
    %71 = arith.mulf %66, %70 : vector<24x24xf32>
    %72 = arith.truncf %71 : vector<24x24xf32> to vector<24x24xbf16>
    %73 = vector.extract_strided_slice %35 {offsets = [0, 32], sizes = [24, 32], strides = [1, 1]} : vector<24x128xbf16> to vector<24x32xbf16>
    %cst_44 = arith.constant dense<0.000000e+00> : vector<24x32xf32>
    %74 = tpu.matmul %72, %73, %cst_44 {dimension_numbers = #tpu.dot_dimension_numbers<[1], [0], [0], [1], [0, 0, 1, 1], [], []>} : vector<24x24xbf16>, vector<24x32xbf16>, vector<24x32xf32> -> vector<24x32xf32>
    %75 = arith.truncf %74 : vector<24x32xf32> to vector<24x32xbf16>
    %76 = vector.extract_strided_slice %13 {offsets = [32, 0], sizes = [32, 128], strides = [1, 1]} : vector<128x128xbf16> to vector<32x128xbf16>
    %cst_45 = arith.constant dense<0.000000e+00> : vector<24x128xf32>
    %77 = tpu.matmul %75, %76, %cst_45 {dimension_numbers = #tpu.dot_dimension_numbers<[1], [0], [0], [1], [0, 0, 1, 1], [], []>} : vector<24x32xbf16>, vector<32x128xbf16>, vector<24x128xf32> -> vector<24x128xf32>
    %78 = arith.addf %57, %77 : vector<24x128xf32>
    %79 = vector.extract_strided_slice %31 {offsets = [0, 64], sizes = [24, 32], strides = [1, 1]} : vector<24x128xbf16> to vector<24x32xbf16>
    %80 = vector.extract_strided_slice %33 {offsets = [0, 64], sizes = [24, 32], strides = [1, 1]} : vector<24x128xbf16> to vector<24x32xbf16>
    %cst_46 = arith.constant dense<0.000000e+00> : vector<24x24xf32>
    %81 = tpu.matmul %79, %80, %cst_46 {dimension_numbers = #tpu.dot_dimension_numbers<[1], [1], [0], [0], [0, 0, 1, 0], [], []>} : vector<24x32xbf16>, vector<24x32xbf16>, vector<24x24xf32> -> vector<24x24xf32>
    %82 = arith.addf %81, %0 : vector<24x24xf32>
    %cst_47 = arith.constant dense<0xFF800000> : vector<24xf32>
    %83 = vector.multi_reduction <maximumf>, %82, %cst_47 [1] : vector<24x24xf32> to vector<24xf32>
    %84 = vector.shape_cast %83 : vector<24xf32> to vector<24x1xf32>
    %85 = vector.broadcast %84 : vector<24x1xf32> to vector<24x24xf32>
    %86 = arith.subf %82, %85 : vector<24x24xf32>
    %87 = math.exp %86 : vector<24x24xf32>
    %cst_48 = arith.constant dense<0.000000e+00> : vector<24xf32>
    %88 = vector.multi_reduction <add>, %87, %cst_48 [1] : vector<24x24xf32> to vector<24xf32>
    %89 = vector.shape_cast %88 : vector<24xf32> to vector<24x1xf32>
    %90 = tpu.reciprocal %89 {approx = true} : vector<24x1xf32> -> vector<24x1xf32>
    %91 = vector.broadcast %90 : vector<24x1xf32> to vector<24x24xf32>
    %92 = arith.mulf %87, %91 : vector<24x24xf32>
    %93 = arith.truncf %92 : vector<24x24xf32> to vector<24x24xbf16>
    %94 = vector.extract_strided_slice %35 {offsets = [0, 64], sizes = [24, 32], strides = [1, 1]} : vector<24x128xbf16> to vector<24x32xbf16>
    %cst_49 = arith.constant dense<0.000000e+00> : vector<24x32xf32>
    %95 = tpu.matmul %93, %94, %cst_49 {dimension_numbers = #tpu.dot_dimension_numbers<[1], [0], [0], [1], [0, 0, 1, 1], [], []>} : vector<24x24xbf16>, vector<24x32xbf16>, vector<24x32xf32> -> vector<24x32xf32>
    %96 = arith.truncf %95 : vector<24x32xf32> to vector<24x32xbf16>
    %97 = vector.extract_strided_slice %13 {offsets = [64, 0], sizes = [32, 128], strides = [1, 1]} : vector<128x128xbf16> to vector<32x128xbf16>
    %cst_50 = arith.constant dense<0.000000e+00> : vector<24x128xf32>
    %98 = tpu.matmul %96, %97, %cst_50 {dimension_numbers = #tpu.dot_dimension_numbers<[1], [0], [0], [1], [0, 0, 1, 1], [], []>} : vector<24x32xbf16>, vector<32x128xbf16>, vector<24x128xf32> -> vector<24x128xf32>
    %99 = arith.addf %78, %98 : vector<24x128xf32>
    %100 = vector.extract_strided_slice %31 {offsets = [0, 96], sizes = [24, 32], strides = [1, 1]} : vector<24x128xbf16> to vector<24x32xbf16>
    %101 = vector.extract_strided_slice %33 {offsets = [0, 96], sizes = [24, 32], strides = [1, 1]} : vector<24x128xbf16> to vector<24x32xbf16>
    %cst_51 = arith.constant dense<0.000000e+00> : vector<24x24xf32>
    %102 = tpu.matmul %100, %101, %cst_51 {dimension_numbers = #tpu.dot_dimension_numbers<[1], [1], [0], [0], [0, 0, 1, 0], [], []>} : vector<24x32xbf16>, vector<24x32xbf16>, vector<24x24xf32> -> vector<24x24xf32>
    %103 = arith.addf %102, %0 : vector<24x24xf32>
    %cst_52 = arith.constant dense<0xFF800000> : vector<24xf32>
    %104 = vector.multi_reduction <maximumf>, %103, %cst_52 [1] : vector<24x24xf32> to vector<24xf32>
    %105 = vector.shape_cast %104 : vector<24xf32> to vector<24x1xf32>
    %106 = vector.broadcast %105 : vector<24x1xf32> to vector<24x24xf32>
    %107 = arith.subf %103, %106 : vector<24x24xf32>
    %108 = math.exp %107 : vector<24x24xf32>
    %cst_53 = arith.constant dense<0.000000e+00> : vector<24xf32>
    %109 = vector.multi_reduction <add>, %108, %cst_53 [1] : vector<24x24xf32> to vector<24xf32>
    %110 = vector.shape_cast %109 : vector<24xf32> to vector<24x1xf32>
    %111 = tpu.reciprocal %110 {approx = true} : vector<24x1xf32> -> vector<24x1xf32>
    %112 = vector.broadcast %111 : vector<24x1xf32> to vector<24x24xf32>
    %113 = arith.mulf %108, %112 : vector<24x24xf32>
    %114 = arith.truncf %113 : vector<24x24xf32> to vector<24x24xbf16>
    %115 = vector.extract_strided_slice %35 {offsets = [0, 96], sizes = [24, 32], strides = [1, 1]} : vector<24x128xbf16> to vector<24x32xbf16>
    %cst_54 = arith.constant dense<0.000000e+00> : vector<24x32xf32>
    %116 = tpu.matmul %114, %115, %cst_54 {dimension_numbers = #tpu.dot_dimension_numbers<[1], [0], [0], [1], [0, 0, 1, 1], [], []>} : vector<24x24xbf16>, vector<24x32xbf16>, vector<24x32xf32> -> vector<24x32xf32>
    %117 = arith.truncf %116 : vector<24x32xf32> to vector<24x32xbf16>
    %118 = vector.extract_strided_slice %13 {offsets = [96, 0], sizes = [32, 128], strides = [1, 1]} : vector<128x128xbf16> to vector<32x128xbf16>
    %cst_55 = arith.constant dense<0.000000e+00> : vector<24x128xf32>
    %119 = tpu.matmul %117, %118, %cst_55 {dimension_numbers = #tpu.dot_dimension_numbers<[1], [0], [0], [1], [0, 0, 1, 1], [], []>} : vector<24x32xbf16>, vector<32x128xbf16>, vector<24x128xf32> -> vector<24x128xf32>
    %120 = arith.addf %99, %119 : vector<24x128xf32>
    %121 = vector.broadcast %15 : vector<1x128xf32> to vector<24x128xf32>
    %122 = arith.addf %120, %121 : vector<24x128xf32>
    %123 = arith.addf %7, %122 : vector<24x128xf32>
    %124 = vector.extract_strided_slice %25 {offsets = [0, 0], sizes = [1, 128], strides = [1, 1]} : vector<4x128xf32> to vector<1x128xf32>
    %125 = vector.extract_strided_slice %25 {offsets = [1, 0], sizes = [1, 128], strides = [1, 1]} : vector<4x128xf32> to vector<1x128xf32>
    %cst_56 = arith.constant dense<0.000000e+00> : vector<24xf32>
    %126 = vector.multi_reduction <add>, %123, %cst_56 [1] : vector<24x128xf32> to vector<24xf32>
    %127 = vector.shape_cast %126 : vector<24xf32> to vector<24x1xf32>
    %cst_57 = arith.constant 1.280000e+02 : f32
    %128 = vector.broadcast %cst_57 : f32 to vector<24x1xf32>
    %129 = arith.divf %127, %128 : vector<24x1xf32>
    %130 = vector.broadcast %129 : vector<24x1xf32> to vector<24x128xf32>
    %131 = arith.subf %123, %130 : vector<24x128xf32>
    %132 = arith.mulf %131, %131 : vector<24x128xf32>
    %cst_58 = arith.constant dense<0.000000e+00> : vector<24xf32>
    %133 = vector.multi_reduction <add>, %132, %cst_58 [1] : vector<24x128xf32> to vector<24xf32>
    %134 = vector.shape_cast %133 : vector<24xf32> to vector<24x1xf32>
    %cst_59 = arith.constant 1.280000e+02 : f32
    %135 = vector.broadcast %cst_59 : f32 to vector<24x1xf32>
    %136 = arith.divf %134, %135 : vector<24x1xf32>
    %137 = vector.broadcast %129 : vector<24x1xf32> to vector<24x128xf32>
    %138 = arith.subf %123, %137 : vector<24x128xf32>
    %cst_60 = arith.constant 9.99999974E-6 : f32
    %139 = vector.broadcast %cst_60 : f32 to vector<24x1xf32>
    %140 = arith.addf %136, %139 : vector<24x1xf32>
    %141 = math.rsqrt %140 : vector<24x1xf32>
    %142 = vector.broadcast %141 : vector<24x1xf32> to vector<24x128xf32>
    %143 = arith.mulf %138, %142 : vector<24x128xf32>
    %144 = vector.broadcast %124 : vector<1x128xf32> to vector<24x128xf32>
    %145 = arith.mulf %143, %144 : vector<24x128xf32>
    %146 = vector.broadcast %125 : vector<1x128xf32> to vector<24x128xf32>
    %147 = arith.addf %145, %146 : vector<24x128xf32>
    %148 = arith.truncf %147 : vector<24x128xf32> to vector<24x128xbf16>
    %cst_61 = arith.constant dense<0.000000e+00> : vector<24x256xf32>
    %149 = tpu.matmul %148, %17, %cst_61 {dimension_numbers = #tpu.dot_dimension_numbers<[1], [0], [0], [1], [0, 0, 1, 1], [], []>} : vector<24x128xbf16>, vector<128x256xbf16>, vector<24x256xf32> -> vector<24x256xf32>
    %150 = vector.broadcast %19 : vector<1x256xf32> to vector<24x256xf32>
    %151 = arith.addf %149, %150 : vector<24x256xf32>
    %cst_62 = arith.constant 5.000000e-01 : f32
    %152 = vector.broadcast %cst_62 : f32 to vector<24x256xf32>
    %153 = arith.mulf %152, %151 : vector<24x256xf32>
    %cst_63 = arith.constant 0.707106769 : f32
    %154 = vector.broadcast %cst_63 : f32 to vector<24x256xf32>
    %155 = arith.mulf %151, %154 : vector<24x256xf32>
    %156 = math.erf %155 : vector<24x256xf32>
    %cst_64 = arith.constant 1.000000e+00 : f32
    %157 = vector.broadcast %cst_64 : f32 to vector<24x256xf32>
    %158 = arith.addf %157, %156 : vector<24x256xf32>
    %159 = arith.mulf %153, %158 : vector<24x256xf32>
    %160 = arith.truncf %159 : vector<24x256xf32> to vector<24x256xbf16>
    %cst_65 = arith.constant dense<0.000000e+00> : vector<24x128xf32>
    %161 = tpu.matmul %160, %21, %cst_65 {dimension_numbers = #tpu.dot_dimension_numbers<[1], [0], [0], [1], [0, 0, 1, 1], [], []>} : vector<24x256xbf16>, vector<256x128xbf16>, vector<24x128xf32> -> vector<24x128xf32>
    %162 = vector.broadcast %23 : vector<1x128xf32> to vector<24x128xf32>
    %163 = arith.addf %161, %162 : vector<24x128xf32>
    %164 = arith.addf %147, %163 : vector<24x128xf32>
    %165 = vector.extract_strided_slice %25 {offsets = [2, 0], sizes = [1, 128], strides = [1, 1]} : vector<4x128xf32> to vector<1x128xf32>
    %166 = vector.extract_strided_slice %25 {offsets = [3, 0], sizes = [1, 128], strides = [1, 1]} : vector<4x128xf32> to vector<1x128xf32>
    %cst_66 = arith.constant dense<0.000000e+00> : vector<24xf32>
    %167 = vector.multi_reduction <add>, %164, %cst_66 [1] : vector<24x128xf32> to vector<24xf32>
    %168 = vector.shape_cast %167 : vector<24xf32> to vector<24x1xf32>
    %cst_67 = arith.constant 1.280000e+02 : f32
    %169 = vector.broadcast %cst_67 : f32 to vector<24x1xf32>
    %170 = arith.divf %168, %169 : vector<24x1xf32>
    %171 = vector.broadcast %170 : vector<24x1xf32> to vector<24x128xf32>
    %172 = arith.subf %164, %171 : vector<24x128xf32>
    %173 = arith.mulf %172, %172 : vector<24x128xf32>
    %cst_68 = arith.constant dense<0.000000e+00> : vector<24xf32>
    %174 = vector.multi_reduction <add>, %173, %cst_68 [1] : vector<24x128xf32> to vector<24xf32>
    %175 = vector.shape_cast %174 : vector<24xf32> to vector<24x1xf32>
    %cst_69 = arith.constant 1.280000e+02 : f32
    %176 = vector.broadcast %cst_69 : f32 to vector<24x1xf32>
    %177 = arith.divf %175, %176 : vector<24x1xf32>
    %178 = vector.broadcast %170 : vector<24x1xf32> to vector<24x128xf32>
    %179 = arith.subf %164, %178 : vector<24x128xf32>
    %cst_70 = arith.constant 9.99999974E-6 : f32
    %180 = vector.broadcast %cst_70 : f32 to vector<24x1xf32>
    %181 = arith.addf %177, %180 : vector<24x1xf32>
    %182 = math.rsqrt %181 : vector<24x1xf32>
    %183 = vector.broadcast %182 : vector<24x1xf32> to vector<24x128xf32>
    %184 = arith.mulf %179, %183 : vector<24x128xf32>
    %185 = vector.broadcast %165 : vector<1x128xf32> to vector<24x128xf32>
    %186 = arith.mulf %184, %185 : vector<24x128xf32>
    %187 = vector.broadcast %166 : vector<1x128xf32> to vector<24x128xf32>
    %188 = arith.addf %186, %187 : vector<24x128xf32>
    %c1 = arith.constant 1 : index
    %c0_71 = arith.constant 0 : index
    %c0_72 = arith.constant 0 : index
    %189 = vector.load %arg5[%c1, %c0_71, %c0_72] : memref<2x128x384xbf16, #tpu.memory_space<vmem>>, vector<1x128x384xbf16>
    %190 = vector.shape_cast %189 : vector<1x128x384xbf16> to vector<128x384xbf16>
    %c1_73 = arith.constant 1 : index
    %c0_74 = arith.constant 0 : index
    %c0_75 = arith.constant 0 : index
    %191 = vector.load %arg6[%c1_73, %c0_74, %c0_75] : memref<2x1x384xf32, #tpu.memory_space<vmem>>, vector<1x1x384xf32>
    %192 = vector.shape_cast %191 : vector<1x1x384xf32> to vector<1x384xf32>
    %c1_76 = arith.constant 1 : index
    %c0_77 = arith.constant 0 : index
    %c0_78 = arith.constant 0 : index
    %193 = vector.load %arg7[%c1_76, %c0_77, %c0_78] : memref<2x128x128xbf16, #tpu.memory_space<vmem>>, vector<1x128x128xbf16>
    %194 = vector.shape_cast %193 : vector<1x128x128xbf16> to vector<128x128xbf16>
    %c1_79 = arith.constant 1 : index
    %c0_80 = arith.constant 0 : index
    %c0_81 = arith.constant 0 : index
    %195 = vector.load %arg8[%c1_79, %c0_80, %c0_81] : memref<2x1x128xf32, #tpu.memory_space<vmem>>, vector<1x1x128xf32>
    %196 = vector.shape_cast %195 : vector<1x1x128xf32> to vector<1x128xf32>
    %c1_82 = arith.constant 1 : index
    %c0_83 = arith.constant 0 : index
    %c0_84 = arith.constant 0 : index
    %197 = vector.load %arg9[%c1_82, %c0_83, %c0_84] : memref<2x128x256xbf16, #tpu.memory_space<vmem>>, vector<1x128x256xbf16>
    %198 = vector.shape_cast %197 : vector<1x128x256xbf16> to vector<128x256xbf16>
    %c1_85 = arith.constant 1 : index
    %c0_86 = arith.constant 0 : index
    %c0_87 = arith.constant 0 : index
    %199 = vector.load %arg10[%c1_85, %c0_86, %c0_87] : memref<2x1x256xf32, #tpu.memory_space<vmem>>, vector<1x1x256xf32>
    %200 = vector.shape_cast %199 : vector<1x1x256xf32> to vector<1x256xf32>
    %c1_88 = arith.constant 1 : index
    %c0_89 = arith.constant 0 : index
    %c0_90 = arith.constant 0 : index
    %201 = vector.load %arg11[%c1_88, %c0_89, %c0_90] : memref<2x256x128xbf16, #tpu.memory_space<vmem>>, vector<1x256x128xbf16>
    %202 = vector.shape_cast %201 : vector<1x256x128xbf16> to vector<256x128xbf16>
    %c1_91 = arith.constant 1 : index
    %c0_92 = arith.constant 0 : index
    %c0_93 = arith.constant 0 : index
    %203 = vector.load %arg12[%c1_91, %c0_92, %c0_93] : memref<2x1x128xf32, #tpu.memory_space<vmem>>, vector<1x1x128xf32>
    %204 = vector.shape_cast %203 : vector<1x1x128xf32> to vector<1x128xf32>
    %c1_94 = arith.constant 1 : index
    %c0_95 = arith.constant 0 : index
    %c0_96 = arith.constant 0 : index
    %205 = vector.load %arg13[%c1_94, %c0_95, %c0_96] : memref<2x4x128xf32, #tpu.memory_space<vmem>>, vector<1x4x128xf32>
    %206 = vector.shape_cast %205 : vector<1x4x128xf32> to vector<4x128xf32>
    %207 = arith.truncf %188 : vector<24x128xf32> to vector<24x128xbf16>
    %cst_97 = arith.constant dense<0.000000e+00> : vector<24x384xf32>
    %208 = tpu.matmul %207, %190, %cst_97 {dimension_numbers = #tpu.dot_dimension_numbers<[1], [0], [0], [1], [0, 0, 1, 1], [], []>} : vector<24x128xbf16>, vector<128x384xbf16>, vector<24x384xf32> -> vector<24x384xf32>
    %209 = vector.broadcast %192 : vector<1x384xf32> to vector<24x384xf32>
    %210 = arith.addf %208, %209 : vector<24x384xf32>
    %211 = vector.extract_strided_slice %210 {offsets = [0, 0], sizes = [24, 128], strides = [1, 1]} : vector<24x384xf32> to vector<24x128xf32>
    %212 = arith.truncf %211 : vector<24x128xf32> to vector<24x128xbf16>
    %213 = vector.extract_strided_slice %210 {offsets = [0, 128], sizes = [24, 128], strides = [1, 1]} : vector<24x384xf32> to vector<24x128xf32>
    %214 = arith.truncf %213 : vector<24x128xf32> to vector<24x128xbf16>
    %215 = vector.extract_strided_slice %210 {offsets = [0, 256], sizes = [24, 128], strides = [1, 1]} : vector<24x384xf32> to vector<24x128xf32>
    %216 = arith.truncf %215 : vector<24x128xf32> to vector<24x128xbf16>
    %cst_98 = arith.constant 0.000000e+00 : f32
    %217 = vector.broadcast %cst_98 : f32 to vector<24x128xf32>
    %218 = vector.extract_strided_slice %212 {offsets = [0, 0], sizes = [24, 32], strides = [1, 1]} : vector<24x128xbf16> to vector<24x32xbf16>
    %219 = vector.extract_strided_slice %214 {offsets = [0, 0], sizes = [24, 32], strides = [1, 1]} : vector<24x128xbf16> to vector<24x32xbf16>
    %cst_99 = arith.constant dense<0.000000e+00> : vector<24x24xf32>
    %220 = tpu.matmul %218, %219, %cst_99 {dimension_numbers = #tpu.dot_dimension_numbers<[1], [1], [0], [0], [0, 0, 1, 0], [], []>} : vector<24x32xbf16>, vector<24x32xbf16>, vector<24x24xf32> -> vector<24x24xf32>
    %221 = arith.addf %220, %0 : vector<24x24xf32>
    %cst_100 = arith.constant dense<0xFF800000> : vector<24xf32>
    %222 = vector.multi_reduction <maximumf>, %221, %cst_100 [1] : vector<24x24xf32> to vector<24xf32>
    %223 = vector.shape_cast %222 : vector<24xf32> to vector<24x1xf32>
    %224 = vector.broadcast %223 : vector<24x1xf32> to vector<24x24xf32>
    %225 = arith.subf %221, %224 : vector<24x24xf32>
    %226 = math.exp %225 : vector<24x24xf32>
    %cst_101 = arith.constant dense<0.000000e+00> : vector<24xf32>
    %227 = vector.multi_reduction <add>, %226, %cst_101 [1] : vector<24x24xf32> to vector<24xf32>
    %228 = vector.shape_cast %227 : vector<24xf32> to vector<24x1xf32>
    %229 = tpu.reciprocal %228 {approx = true} : vector<24x1xf32> -> vector<24x1xf32>
    %230 = vector.broadcast %229 : vector<24x1xf32> to vector<24x24xf32>
    %231 = arith.mulf %226, %230 : vector<24x24xf32>
    %232 = arith.truncf %231 : vector<24x24xf32> to vector<24x24xbf16>
    %233 = vector.extract_strided_slice %216 {offsets = [0, 0], sizes = [24, 32], strides = [1, 1]} : vector<24x128xbf16> to vector<24x32xbf16>
    %cst_102 = arith.constant dense<0.000000e+00> : vector<24x32xf32>
    %234 = tpu.matmul %232, %233, %cst_102 {dimension_numbers = #tpu.dot_dimension_numbers<[1], [0], [0], [1], [0, 0, 1, 1], [], []>} : vector<24x24xbf16>, vector<24x32xbf16>, vector<24x32xf32> -> vector<24x32xf32>
    %235 = arith.truncf %234 : vector<24x32xf32> to vector<24x32xbf16>
    %236 = vector.extract_strided_slice %194 {offsets = [0, 0], sizes = [32, 128], strides = [1, 1]} : vector<128x128xbf16> to vector<32x128xbf16>
    %cst_103 = arith.constant dense<0.000000e+00> : vector<24x128xf32>
    %237 = tpu.matmul %235, %236, %cst_103 {dimension_numbers = #tpu.dot_dimension_numbers<[1], [0], [0], [1], [0, 0, 1, 1], [], []>} : vector<24x32xbf16>, vector<32x128xbf16>, vector<24x128xf32> -> vector<24x128xf32>
    %238 = arith.addf %217, %237 : vector<24x128xf32>
    %239 = vector.extract_strided_slice %212 {offsets = [0, 32], sizes = [24, 32], strides = [1, 1]} : vector<24x128xbf16> to vector<24x32xbf16>
    %240 = vector.extract_strided_slice %214 {offsets = [0, 32], sizes = [24, 32], strides = [1, 1]} : vector<24x128xbf16> to vector<24x32xbf16>
    %cst_104 = arith.constant dense<0.000000e+00> : vector<24x24xf32>
    %241 = tpu.matmul %239, %240, %cst_104 {dimension_numbers = #tpu.dot_dimension_numbers<[1], [1], [0], [0], [0, 0, 1, 0], [], []>} : vector<24x32xbf16>, vector<24x32xbf16>, vector<24x24xf32> -> vector<24x24xf32>
    %242 = arith.addf %241, %0 : vector<24x24xf32>
    %cst_105 = arith.constant dense<0xFF800000> : vector<24xf32>
    %243 = vector.multi_reduction <maximumf>, %242, %cst_105 [1] : vector<24x24xf32> to vector<24xf32>
    %244 = vector.shape_cast %243 : vector<24xf32> to vector<24x1xf32>
    %245 = vector.broadcast %244 : vector<24x1xf32> to vector<24x24xf32>
    %246 = arith.subf %242, %245 : vector<24x24xf32>
    %247 = math.exp %246 : vector<24x24xf32>
    %cst_106 = arith.constant dense<0.000000e+00> : vector<24xf32>
    %248 = vector.multi_reduction <add>, %247, %cst_106 [1] : vector<24x24xf32> to vector<24xf32>
    %249 = vector.shape_cast %248 : vector<24xf32> to vector<24x1xf32>
    %250 = tpu.reciprocal %249 {approx = true} : vector<24x1xf32> -> vector<24x1xf32>
    %251 = vector.broadcast %250 : vector<24x1xf32> to vector<24x24xf32>
    %252 = arith.mulf %247, %251 : vector<24x24xf32>
    %253 = arith.truncf %252 : vector<24x24xf32> to vector<24x24xbf16>
    %254 = vector.extract_strided_slice %216 {offsets = [0, 32], sizes = [24, 32], strides = [1, 1]} : vector<24x128xbf16> to vector<24x32xbf16>
    %cst_107 = arith.constant dense<0.000000e+00> : vector<24x32xf32>
    %255 = tpu.matmul %253, %254, %cst_107 {dimension_numbers = #tpu.dot_dimension_numbers<[1], [0], [0], [1], [0, 0, 1, 1], [], []>} : vector<24x24xbf16>, vector<24x32xbf16>, vector<24x32xf32> -> vector<24x32xf32>
    %256 = arith.truncf %255 : vector<24x32xf32> to vector<24x32xbf16>
    %257 = vector.extract_strided_slice %194 {offsets = [32, 0], sizes = [32, 128], strides = [1, 1]} : vector<128x128xbf16> to vector<32x128xbf16>
    %cst_108 = arith.constant dense<0.000000e+00> : vector<24x128xf32>
    %258 = tpu.matmul %256, %257, %cst_108 {dimension_numbers = #tpu.dot_dimension_numbers<[1], [0], [0], [1], [0, 0, 1, 1], [], []>} : vector<24x32xbf16>, vector<32x128xbf16>, vector<24x128xf32> -> vector<24x128xf32>
    %259 = arith.addf %238, %258 : vector<24x128xf32>
    %260 = vector.extract_strided_slice %212 {offsets = [0, 64], sizes = [24, 32], strides = [1, 1]} : vector<24x128xbf16> to vector<24x32xbf16>
    %261 = vector.extract_strided_slice %214 {offsets = [0, 64], sizes = [24, 32], strides = [1, 1]} : vector<24x128xbf16> to vector<24x32xbf16>
    %cst_109 = arith.constant dense<0.000000e+00> : vector<24x24xf32>
    %262 = tpu.matmul %260, %261, %cst_109 {dimension_numbers = #tpu.dot_dimension_numbers<[1], [1], [0], [0], [0, 0, 1, 0], [], []>} : vector<24x32xbf16>, vector<24x32xbf16>, vector<24x24xf32> -> vector<24x24xf32>
    %263 = arith.addf %262, %0 : vector<24x24xf32>
    %cst_110 = arith.constant dense<0xFF800000> : vector<24xf32>
    %264 = vector.multi_reduction <maximumf>, %263, %cst_110 [1] : vector<24x24xf32> to vector<24xf32>
    %265 = vector.shape_cast %264 : vector<24xf32> to vector<24x1xf32>
    %266 = vector.broadcast %265 : vector<24x1xf32> to vector<24x24xf32>
    %267 = arith.subf %263, %266 : vector<24x24xf32>
    %268 = math.exp %267 : vector<24x24xf32>
    %cst_111 = arith.constant dense<0.000000e+00> : vector<24xf32>
    %269 = vector.multi_reduction <add>, %268, %cst_111 [1] : vector<24x24xf32> to vector<24xf32>
    %270 = vector.shape_cast %269 : vector<24xf32> to vector<24x1xf32>
    %271 = tpu.reciprocal %270 {approx = true} : vector<24x1xf32> -> vector<24x1xf32>
    %272 = vector.broadcast %271 : vector<24x1xf32> to vector<24x24xf32>
    %273 = arith.mulf %268, %272 : vector<24x24xf32>
    %274 = arith.truncf %273 : vector<24x24xf32> to vector<24x24xbf16>
    %275 = vector.extract_strided_slice %216 {offsets = [0, 64], sizes = [24, 32], strides = [1, 1]} : vector<24x128xbf16> to vector<24x32xbf16>
    %cst_112 = arith.constant dense<0.000000e+00> : vector<24x32xf32>
    %276 = tpu.matmul %274, %275, %cst_112 {dimension_numbers = #tpu.dot_dimension_numbers<[1], [0], [0], [1], [0, 0, 1, 1], [], []>} : vector<24x24xbf16>, vector<24x32xbf16>, vector<24x32xf32> -> vector<24x32xf32>
    %277 = arith.truncf %276 : vector<24x32xf32> to vector<24x32xbf16>
    %278 = vector.extract_strided_slice %194 {offsets = [64, 0], sizes = [32, 128], strides = [1, 1]} : vector<128x128xbf16> to vector<32x128xbf16>
    %cst_113 = arith.constant dense<0.000000e+00> : vector<24x128xf32>
    %279 = tpu.matmul %277, %278, %cst_113 {dimension_numbers = #tpu.dot_dimension_numbers<[1], [0], [0], [1], [0, 0, 1, 1], [], []>} : vector<24x32xbf16>, vector<32x128xbf16>, vector<24x128xf32> -> vector<24x128xf32>
    %280 = arith.addf %259, %279 : vector<24x128xf32>
    %281 = vector.extract_strided_slice %212 {offsets = [0, 96], sizes = [24, 32], strides = [1, 1]} : vector<24x128xbf16> to vector<24x32xbf16>
    %282 = vector.extract_strided_slice %214 {offsets = [0, 96], sizes = [24, 32], strides = [1, 1]} : vector<24x128xbf16> to vector<24x32xbf16>
    %cst_114 = arith.constant dense<0.000000e+00> : vector<24x24xf32>
    %283 = tpu.matmul %281, %282, %cst_114 {dimension_numbers = #tpu.dot_dimension_numbers<[1], [1], [0], [0], [0, 0, 1, 0], [], []>} : vector<24x32xbf16>, vector<24x32xbf16>, vector<24x24xf32> -> vector<24x24xf32>
    %284 = arith.addf %283, %0 : vector<24x24xf32>
    %cst_115 = arith.constant dense<0xFF800000> : vector<24xf32>
    %285 = vector.multi_reduction <maximumf>, %284, %cst_115 [1] : vector<24x24xf32> to vector<24xf32>
    %286 = vector.shape_cast %285 : vector<24xf32> to vector<24x1xf32>
    %287 = vector.broadcast %286 : vector<24x1xf32> to vector<24x24xf32>
    %288 = arith.subf %284, %287 : vector<24x24xf32>
    %289 = math.exp %288 : vector<24x24xf32>
    %cst_116 = arith.constant dense<0.000000e+00> : vector<24xf32>
    %290 = vector.multi_reduction <add>, %289, %cst_116 [1] : vector<24x24xf32> to vector<24xf32>
    %291 = vector.shape_cast %290 : vector<24xf32> to vector<24x1xf32>
    %292 = tpu.reciprocal %291 {approx = true} : vector<24x1xf32> -> vector<24x1xf32>
    %293 = vector.broadcast %292 : vector<24x1xf32> to vector<24x24xf32>
    %294 = arith.mulf %289, %293 : vector<24x24xf32>
    %295 = arith.truncf %294 : vector<24x24xf32> to vector<24x24xbf16>
    %296 = vector.extract_strided_slice %216 {offsets = [0, 96], sizes = [24, 32], strides = [1, 1]} : vector<24x128xbf16> to vector<24x32xbf16>
    %cst_117 = arith.constant dense<0.000000e+00> : vector<24x32xf32>
    %297 = tpu.matmul %295, %296, %cst_117 {dimension_numbers = #tpu.dot_dimension_numbers<[1], [0], [0], [1], [0, 0, 1, 1], [], []>} : vector<24x24xbf16>, vector<24x32xbf16>, vector<24x32xf32> -> vector<24x32xf32>
    %298 = arith.truncf %297 : vector<24x32xf32> to vector<24x32xbf16>
    %299 = vector.extract_strided_slice %194 {offsets = [96, 0], sizes = [32, 128], strides = [1, 1]} : vector<128x128xbf16> to vector<32x128xbf16>
    %cst_118 = arith.constant dense<0.000000e+00> : vector<24x128xf32>
    %300 = tpu.matmul %298, %299, %cst_118 {dimension_numbers = #tpu.dot_dimension_numbers<[1], [0], [0], [1], [0, 0, 1, 1], [], []>} : vector<24x32xbf16>, vector<32x128xbf16>, vector<24x128xf32> -> vector<24x128xf32>
    %301 = arith.addf %280, %300 : vector<24x128xf32>
    %302 = vector.broadcast %196 : vector<1x128xf32> to vector<24x128xf32>
    %303 = arith.addf %301, %302 : vector<24x128xf32>
    %304 = arith.addf %188, %303 : vector<24x128xf32>
    %305 = vector.extract_strided_slice %206 {offsets = [0, 0], sizes = [1, 128], strides = [1, 1]} : vector<4x128xf32> to vector<1x128xf32>
    %306 = vector.extract_strided_slice %206 {offsets = [1, 0], sizes = [1, 128], strides = [1, 1]} : vector<4x128xf32> to vector<1x128xf32>
    %cst_119 = arith.constant dense<0.000000e+00> : vector<24xf32>
    %307 = vector.multi_reduction <add>, %304, %cst_119 [1] : vector<24x128xf32> to vector<24xf32>
    %308 = vector.shape_cast %307 : vector<24xf32> to vector<24x1xf32>
    %cst_120 = arith.constant 1.280000e+02 : f32
    %309 = vector.broadcast %cst_120 : f32 to vector<24x1xf32>
    %310 = arith.divf %308, %309 : vector<24x1xf32>
    %311 = vector.broadcast %310 : vector<24x1xf32> to vector<24x128xf32>
    %312 = arith.subf %304, %311 : vector<24x128xf32>
    %313 = arith.mulf %312, %312 : vector<24x128xf32>
    %cst_121 = arith.constant dense<0.000000e+00> : vector<24xf32>
    %314 = vector.multi_reduction <add>, %313, %cst_121 [1] : vector<24x128xf32> to vector<24xf32>
    %315 = vector.shape_cast %314 : vector<24xf32> to vector<24x1xf32>
    %cst_122 = arith.constant 1.280000e+02 : f32
    %316 = vector.broadcast %cst_122 : f32 to vector<24x1xf32>
    %317 = arith.divf %315, %316 : vector<24x1xf32>
    %318 = vector.broadcast %310 : vector<24x1xf32> to vector<24x128xf32>
    %319 = arith.subf %304, %318 : vector<24x128xf32>
    %cst_123 = arith.constant 9.99999974E-6 : f32
    %320 = vector.broadcast %cst_123 : f32 to vector<24x1xf32>
    %321 = arith.addf %317, %320 : vector<24x1xf32>
    %322 = math.rsqrt %321 : vector<24x1xf32>
    %323 = vector.broadcast %322 : vector<24x1xf32> to vector<24x128xf32>
    %324 = arith.mulf %319, %323 : vector<24x128xf32>
    %325 = vector.broadcast %305 : vector<1x128xf32> to vector<24x128xf32>
    %326 = arith.mulf %324, %325 : vector<24x128xf32>
    %327 = vector.broadcast %306 : vector<1x128xf32> to vector<24x128xf32>
    %328 = arith.addf %326, %327 : vector<24x128xf32>
    %329 = arith.truncf %328 : vector<24x128xf32> to vector<24x128xbf16>
    %cst_124 = arith.constant dense<0.000000e+00> : vector<24x256xf32>
    %330 = tpu.matmul %329, %198, %cst_124 {dimension_numbers = #tpu.dot_dimension_numbers<[1], [0], [0], [1], [0, 0, 1, 1], [], []>} : vector<24x128xbf16>, vector<128x256xbf16>, vector<24x256xf32> -> vector<24x256xf32>
    %331 = vector.broadcast %200 : vector<1x256xf32> to vector<24x256xf32>
    %332 = arith.addf %330, %331 : vector<24x256xf32>
    %cst_125 = arith.constant 5.000000e-01 : f32
    %333 = vector.broadcast %cst_125 : f32 to vector<24x256xf32>
    %334 = arith.mulf %333, %332 : vector<24x256xf32>
    %cst_126 = arith.constant 0.707106769 : f32
    %335 = vector.broadcast %cst_126 : f32 to vector<24x256xf32>
    %336 = arith.mulf %332, %335 : vector<24x256xf32>
    %337 = math.erf %336 : vector<24x256xf32>
    %cst_127 = arith.constant 1.000000e+00 : f32
    %338 = vector.broadcast %cst_127 : f32 to vector<24x256xf32>
    %339 = arith.addf %338, %337 : vector<24x256xf32>
    %340 = arith.mulf %334, %339 : vector<24x256xf32>
    %341 = arith.truncf %340 : vector<24x256xf32> to vector<24x256xbf16>
    %cst_128 = arith.constant dense<0.000000e+00> : vector<24x128xf32>
    %342 = tpu.matmul %341, %202, %cst_128 {dimension_numbers = #tpu.dot_dimension_numbers<[1], [0], [0], [1], [0, 0, 1, 1], [], []>} : vector<24x256xbf16>, vector<256x128xbf16>, vector<24x128xf32> -> vector<24x128xf32>
    %343 = vector.broadcast %204 : vector<1x128xf32> to vector<24x128xf32>
    %344 = arith.addf %342, %343 : vector<24x128xf32>
    %345 = arith.addf %328, %344 : vector<24x128xf32>
    %346 = vector.extract_strided_slice %206 {offsets = [2, 0], sizes = [1, 128], strides = [1, 1]} : vector<4x128xf32> to vector<1x128xf32>
    %347 = vector.extract_strided_slice %206 {offsets = [3, 0], sizes = [1, 128], strides = [1, 1]} : vector<4x128xf32> to vector<1x128xf32>
    %cst_129 = arith.constant dense<0.000000e+00> : vector<24xf32>
    %348 = vector.multi_reduction <add>, %345, %cst_129 [1] : vector<24x128xf32> to vector<24xf32>
    %349 = vector.shape_cast %348 : vector<24xf32> to vector<24x1xf32>
    %cst_130 = arith.constant 1.280000e+02 : f32
    %350 = vector.broadcast %cst_130 : f32 to vector<24x1xf32>
    %351 = arith.divf %349, %350 : vector<24x1xf32>
    %352 = vector.broadcast %351 : vector<24x1xf32> to vector<24x128xf32>
    %353 = arith.subf %345, %352 : vector<24x128xf32>
    %354 = arith.mulf %353, %353 : vector<24x128xf32>
    %cst_131 = arith.constant dense<0.000000e+00> : vector<24xf32>
    %355 = vector.multi_reduction <add>, %354, %cst_131 [1] : vector<24x128xf32> to vector<24xf32>
    %356 = vector.shape_cast %355 : vector<24xf32> to vector<24x1xf32>
    %cst_132 = arith.constant 1.280000e+02 : f32
    %357 = vector.broadcast %cst_132 : f32 to vector<24x1xf32>
    %358 = arith.divf %356, %357 : vector<24x1xf32>
    %359 = vector.broadcast %351 : vector<24x1xf32> to vector<24x128xf32>
    %360 = arith.subf %345, %359 : vector<24x128xf32>
    %cst_133 = arith.constant 9.99999974E-6 : f32
    %361 = vector.broadcast %cst_133 : f32 to vector<24x1xf32>
    %362 = arith.addf %358, %361 : vector<24x1xf32>
    %363 = math.rsqrt %362 : vector<24x1xf32>
    %364 = vector.broadcast %363 : vector<24x1xf32> to vector<24x128xf32>
    %365 = arith.mulf %360, %364 : vector<24x128xf32>
    %366 = vector.broadcast %346 : vector<1x128xf32> to vector<24x128xf32>
    %367 = arith.mulf %365, %366 : vector<24x128xf32>
    %368 = vector.broadcast %347 : vector<1x128xf32> to vector<24x128xf32>
    %369 = arith.addf %367, %368 : vector<24x128xf32>
    %370 = arith.truncf %369 : vector<24x128xf32> to vector<24x128xbf16>
    %c0_134 = arith.constant 0 : index
    %c0_135 = arith.constant 0 : index
    %371 = vector.load %arg14[%c0_134, %c0_135] : memref<128x128xbf16, #tpu.memory_space<vmem>>, vector<128x128xbf16>
    %cst_136 = arith.constant dense<0.000000e+00> : vector<24x128xf32>
    %372 = tpu.matmul %370, %371, %cst_136 {dimension_numbers = #tpu.dot_dimension_numbers<[1], [0], [0], [1], [0, 0, 1, 1], [], []>} : vector<24x128xbf16>, vector<128x128xbf16>, vector<24x128xf32> -> vector<24x128xf32>
    %c0_137 = arith.constant 0 : index
    %c0_138 = arith.constant 0 : index
    %373 = vector.load %arg15[%c0_137, %c0_138] : memref<1x128xf32, #tpu.memory_space<vmem>>, vector<1x128xf32>
    %374 = vector.broadcast %373 : vector<1x128xf32> to vector<24x128xf32>
    %375 = arith.addf %372, %374 : vector<24x128xf32>
    %c0_139 = arith.constant 0 : index
    %c0_140 = arith.constant 0 : index
    %376 = vector.load %arg16[%c0_139, %c0_140] : memref<24x128xf32, #tpu.memory_space<vmem>>, vector<24x128xf32>
    tpu.vector_store %arg16[%c0_139, %c0_140], %375 {strides = array<i32>} : memref<24x128xf32, #tpu.memory_space<vmem>>, vector<24x128xf32>,
    return
  }
  func.func @transform_0(%arg0: i32) -> (i32, i32) {
    %c0_i32 = arith.constant 0 : i32
    %c0_i32_0 = arith.constant 0 : i32
    return %arg0, %c0_i32 : i32, i32
  }
  func.func @transform_1(%arg0: i32) -> (i32, i32) {
    %c0_i32 = arith.constant 0 : i32
    %c0_i32_0 = arith.constant 0 : i32
    %c0_i32_1 = arith.constant 0 : i32
    return %c0_i32, %c0_i32_0 : i32, i32
  }
  func.func @transform_2(%arg0: i32) -> (i32, i32) {
    %c0_i32 = arith.constant 0 : i32
    %c0_i32_0 = arith.constant 0 : i32
    %c0_i32_1 = arith.constant 0 : i32
    return %c0_i32, %c0_i32_0 : i32, i32
  }
  func.func @transform_3(%arg0: i32) -> (i32, i32) {
    %c0_i32 = arith.constant 0 : i32
    %c0_i32_0 = arith.constant 0 : i32
    %c0_i32_1 = arith.constant 0 : i32
    return %c0_i32, %c0_i32_0 : i32, i32
  }
  func.func @transform_4(%arg0: i32) -> (i32, i32, i32) {
    %c0_i32 = arith.constant 0 : i32
    %c0_i32_0 = arith.constant 0 : i32
    %c0_i32_1 = arith.constant 0 : i32
    %c0_i32_2 = arith.constant 0 : i32
    return %c0_i32, %c0_i32_0, %c0_i32_1 : i32, i32, i32
  }
  func.func @transform_5(%arg0: i32) -> (i32, i32, i32) {
    %c0_i32 = arith.constant 0 : i32
    %c0_i32_0 = arith.constant 0 : i32
    %c0_i32_1 = arith.constant 0 : i32
    %c0_i32_2 = arith.constant 0 : i32
    return %c0_i32, %c0_i32_0, %c0_i32_1 : i32, i32, i32
  }
  func.func @transform_6(%arg0: i32) -> (i32, i32, i32) {
    %c0_i32 = arith.constant 0 : i32
    %c0_i32_0 = arith.constant 0 : i32
    %c0_i32_1 = arith.constant 0 : i32
    %c0_i32_2 = arith.constant 0 : i32
    return %c0_i32, %c0_i32_0, %c0_i32_1 : i32, i32, i32
  }
  func.func @transform_7(%arg0: i32) -> (i32, i32, i32) {
    %c0_i32 = arith.constant 0 : i32
    %c0_i32_0 = arith.constant 0 : i32
    %c0_i32_1 = arith.constant 0 : i32
    %c0_i32_2 = arith.constant 0 : i32
    return %c0_i32, %c0_i32_0, %c0_i32_1 : i32, i32, i32
  }
  func.func @transform_8(%arg0: i32) -> (i32, i32, i32) {
    %c0_i32 = arith.constant 0 : i32
    %c0_i32_0 = arith.constant 0 : i32
    %c0_i32_1 = arith.constant 0 : i32
    %c0_i32_2 = arith.constant 0 : i32
    return %c0_i32, %c0_i32_0, %c0_i32_1 : i32, i32, i32
  }
  func.func @transform_9(%arg0: i32) -> (i32, i32, i32) {
    %c0_i32 = arith.constant 0 : i32
    %c0_i32_0 = arith.constant 0 : i32
    %c0_i32_1 = arith.constant 0 : i32
    %c0_i32_2 = arith.constant 0 : i32
    return %c0_i32, %c0_i32_0, %c0_i32_1 : i32, i32, i32
  }
  func.func @transform_10(%arg0: i32) -> (i32, i32, i32) {
    %c0_i32 = arith.constant 0 : i32
    %c0_i32_0 = arith.constant 0 : i32
    %c0_i32_1 = arith.constant 0 : i32
    %c0_i32_2 = arith.constant 0 : i32
    return %c0_i32, %c0_i32_0, %c0_i32_1 : i32, i32, i32
  }
  func.func @transform_11(%arg0: i32) -> (i32, i32, i32) {
    %c0_i32 = arith.constant 0 : i32
    %c0_i32_0 = arith.constant 0 : i32
    %c0_i32_1 = arith.constant 0 : i32
    %c0_i32_2 = arith.constant 0 : i32
    return %c0_i32, %c0_i32_0, %c0_i32_1 : i32, i32, i32
  }
  func.func @transform_12(%arg0: i32) -> (i32, i32, i32) {
    %c0_i32 = arith.constant 0 : i32
    %c0_i32_0 = arith.constant 0 : i32
    %c0_i32_1 = arith.constant 0 : i32
    %c0_i32_2 = arith.constant 0 : i32
    return %c0_i32, %c0_i32_0, %c0_i32_1 : i32, i32, i32
  }
  func.func @transform_13(%arg0: i32) -> (i32, i32) {
    %c0_i32 = arith.constant 0 : i32
    %c0_i32_0 = arith.constant 0 : i32
    %c0_i32_1 = arith.constant 0 : i32
    return %c0_i32, %c0_i32_0 : i32, i32
  }
  func.func @transform_14(%arg0: i32) -> (i32, i32) {
    %c0_i32 = arith.constant 0 : i32
    %c0_i32_0 = arith.constant 0 : i32
    %c0_i32_1 = arith.constant 0 : i32
    return %c0_i32, %c0_i32_0 : i32, i32
  }
  func.func @transform_15(%arg0: i32) -> (i32, i32) {
    %c0_i32 = arith.constant 0 : i32
    %c0_i32_0 = arith.constant 0 : i32
    return %arg0, %c0_i32 : i32, i32
  }
}

</mosaic_0001>

<llo_original>
// kernel: tpu_custom_call.1
$region0: #{tpu_custom_call.1}
  #allocation0 [shape = 'u32[]', space=smem, size = 0x4, offset = 0x4, fixed_abs, tag = 'smem constant byte address 0x4 - core index']
  #allocation1 [shape = 'u32[144,128]{1,0:T(1,128)}', space=vmem, size = 0x12000, scoped, tag = 'internal scratch']
  %s0 = inlined_call_operand.hbm [shape: f32[24,128], index: 0, kind: input, shape index: {}]
  %s1 = inlined_call_operand.hbm [shape: f32[24,24], index: 1, kind: input, shape index: {}]
  %s2 = inlined_call_operand.hbm [shape: bf16[128,128], index: 2, kind: input, shape index: {}]
  %s3 = inlined_call_operand.hbm [shape: f32[1,128], index: 3, kind: input, shape index: {}]
  %s4 = inlined_call_operand.hbm [shape: bf16[2,128,384], index: 4, kind: input, shape index: {}]
  %s5 = inlined_call_operand.vmem [shape: f32[2,1,384], index: 5, kind: input, shape index: {}]
  %s6 = inlined_call_operand.hbm [shape: bf16[2,128,128], index: 6, kind: input, shape index: {}]
  %s7 = inlined_call_operand.vmem [shape: f32[2,1,128], index: 7, kind: input, shape index: {}]
  %s8 = inlined_call_operand.hbm [shape: bf16[2,128,256], index: 8, kind: input, shape index: {}]
  %s9 = inlined_call_operand.vmem [shape: f32[2,1,256], index: 9, kind: input, shape index: {}]
  %s10 = inlined_call_operand.hbm [shape: bf16[2,256,128], index: 10, kind: input, shape index: {}]
  %s11 = inlined_call_operand.vmem [shape: f32[2,1,128], index: 11, kind: input, shape index: {}]
  %s12 = inlined_call_operand.vmem [shape: f32[2,4,128], index: 12, kind: input, shape index: {}]
  %s13 = inlined_call_operand.hbm [shape: bf16[128,128], index: 13, kind: input, shape index: {}]
  %s14 = inlined_call_operand.vmem [shape: f32[1,128], index: 14, kind: input, shape index: {}]
  %s15 = inlined_call_operand.hbm [shape: f32[24,128], index: 15, kind: output, shape index: {}]
  %s16 = sld [smem:[#allocation0]]
  $region106: #{tpu_custom_call.1} parent=0
    _
  %s18 = ssub.s32 1, %s16
  %s19 = scalar_select 0, %s18, %s16
  $region1: #{tpu_custom_call.1} parent=0
    #allocation2 [shape = 'u8[12288]{0}', space=vmem, size = 0x3000, scoped, tag = 'input window, operand 0, single buffered']
    #allocation3 [shape = 's32[1]{0}', space=sflag, size = 0x4, scoped, tag = 'scoped memory for tpu_custom_call.1']
    #allocation4 [shape = 's32[1]{0}', space=sflag, size = 0x4, scoped, tag = 'scoped memory for tpu_custom_call.1']
    #allocation5 [shape = 'u8[12288]{0}', space=vmem, size = 0x3000, scoped, tag = 'input window, operand 1, single buffered']
    #allocation6 [shape = 's32[1]{0}', space=sflag, size = 0x4, scoped, tag = 'scoped memory for tpu_custom_call.1']
    #allocation7 [shape = 'u8[32768]{0}', space=vmem, size = 0x8000, scoped, tag = 'input window, operand 2, single buffered']
    #allocation8 [shape = 'u8[512]{0}', space=vmem, size = 0x400, scoped, tag = 'input window, operand 3, single buffered']
    #allocation9 [shape = 's32[1]{0}', space=sflag, size = 0x4, scoped, tag = 'scoped memory for tpu_custom_call.1']
    #allocation10 [shape = 'u8[196608]{0}', space=vmem, size = 0x30000, scoped, tag = 'input window, operand 4, single buffered']
    #allocation11 [shape = 'u8[65536]{0}', space=vmem, size = 0x10000, scoped, tag = 'input window, operand 6, single buffered']
    #allocation12 [shape = 's32[1]{0}', space=sflag, size = 0x4, scoped, tag = 'scoped memory for tpu_custom_call.1']
    #allocation13 [shape = 'u8[131072]{0}', space=vmem, size = 0x20000, scoped, tag = 'input window, operand 8, single buffered']
    #allocation14 [shape = 'u8[131072]{0}', space=vmem, size = 0x20000, scoped, tag = 'input window, operand 10, single buffered']
    #allocation15 [shape = 's32[1]{0}', space=sflag, size = 0x4, scoped, tag = 'scoped memory for tpu_custom_call.1']
    #allocation16 [shape = 'u8[32768]{0}', space=vmem, size = 0x8000, scoped, tag = 'input window, operand 13, single buffered']
    #allocation17 [shape = 'u8[12288]{0}', space=vmem, size = 0x3000, scoped, tag = 'output window, operand 0, single buffered']
    %20 = vsyncpa [#allocation3], 0
    %21 = vsyncpa [#allocation6], 0
    %22 = vsyncpa [#allocation9], 0
    %23 = vsyncpa [#allocation12], 0
    %24 = vsyncpa [#allocation15], 0
    %25 = vsyncpa [#allocation4], 0
    // Predicated region
    $region2: #{tpu_custom_call.1} parent=1 // pred_check
      _
    $region3: #{tpu_custom_call.1} parent=1 // pred_check_branch
      %27 = sbr.rel (0) target = $region5
    $region4: #{tpu_custom_call.1} parent=1 // pred_region
      %s29 = ssub.s32 384, 384
      %30 = vsyncadd [#allocation3], %s29
      %s31 = sshll.u32 [#allocation2], 4
      %s32 = int_to_ptr.vmem [resolvable:$true] %s31
      %37 = dma.hbm_to_vmem [thread:$0]  %s0, 384, %s32, [#allocation3], 128, 128, 8
    $region5: #{tpu_custom_call.1} parent=1 // pred_fallthru
      _
    // Predicated region
    $region6: #{tpu_custom_call.1} parent=1 // pred_check
      _
    $region7: #{tpu_custom_call.1} parent=1 // pred_check_branch
      %39 = sbr.rel (0) target = $region9
    $region8: #{tpu_custom_call.1} parent=1 // pred_region
      %s41 = ssub.s32 384, 384
      %42 = vsyncadd [#allocation6], %s41
      %s43 = sshll.u32 [#allocation5], 4
      %s44 = int_to_ptr.vmem [resolvable:$true] %s43
      %49 = dma.hbm_to_vmem [thread:$0]  %s1, 384, %s44, [#allocation6], 128, 128, 8
    $region9: #{tpu_custom_call.1} parent=1 // pred_fallthru
      _
    // Predicated region
    $region10: #{tpu_custom_call.1} parent=1 // pred_check
      _
    $region11: #{tpu_custom_call.1} parent=1 // pred_check_branch
      %51 = sbr.rel (0) target = $region13
    $region12: #{tpu_custom_call.1} parent=1 // pred_region
      %s53 = ssub.s32 1024, 1024
      %54 = vsyncadd [#allocation6], %s53
      %s55 = sshll.u32 [#allocation7], 4
      %s56 = int_to_ptr.vmem [resolvable:$true] %s55
      %61 = dma.hbm_to_vmem [thread:$0]  %s2, 1024, %s56, [#allocation6], 64, 64, 4
    $region13: #{tpu_custom_call.1} parent=1 // pred_fallthru
      _
    // Predicated region
    $region14: #{tpu_custom_call.1} parent=1 // pred_check
      _
    $region15: #{tpu_custom_call.1} parent=1 // pred_check_branch
      %63 = sbr.rel (0) target = $region17
    $region16: #{tpu_custom_call.1} parent=1 // pred_region
      %s65 = ssub.s32 16, 16
      %66 = vsyncadd [#allocation9], %s65
      %s68 = sshll.u32 [#allocation8], 4
      %s69 = int_to_ptr.vmem [resolvable:$true] %s68
      %71 = dma.hbm_to_vmem [thread:$0]  %s3, 16, %s69, [#allocation9]
    $region17: #{tpu_custom_call.1} parent=1 // pred_fallthru
      _
    // Predicated region
    $region18: #{tpu_custom_call.1} parent=1 // pred_check
      _
    $region19: #{tpu_custom_call.1} parent=1 // pred_check_branch
      %73 = sbr.rel (0) target = $region21
    $region20: #{tpu_custom_call.1} parent=1 // pred_region
      %s75 = ssub.s32 6144, 6144
      %76 = vsyncadd [#allocation9], %s75
      %s77 = sshll.u32 [#allocation10], 4
      %s78 = int_to_ptr.vmem [resolvable:$true] %s77
      %83 = dma.hbm_to_vmem [thread:$0]  %s4, 6144, %s78, [#allocation9], 192, 192, 12
    $region21: #{tpu_custom_call.1} parent=1 // pred_fallthru
      _
    // Predicated region
    $region22: #{tpu_custom_call.1} parent=1 // pred_check
      _
    $region23: #{tpu_custom_call.1} parent=1 // pred_check_branch
      %85 = sbr.rel (0) target = $region25
    $region24: #{tpu_custom_call.1} parent=1 // pred_region
      _
    $region25: #{tpu_custom_call.1} parent=1 // pred_fallthru
      _
    // Predicated region
    $region26: #{tpu_custom_call.1} parent=1 // pred_check
      _
    $region27: #{tpu_custom_call.1} parent=1 // pred_check_branch
      %87 = sbr.rel (0) target = $region29
    $region28: #{tpu_custom_call.1} parent=1 // pred_region
      %s89 = ssub.s32 2048, 2048
      %90 = vsyncadd [#allocation12], %s89
      %s91 = sshll.u32 [#allocation11], 4
      %s92 = int_to_ptr.vmem [resolvable:$true] %s91
      %97 = dma.hbm_to_vmem [thread:$0]  %s6, 2048, %s92, [#allocation12], 64, 64, 4
    $region29: #{tpu_custom_call.1} parent=1 // pred_fallthru
      _
    // Predicated region
    $region30: #{tpu_custom_call.1} parent=1 // pred_check
      _
    $region31: #{tpu_custom_call.1} parent=1 // pred_check_branch
      %99 = sbr.rel (0) target = $region33
    $region32: #{tpu_custom_call.1} parent=1 // pred_region
      _
    $region33: #{tpu_custom_call.1} parent=1 // pred_fallthru
      _
    // Predicated region
    $region34: #{tpu_custom_call.1} parent=1 // pred_check
      _
    $region35: #{tpu_custom_call.1} parent=1 // pred_check_branch
      %101 = sbr.rel (0) target = $region37
    $region36: #{tpu_custom_call.1} parent=1 // pred_region
      %s103 = ssub.s32 4096, 4096
      %104 = vsyncadd [#allocation12], %s103
      %s105 = sshll.u32 [#allocation13], 4
      %s106 = int_to_ptr.vmem [resolvable:$true] %s105
      %111 = dma.hbm_to_vmem [thread:$0]  %s8, 4096, %s106, [#allocation12], 128, 128, 8
    $region37: #{tpu_custom_call.1} parent=1 // pred_fallthru
      _
    // Predicated region
    $region38: #{tpu_custom_call.1} parent=1 // pred_check
      _
    $region39: #{tpu_custom_call.1} parent=1 // pred_check_branch
      %113 = sbr.rel (0) target = $region41
    $region40: #{tpu_custom_call.1} parent=1 // pred_region
      _
    $region41: #{tpu_custom_call.1} parent=1 // pred_fallthru
      _
    // Predicated region
    $region42: #{tpu_custom_call.1} parent=1 // pred_check
      _
    $region43: #{tpu_custom_call.1} parent=1 // pred_check_branch
      %115 = sbr.rel (0) target = $region45
    $region44: #{tpu_custom_call.1} parent=1 // pred_region
      %s117 = ssub.s32 4096, 4096
      %118 = vsyncadd [#allocation15], %s117
      %s119 = sshll.u32 [#allocation14], 4
      %s120 = int_to_ptr.vmem [resolvable:$true] %s119
      %125 = dma.hbm_to_vmem [thread:$0]  %s10, 4096, %s120, [#allocation15], 64, 64, 4
    $region45: #{tpu_custom_call.1} parent=1 // pred_fallthru
      _
    // Predicated region
    $region46: #{tpu_custom_call.1} parent=1 // pred_check
      _
    $region47: #{tpu_custom_call.1} parent=1 // pred_check_branch
      %127 = sbr.rel (0) target = $region49
    $region48: #{tpu_custom_call.1} parent=1 // pred_region
      _
    $region49: #{tpu_custom_call.1} parent=1 // pred_fallthru
      _
    // Predicated region
    $region50: #{tpu_custom_call.1} parent=1 // pred_check
      _
    $region51: #{tpu_custom_call.1} parent=1 // pred_check_branch
      %129 = sbr.rel (0) target = $region53
    $region52: #{tpu_custom_call.1} parent=1 // pred_region
      _
    $region53: #{tpu_custom_call.1} parent=1 // pred_fallthru
      _
    // Predicated region
    $region54: #{tpu_custom_call.1} parent=1 // pred_check
      _
    $region55: #{tpu_custom_call.1} parent=1 // pred_check_branch
      %131 = sbr.rel (0) target = $region57
    $region56: #{tpu_custom_call.1} parent=1 // pred_region
      %s133 = ssub.s32 1024, 1024
      %134 = vsyncadd [#allocation15], %s133
      %s135 = sshll.u32 [#allocation16], 4
      %s136 = int_to_ptr.vmem [resolvable:$true] %s135
      %141 = dma.hbm_to_vmem [thread:$0]  %s13, 1024, %s136, [#allocation15], 64, 64, 4
    $region57: #{tpu_custom_call.1} parent=1 // pred_fallthru
      _
    // Predicated region
    $region58: #{tpu_custom_call.1} parent=1 // pred_check
      _
    $region59: #{tpu_custom_call.1} parent=1 // pred_check_branch
      %143 = sbr.rel (0) target = $region61
    $region60: #{tpu_custom_call.1} parent=1 // pred_region
      _
    $region61: #{tpu_custom_call.1} parent=1 // pred_fallthru
      _
    // Predicated region
    $region62: #{tpu_custom_call.1} parent=1 // pred_check
      _
    $region63: #{tpu_custom_call.1} parent=1 // pred_check_branch
      %145 = sbr.rel (0) target = $region65
    $region64: #{tpu_custom_call.1} parent=1 // pred_region
      %146 = dma.done [#allocation3], 384
    $region65: #{tpu_custom_call.1} parent=1 // pred_fallthru
      _
    // Predicated region
    $region66: #{tpu_custom_call.1} parent=1 // pred_check
      _
    $region67: #{tpu_custom_call.1} parent=1 // pred_check_branch
      %148 = sbr.rel (0) target = $region69
    $region68: #{tpu_custom_call.1} parent=1 // pred_region
      %149 = dma.done [#allocation6], 384
    $region69: #{tpu_custom_call.1} parent=1 // pred_fallthru
      _
    // Predicated region
    $region70: #{tpu_custom_call.1} parent=1 // pred_check
      _
    $region71: #{tpu_custom_call.1} parent=1 // pred_check_branch
      %151 = sbr.rel (0) target = $region73
    $region72: #{tpu_custom_call.1} parent=1 // pred_region
      %152 = dma.done [#allocation6], 1024
    $region73: #{tpu_custom_call.1} parent=1 // pred_fallthru
      _
    // Predicated region
    $region74: #{tpu_custom_call.1} parent=1 // pred_check
      _
    $region75: #{tpu_custom_call.1} parent=1 // pred_check_branch
      %154 = sbr.rel (0) target = $region77
    $region76: #{tpu_custom_call.1} parent=1 // pred_region
      %155 = dma.done [#allocation9], 16
    $region77: #{tpu_custom_call.1} parent=1 // pred_fallthru
      _
    // Predicated region
    $region78: #{tpu_custom_call.1} parent=1 // pred_check
      _
    $region79: #{tpu_custom_call.1} parent=1 // pred_check_branch
      %157 = sbr.rel (0) target = $region81
    $region80: #{tpu_custom_call.1} parent=1 // pred_region
      %158 = dma.done [#allocation9], 6144
    $region81: #{tpu_custom_call.1} parent=1 // pred_fallthru
      _
    // Predicated region
    $region82: #{tpu_custom_call.1} parent=1 // pred_check
      _
    $region83: #{tpu_custom_call.1} parent=1 // pred_check_branch
      %160 = sbr.rel (0) target = $region85
    $region84: #{tpu_custom_call.1} parent=1 // pred_region
      %161 = dma.done [#allocation12], 2048
    $region85: #{tpu_custom_call.1} parent=1 // pred_fallthru
      _
    // Predicated region
    $region86: #{tpu_custom_call.1} parent=1 // pred_check
      _
    $region87: #{tpu_custom_call.1} parent=1 // pred_check_branch
      %163 = sbr.rel (0) target = $region89
    $region88: #{tpu_custom_call.1} parent=1 // pred_region
      %164 = dma.done [#allocation12], 4096
    $region89: #{tpu_custom_call.1} parent=1 // pred_fallthru
      _
    // Predicated region
    $region90: #{tpu_custom_call.1} parent=1 // pred_check
      _
    $region91: #{tpu_custom_call.1} parent=1 // pred_check_branch
      %166 = sbr.rel (0) target = $region93
    $region92: #{tpu_custom_call.1} parent=1 // pred_region
      %167 = dma.done [#allocation15], 4096
    $region93: #{tpu_custom_call.1} parent=1 // pred_fallthru
      _
    // Predicated region
    $region94: #{tpu_custom_call.1} parent=1 // pred_check
      _
    $region95: #{tpu_custom_call.1} parent=1 // pred_check_branch
      %169 = sbr.rel (0) target = $region97
    $region96: #{tpu_custom_call.1} parent=1 // pred_region
      %170 = dma.done [#allocation15], 1024
    $region97: #{tpu_custom_call.1} parent=1 // pred_fallthru
      _
    %v172 = vld [vmem:[#allocation5] sm:$0xff]
    %v173 = vld [vmem:[#allocation5 + $0x8] sm:$0xff]
    %v174 = vld [vmem:[#allocation5 + $0x10] sm:$0xff]
    %v175 = vld [vmem:[#allocation2] sm:$0xff]
    %v176 = vld [vmem:[#allocation2 + $0x8] sm:$0xff]
    %v177 = vld [vmem:[#allocation2 + $0x10] sm:$0xff]
    %v178 = vpack.c.bf16 %v176, %v175
    %v179 = vpack.c.bf16 %v177, %v177
    %v180 = vld [vmem:[#allocation7] sm:$0xf]
    %v181 = vld [vmem:[#allocation7 + $0x4] sm:$0xf]
    %v182 = vld [vmem:[#allocation7 + $0x8] sm:$0xf]
    %v183 = vld [vmem:[#allocation7 + $0xc] sm:$0xf]
    %v184 = vld [vmem:[#allocation7 + $0x10] sm:$0xf]
    %v185 = vld [vmem:[#allocation7 + $0x14] sm:$0xf]
    %v186 = vld [vmem:[#allocation7 + $0x18] sm:$0xf]
    %v187 = vld [vmem:[#allocation7 + $0x1c] sm:$0xf]
    %v188 = vld [vmem:[#allocation7 + $0x20] sm:$0xf]
    %v189 = vld [vmem:[#allocation7 + $0x24] sm:$0xf]
    %v190 = vld [vmem:[#allocation7 + $0x28] sm:$0xf]
    %v191 = vld [vmem:[#allocation7 + $0x2c] sm:$0xf]
    %v192 = vld [vmem:[#allocation7 + $0x30] sm:$0xf]
    %v193 = vld [vmem:[#allocation7 + $0x34] sm:$0xf]
    %v194 = vld [vmem:[#allocation7 + $0x38] sm:$0xf]
    %v195 = vld [vmem:[#allocation7 + $0x3c] sm:$0xf]
    %v196 = vld [vmem:[#allocation8] sm:$0x1]
    %v198 = vlaneseq
    %v199 = vshrl.u32 %v198, 7
    %v200 = vsub.s32 0, %v199
    %v201 = vrot.slane %v196, %v200
    %v219 = vunpack.c.l.b16 %v180
    %v220 = vunpack.c.l.b16 %v181
    %v221 = vunpack.c.l.b16 %v182
    %v222 = vunpack.c.l.b16 %v183
    %v223 = vunpack.c.l.b16 %v184
    %v224 = vunpack.c.l.b16 %v185
    %v225 = vunpack.c.l.b16 %v186
    %v226 = vunpack.c.l.b16 %v187
    %v227 = vunpack.c.l.b16 %v188
    %v228 = vunpack.c.l.b16 %v189
    %v229 = vunpack.c.l.b16 %v190
    %v230 = vunpack.c.l.b16 %v191
    %v231 = vunpack.c.l.b16 %v192
    %v232 = vunpack.c.l.b16 %v193
    %v233 = vunpack.c.l.b16 %v194
    %v234 = vunpack.c.l.b16 %v195
    %v235 = vpack.c.b16 %v220, %v219
    %v236 = vpack.c.b16 %v222, %v221
    %v237 = vpack.c.b16 %v224, %v223
    %v238 = vpack.c.b16 %v226, %v225
    %v239 = vpack.c.b16 %v228, %v227
    %v240 = vpack.c.b16 %v230, %v229
    %v241 = vpack.c.b16 %v232, %v231
    %v242 = vpack.c.b16 %v234, %v233
    %251 = vmatprep.subr.bf16.mxu0 0
    %252 = vmatpush1.bf16.msra.mxu0 %v235
    %253 = vmatprep.subr.bf16.mxu0 0
    %254 = vmatpush1.bf16.msra.mxu0 %v236
    %255 = vmatprep.subr.bf16.mxu0 0
    %256 = vmatpush1.bf16.msra.mxu0 %v237
    %257 = vmatprep.subr.bf16.mxu0 0
    %258 = vmatpush1.bf16.msra.mxu0 %v238
    %259 = vmatprep.subr.bf16.mxu0 0
    %260 = vmatpush1.bf16.msra.mxu0 %v239
    %261 = vmatprep.subr.bf16.mxu0 0
    %262 = vmatpush1.bf16.msra.mxu0 %v240
    %263 = vmatprep.subr.bf16.mxu0 0
    %264 = vmatpush1.bf16.msra.mxu0 %v241
    %265 = vmatprep.subr.bf16.mxu0 0
    %266 = vmatpush1.bf16.msra.mxu0 %v242
    %267 = vmatprep.subr.bf16.mxu0 0
    %268 = vmatpush1.bf16.msra.mxu0 0
    %269 = vmatprep.subr.bf16.mxu0 0
    %270 = vmatpush1.bf16.msra.mxu0 0
    %271 = vmatprep.subr.bf16.mxu0 0
    %272 = vmatpush1.bf16.msra.mxu0 0
    %273 = vmatprep.subr.bf16.mxu0 0
    %274 = vmatpush1.bf16.msra.mxu0 0
    %275 = vmatprep.subr.bf16.mxu0 0
    %276 = vmatpush1.bf16.msra.mxu0 0
    %277 = vmatprep.subr.bf16.mxu0 0
    %278 = vmatpush1.bf16.msra.mxu0 0
    %279 = vmatprep.subr.bf16.mxu0 0
    %280 = vmatpush1.bf16.msra.mxu0 0
    %281 = vmatprep.subr.bf16.mxu0 0
    %282 = vmatpush1.bf16.msra.mxu0 0
    %283 = vmatprep.mubr.bf16.mxu0 0
    %284 = vmatmul.mubr.bf16.gmra.mrb[0].mxu0 %v178
    %v285 = vpop.f32.mrb[0].mxu0
    %v286 = vadd.f32 %v201, %v285
    %v287 = vpop.f32.mrb[0].mxu0
    %v288 = vpop.f32.mrb[0].mxu0
    %v289 = vadd.f32 %v201, %v288
    %v290 = vpop.f32.mrb[0].mxu0
    %291 = vmatprep.mubr.bf16.mxu0 0
    %292 = vmatmul.mubr.bf16.gmra.mrb[0].mxu0 %v179
    %v293 = vpop.f32.mrb[0].mxu0
    %v294 = vadd.f32 %v201, %v293
    %v295 = vpop.f32.mrb[0].mxu0
    %v296 = vpop.f32.mrb[0].mxu0
    %v297 = vpop.f32.mrb[0].mxu0
    %298 = vdwg.mxu0
    %v299 = vld [vmem:[#allocation10] sm:$0xff]
    %v300 = vld [vmem:[#allocation10 + $0x8] sm:$0xf]
    %v301 = vld [vmem:[#allocation10 + $0xc] sm:$0xff]
    %v302 = vld [vmem:[#allocation10 + $0x14] sm:$0xf]
    %v303 = vld [vmem:[#allocation10 + $0x18] sm:$0xff]
    %v304 = vld [vmem:[#allocation10 + $0x20] sm:$0xf]
    %v305 = vld [vmem:[#allocation10 + $0x24] sm:$0xff]
    %v306 = vld [vmem:[#allocation10 + $0x2c] sm:$0xf]
    %v307 = vld [vmem:[#allocation10 + $0x30] sm:$0xff]
    %v308 = vld [vmem:[#allocation10 + $0x38] sm:$0xf]
    %v309 = vld [vmem:[#allocation10 + $0x3c] sm:$0xff]
    %v310 = vld [vmem:[#allocation10 + $0x44] sm:$0xf]
    %v311 = vld [vmem:[#allocation10 + $0x48] sm:$0xff]
    %v312 = vld [vmem:[#allocation10 + $0x50] sm:$0xf]
    %v313 = vld [vmem:[#allocation10 + $0x54] sm:$0xff]
    %v314 = vld [vmem:[#allocation10 + $0x5c] sm:$0xf]
    %v315 = vld [vmem:[#allocation10 + $0x60] sm:$0xff]
    %v316 = vld [vmem:[#allocation10 + $0x68] sm:$0xf]
    %v317 = vld [vmem:[#allocation10 + $0x6c] sm:$0xff]
    %v318 = vld [vmem:[#allocation10 + $0x74] sm:$0xf]
    %v319 = vld [vmem:[#allocation10 + $0x78] sm:$0xff]
    %v320 = vld [vmem:[#allocation10 + $0x80] sm:$0xf]
    %v321 = vld [vmem:[#allocation10 + $0x84] sm:$0xff]
    %v322 = vld [vmem:[#allocation10 + $0x8c] sm:$0xf]
    %v323 = vld [vmem:[#allocation10 + $0x90] sm:$0xff]
    %v324 = vld [vmem:[#allocation10 + $0x98] sm:$0xf]
    %v325 = vld [vmem:[#allocation10 + $0x9c] sm:$0xff]
    %v326 = vld [vmem:[#allocation10 + $0xa4] sm:$0xf]
    %v327 = vld [vmem:[#allocation10 + $0xa8] sm:$0xff]
    %v328 = vld [vmem:[#allocation10 + $0xb0] sm:$0xf]
    %v329 = vld [vmem:[#allocation10 + $0xb4] sm:$0xff]
    %v330 = vld [vmem:[#allocation10 + $0xbc] sm:$0xf]
    %v331 = vld [vmem:[%s5] sm:$0x7]
    %v332 = vld [vmem:[#allocation11] sm:$0xf]
    %v333 = vld [vmem:[#allocation11 + $0x4] sm:$0xf]
    %v334 = vld [vmem:[#allocation11 + $0x8] sm:$0xf]
    %v335 = vld [vmem:[#allocation11 + $0xc] sm:$0xf]
    %v336 = vld [vmem:[#allocation11 + $0x10] sm:$0xf]
    %v337 = vld [vmem:[#allocation11 + $0x14] sm:$0xf]
    %v338 = vld [vmem:[#allocation11 + $0x18] sm:$0xf]
    %v339 = vld [vmem:[#allocation11 + $0x1c] sm:$0xf]
    %v340 = vld [vmem:[#allocation11 + $0x20] sm:$0xf]
    %v341 = vld [vmem:[#allocation11 + $0x24] sm:$0xf]
    %v342 = vld [vmem:[#allocation11 + $0x28] sm:$0xf]
    %v343 = vld [vmem:[#allocation11 + $0x2c] sm:$0xf]
    %v344 = vld [vmem:[#allocation11 + $0x30] sm:$0xf]
    %v345 = vld [vmem:[#allocation11 + $0x34] sm:$0xf]
    %v346 = vld [vmem:[#allocation11 + $0x38] sm:$0xf]
    %v347 = vld [vmem:[#allocation11 + $0x3c] sm:$0xf]
    %v348 = vld [vmem:[%s7] sm:$0x1]
    %v349 = vld [vmem:[#allocation13] sm:$0xff]
    %v350 = vld [vmem:[#allocation13 + $0x8] sm:$0xff]
    %v351 = vld [vmem:[#allocation13 + $0x10] sm:$0xff]
    %v352 = vld [vmem:[#allocation13 + $0x18] sm:$0xff]
    %v353 = vld [vmem:[#allocation13 + $0x20] sm:$0xff]
    %v354 = vld [vmem:[#allocation13 + $0x28] sm:$0xff]
    %v355 = vld [vmem:[#allocation13 + $0x30] sm:$0xff]
    %v356 = vld [vmem:[#allocation13 + $0x38] sm:$0xff]
    %v357 = vld [vmem:[#allocation13 + $0x40] sm:$0xff]
    %v358 = vld [vmem:[#allocation13 + $0x48] sm:$0xff]
    %v359 = vld [vmem:[#allocation13 + $0x50] sm:$0xff]
    %v360 = vld [vmem:[#allocation13 + $0x58] sm:$0xff]
    %v361 = vld [vmem:[#allocation13 + $0x60] sm:$0xff]
    %v362 = vld [vmem:[#allocation13 + $0x68] sm:$0xff]
    %v363 = vld [vmem:[#allocation13 + $0x70] sm:$0xff]
    %v364 = vld [vmem:[#allocation13 + $0x78] sm:$0xff]
    %v365 = vld [vmem:[%s9] sm:$0x3]
    %v366 = vld [vmem:[#allocation14] sm:$0xf]
    %v367 = vld [vmem:[#allocation14 + $0x4] sm:$0xf]
    %v368 = vld [vmem:[#allocation14 + $0x8] sm:$0xf]
    %v369 = vld [vmem:[#allocation14 + $0xc] sm:$0xf]
    %v370 = vld [vmem:[#allocation14 + $0x10] sm:$0xf]
    %v371 = vld [vmem:[#allocation14 + $0x14] sm:$0xf]
    %v372 = vld [vmem:[#allocation14 + $0x18] sm:$0xf]
    %v373 = vld [vmem:[#allocation14 + $0x1c] sm:$0xf]
    %v374 = vld [vmem:[#allocation14 + $0x20] sm:$0xf]
    %v375 = vld [vmem:[#allocation14 + $0x24] sm:$0xf]
    %v376 = vld [vmem:[#allocation14 + $0x28] sm:$0xf]
    %v377 = vld [vmem:[#allocation14 + $0x2c] sm:$0xf]
    %v378 = vld [vmem:[#allocation14 + $0x30] sm:$0xf]
    %v379 = vld [vmem:[#allocation14 + $0x34] sm:$0xf]
    %v380 = vld [vmem:[#allocation14 + $0x38] sm:$0xf]
    %v381 = vld [vmem:[#allocation14 + $0x3c] sm:$0xf]
    %v382 = vld [vmem:[#allocation14 + $0x40] sm:$0xf]
    %v383 = vld [vmem:[#allocation14 + $0x44] sm:$0xf]
    %v384 = vld [vmem:[#allocation14 + $0x48] sm:$0xf]
    %v385 = vld [vmem:[#allocation14 + $0x4c] sm:$0xf]
    %v386 = vld [vmem:[#allocation14 + $0x50] sm:$0xf]
    %v387 = vld [vmem:[#allocation14 + $0x54] sm:$0xf]
    %v388 = vld [vmem:[#allocation14 + $0x58] sm:$0xf]
    %v389 = vld [vmem:[#allocation14 + $0x5c] sm:$0xf]
    %v390 = vld [vmem:[#allocation14 + $0x60] sm:$0xf]
    %v391 = vld [vmem:[#allocation14 + $0x64] sm:$0xf]
    %v392 = vld [vmem:[#allocation14 + $0x68] sm:$0xf]
    %v393 = vld [vmem:[#allocation14 + $0x6c] sm:$0xf]
    %v394 = vld [vmem:[#allocation14 + $0x70] sm:$0xf]
    %v395 = vld [vmem:[#allocation14 + $0x74] sm:$0xf]
    %v396 = vld [vmem:[#allocation14 + $0x78] sm:$0xf]
    %v397 = vld [vmem:[#allocation14 + $0x7c] sm:$0xf]
    %v398 = vld [vmem:[%s11] sm:$0x1]
    %v399 = vld [vmem:[%s12] sm:$0xf]
    %v400 = vpack.c.bf16 %v289, %v286
    %v401 = vpack.c.bf16 %v294, %v294
    %v403 = vlaneseq
    %v404 = vshrl.u32 %v403, 7
    %v405 = vsub.s32 0, %v404
    %v406 = vrot.slane %v331, %v405
    %v407 = vlaneseq
    %v408 = vshrl.u32 %v407, 7
    %v409 = vsub.s32 1, %v408
    %v410 = vrot.slane %v331, %v409
    %v411 = vlaneseq
    %v412 = vshrl.u32 %v411, 7
    %v413 = vsub.s32 2, %v412
    %v414 = vrot.slane %v331, %v413
    %v450 = vunpack.c.l.b16 %v299
    %v451 = vunpack.c.h.b16 %v299
    %v452 = vunpack.c.l.b16 %v300
    %v453 = vunpack.c.l.b16 %v301
    %v454 = vunpack.c.h.b16 %v301
    %v455 = vunpack.c.l.b16 %v302
    %v456 = vunpack.c.l.b16 %v303
    %v457 = vunpack.c.h.b16 %v303
    %v458 = vunpack.c.l.b16 %v304
    %v459 = vunpack.c.l.b16 %v305
    %v460 = vunpack.c.h.b16 %v305
    %v461 = vunpack.c.l.b16 %v306
    %v462 = vunpack.c.l.b16 %v307
    %v463 = vunpack.c.h.b16 %v307
    %v464 = vunpack.c.l.b16 %v308
    %v465 = vunpack.c.l.b16 %v309
    %v466 = vunpack.c.h.b16 %v309
    %v467 = vunpack.c.l.b16 %v310
    %v468 = vunpack.c.l.b16 %v311
    %v469 = vunpack.c.h.b16 %v311
    %v470 = vunpack.c.l.b16 %v312
    %v471 = vunpack.c.l.b16 %v313
    %v472 = vunpack.c.h.b16 %v313
    %v473 = vunpack.c.l.b16 %v314
    %v474 = vunpack.c.l.b16 %v315
    %v475 = vunpack.c.h.b16 %v315
    %v476 = vunpack.c.l.b16 %v316
    %v477 = vunpack.c.l.b16 %v317
    %v478 = vunpack.c.h.b16 %v317
    %v479 = vunpack.c.l.b16 %v318
    %v480 = vunpack.c.l.b16 %v319
    %v481 = vunpack.c.h.b16 %v319
    %v482 = vunpack.c.l.b16 %v320
    %v483 = vunpack.c.l.b16 %v321
    %v484 = vunpack.c.h.b16 %v321
    %v485 = vunpack.c.l.b16 %v322
    %v486 = vunpack.c.l.b16 %v323
    %v487 = vunpack.c.h.b16 %v323
    %v488 = vunpack.c.l.b16 %v324
    %v489 = vunpack.c.l.b16 %v325
    %v490 = vunpack.c.h.b16 %v325
    %v491 = vunpack.c.l.b16 %v326
    %v492 = vunpack.c.l.b16 %v327
    %v493 = vunpack.c.h.b16 %v327
    %v494 = vunpack.c.l.b16 %v328
    %v495 = vunpack.c.l.b16 %v329
    %v496 = vunpack.c.h.b16 %v329
    %v497 = vunpack.c.l.b16 %v330
    %v498 = vpack.c.b16 %v453, %v450
    %v499 = vpack.c.b16 %v454, %v451
    %v500 = vpack.c.b16 %v455, %v452
    %v501 = vpack.c.b16 %v459, %v456
    %v502 = vpack.c.b16 %v460, %v457
    %v503 = vpack.c.b16 %v461, %v458
    %v504 = vpack.c.b16 %v465, %v462
    %v505 = vpack.c.b16 %v466, %v463
    %v506 = vpack.c.b16 %v467, %v464
    %v507 = vpack.c.b16 %v471, %v468
    %v508 = vpack.c.b16 %v472, %v469
    %v509 = vpack.c.b16 %v473, %v470
    %v510 = vpack.c.b16 %v477, %v474
    %v511 = vpack.c.b16 %v478, %v475
    %v512 = vpack.c.b16 %v479, %v476
    %v513 = vpack.c.b16 %v483, %v480
    %v514 = vpack.c.b16 %v484, %v481
    %v515 = vpack.c.b16 %v485, %v482
    %v516 = vpack.c.b16 %v489, %v486
    %v517 = vpack.c.b16 %v490, %v487
    %v518 = vpack.c.b16 %v491, %v488
    %v519 = vpack.c.b16 %v495, %v492
    %v520 = vpack.c.b16 %v496, %v493
    %v521 = vpack.c.b16 %v497, %v494
    %546 = vmatprep.subr.bf16.mxu0 %v499
    %547 = vmatpush1.bf16.msra.mxu0 %v498
    %548 = vmatprep.subr.bf16.mxu0 %v502
    %549 = vmatpush1.bf16.msra.mxu0 %v501
    %550 = vmatprep.subr.bf16.mxu0 %v505
    %551 = vmatpush1.bf16.msra.mxu0 %v504
    %552 = vmatprep.subr.bf16.mxu0 %v508
    %553 = vmatpush1.bf16.msra.mxu0 %v507
    %554 = vmatprep.subr.bf16.mxu0 %v511
    %555 = vmatpush1.bf16.msra.mxu0 %v510
    %556 = vmatprep.subr.bf16.mxu0 %v514
    %557 = vmatpush1.bf16.msra.mxu0 %v513
    %558 = vmatprep.subr.bf16.mxu0 %v517
    %559 = vmatpush1.bf16.msra.mxu0 %v516
    %560 = vmatprep.subr.bf16.mxu0 %v520
    %561 = vmatpush1.bf16.msra.mxu0 %v519
    %562 = vmatprep.subr.bf16.mxu0 0
    %563 = vmatpush1.bf16.msra.mxu0 0
    %564 = vmatprep.subr.bf16.mxu0 0
    %565 = vmatpush1.bf16.msra.mxu0 0
    %566 = vmatprep.subr.bf16.mxu0 0
    %567 = vmatpush1.bf16.msra.mxu0 0
    %568 = vmatprep.subr.bf16.mxu0 0
    %569 = vmatpush1.bf16.msra.mxu0 0
    %570 = vmatprep.subr.bf16.mxu0 0
    %571 = vmatpush1.bf16.msra.mxu0 0
    %572 = vmatprep.subr.bf16.mxu0 0
    %573 = vmatpush1.bf16.msra.mxu0 0
    %574 = vmatprep.subr.bf16.mxu0 0
    %575 = vmatpush1.bf16.msra.mxu0 0
    %576 = vmatprep.subr.bf16.mxu0 0
    %577 = vmatpush1.bf16.msra.mxu0 0
    %578 = vmatprep.mubr.bf16.mxu0 0
    %579 = vmatmul.mubr.bf16.gmra.mrb[0].mxu0 %v400
    %v580 = vpop.f32.mrb[0].mxu0
    %v581 = vadd.f32 %v406, %v580
    %v582 = vpop.f32.mrb[0].mxu0
    %v583 = vadd.f32 %v410, %v582
    %v584 = vpop.f32.mrb[0].mxu0
    %v585 = vadd.f32 %v406, %v584
    %v586 = vpop.f32.mrb[0].mxu0
    %v587 = vadd.f32 %v410, %v586
    %588 = vmatprep.mubr.bf16.mxu0 0
    %589 = vmatmul.mubr.bf16.gmra.mrb[0].mxu0 %v401
    %v590 = vpop.f32.mrb[0].mxu0
    %v591 = vadd.f32 %v406, %v590
    %v592 = vpop.f32.mrb[0].mxu0
    %v593 = vadd.f32 %v410, %v592
    %v594 = vpop.f32.mrb[0].mxu0
    %v595 = vpop.f32.mrb[0].mxu0
    %596 = vdwg.mxu0
    %597 = vmatprep.subr.bf16.mxu0 0
    %598 = vmatpush1.bf16.msra.mxu0 %v500
    %599 = vmatprep.subr.bf16.mxu0 0
    %600 = vmatpush1.bf16.msra.mxu0 %v503
    %601 = vmatprep.subr.bf16.mxu0 0
    %602 = vmatpush1.bf16.msra.mxu0 %v506
    %603 = vmatprep.subr.bf16.mxu0 0
    %604 = vmatpush1.bf16.msra.mxu0 %v509
    %605 = vmatprep.subr.bf16.mxu0 0
    %606 = vmatpush1.bf16.msra.mxu0 %v512
    %607 = vmatprep.subr.bf16.mxu0 0
    %608 = vmatpush1.bf16.msra.mxu0 %v515
    %609 = vmatprep.subr.bf16.mxu0 0
    %610 = vmatpush1.bf16.msra.mxu0 %v518
    %611 = vmatprep.subr.bf16.mxu0 0
    %612 = vmatpush1.bf16.msra.mxu0 %v521
    %613 = vmatprep.subr.bf16.mxu0 0
    %614 = vmatpush1.bf16.msra.mxu0 0
    %615 = vmatprep.subr.bf16.mxu0 0
    %616 = vmatpush1.bf16.msra.mxu0 0
    %617 = vmatprep.subr.bf16.mxu0 0
    %618 = vmatpush1.bf16.msra.mxu0 0
    %619 = vmatprep.subr.bf16.mxu0 0
    %620 = vmatpush1.bf16.msra.mxu0 0
    %621 = vmatprep.subr.bf16.mxu0 0
    %622 = vmatpush1.bf16.msra.mxu0 0
    %623 = vmatprep.subr.bf16.mxu0 0
    %624 = vmatpush1.bf16.msra.mxu0 0
    %625 = vmatprep.subr.bf16.mxu0 0
    %626 = vmatpush1.bf16.msra.mxu0 0
    %627 = vmatprep.subr.bf16.mxu0 0
    %628 = vmatpush1.bf16.msra.mxu0 0
    %629 = vmatprep.mubr.bf16.mxu0 0
    %630 = vmatmul.mubr.bf16.gmra.mrb[0].mxu0 %v400
    %v631 = vpop.f32.mrb[0].mxu0
    %v632 = vadd.f32 %v414, %v631
    %v633 = vpop.f32.mrb[0].mxu0
    %v634 = vpop.f32.mrb[0].mxu0
    %v635 = vadd.f32 %v414, %v634
    %v636 = vpop.f32.mrb[0].mxu0
    %637 = vmatprep.mubr.bf16.mxu0 0
    %638 = vmatmul.mubr.bf16.gmra.mrb[0].mxu0 %v401
    %v639 = vpop.f32.mrb[0].mxu0
    %v640 = vadd.f32 %v414, %v639
    %v641 = vpop.f32.mrb[0].mxu0
    %v642 = vpop.f32.mrb[0].mxu0
    %v643 = vpop.f32.mrb[0].mxu0
    %644 = vdwg.mxu0
    %v645 = vpack.c.bf16 %v585, %v581
    %v646 = vpack.c.bf16 %v591, %v591
    %v647 = vpack.c.bf16 %v587, %v583
    %v648 = vpack.c.bf16 %v593, %v593
    %v649 = vpack.c.bf16 %v635, %v632
    %v650 = vpack.c.bf16 %v640, %v640
    %vm651 = vcmask 261120
    %v653 = vsel %vm651, %v645, 0
    %v656 = vsel %vm651, %v646, 0
    %v659 = vsel %vm651, %v647, 0
    %v662 = vsel %vm651, %v648, 0
    %664 = vmatprep.subr.bf16.mxu0 0
    %665 = vmatpush1.bf16.xpose.msra.mxu0 %v659
    %666 = vmatprep.subr.bf16.mxu0 0
    %667 = vmatpush1.bf16.xpose.msra.mxu0 %v662
    %668 = vmatprep.subr.bf16.mxu0 0
    %669 = vmatpush1.bf16.xpose.msra.mxu0 0
    %670 = vmatprep.subr.bf16.mxu0 0
    %671 = vmatpush1.bf16.xpose.msra.mxu0 0
    %672 = vmatprep.subr.bf16.mxu0 0
    %673 = vmatpush1.bf16.xpose.msra.mxu0 0
    %674 = vmatprep.subr.bf16.mxu0 0
    %675 = vmatpush1.bf16.xpose.msra.mxu0 0
    %676 = vmatprep.subr.bf16.mxu0 0
    %677 = vmatpush1.bf16.xpose.msra.mxu0 0
    %678 = vmatprep.subr.bf16.mxu0 0
    %679 = vmatpush1.bf16.xpose.msra.mxu0 0
    %680 = vmatprep.subr.bf16.mxu0 0
    %681 = vmatpush1.bf16.xpose.msra.mxu0 0
    %682 = vmatprep.subr.bf16.mxu0 0
    %683 = vmatpush1.bf16.xpose.msra.mxu0 0
    %684 = vmatprep.subr.bf16.mxu0 0
    %685 = vmatpush1.bf16.xpose.msra.mxu0 0
    %686 = vmatprep.subr.bf16.mxu0 0
    %687 = vmatpush1.bf16.xpose.msra.mxu0 0
    %688 = vmatprep.subr.bf16.mxu0 0
    %689 = vmatpush1.bf16.xpose.msra.mxu0 0
    %690 = vmatprep.subr.bf16.mxu0 0
    %691 = vmatpush1.bf16.xpose.msra.mxu0 0
    %692 = vmatprep.subr.bf16.mxu0 0
    %693 = vmatpush1.bf16.xpose.msra.mxu0 0
    %694 = vmatprep.subr.bf16.mxu0 0
    %695 = vmatpush1.bf16.xpose.msra.mxu0 0
    %696 = vmatprep.mubr.bf16.mxu0 0
    %697 = vmatmul.mubr.bf16.gmra.mrb[0].mxu0 %v653
    %v698 = vpop.f32.mrb[0].mxu0
    %v699 = vadd.f32 %v172, %v698
    %v700 = vpop.f32.mrb[0].mxu0
    %v701 = vpop.f32.mrb[0].mxu0
    %v702 = vadd.f32 %v173, %v701
    %v703 = vpop.f32.mrb[0].mxu0
    %704 = vmatprep.mubr.bf16.mxu0 0
    %705 = vmatmul.mubr.bf16.gmra.mrb[0].mxu0 %v656
    %v706 = vpop.f32.mrb[0].mxu0
    %v707 = vadd.f32 %v174, %v706
    %v708 = vpop.f32.mrb[0].mxu0
    %v709 = vpop.f32.mrb[0].mxu0
    %v710 = vpop.f32.mrb[0].mxu0
    %711 = vdwg.mxu0
    %vm712 = vcmask 195584
    %v713 = vsel %vm712, %v699, -inf
    %714 = vmax.xlane.f32.xlu0 %v713
    %v715 = vpop.xlane.xlu0 %714
    %v716 = vsel %vm712, %v702, -inf
    %717 = vmax.xlane.f32.xlu0 %v716
    %v718 = vpop.xlane.xlu0 %717
    %v719 = vsel %vm712, %v707, -inf
    %720 = vmax.xlane.f32.xlu0 %v719
    %v721 = vpop.xlane.xlu0 %720
    %v722 = vsub.f32 %v699, %v715
    %v723 = vsub.f32 %v702, %v718
    %v724 = vsub.f32 %v707, %v721
    %v725 = vmul.f32 %v722, 1.442695
    %v726 = vpow.pop %v725
    %v727 = vmul.f32 %v723, 1.442695
    %v728 = vpow.pop %v727
    %v729 = vmul.f32 %v724, 1.442695
    %v730 = vpow.pop %v729
    %v731 = vsel %vm712, %v726, 0.0
    %732 = vadd.xlane.f32.xlu0 %v731
    %v733 = vpop.xlane.xlu0 %732
    %v734 = vsel %vm712, %v728, 0.0
    %735 = vadd.xlane.f32.xlu0 %v734
    %v736 = vpop.xlane.xlu0 %735
    %v737 = vsel %vm712, %v730, 0.0
    %738 = vadd.xlane.f32.xlu0 %v737
    %v739 = vpop.xlane.xlu0 %738
    %v740 = vrcp.pop %v733
    %v741 = vrcp.pop %v736
    %v742 = vrcp.pop %v739
    %v743 = vmul.f32 %v726, %v740
    %v744 = vmul.f32 %v728, %v741
    %v745 = vmul.f32 %v730, %v742
    %v746 = vpack.c.bf16 %v744, %v743
    %v747 = vpack.c.bf16 %v745, %v745
    %v749 = vsel %vm712, %v746, 0
    %v752 = vsel %vm712, %v747, 0
    %vm754 = vcmask 1043456
    %v756 = vsel %vm754, %v650, 0
    %758 = vmatprep.subr.bf16.mxu0 0
    %759 = vmatpush1.bf16.msra.mxu0 %v649
    %760 = vmatprep.subr.bf16.mxu0 0
    %761 = vmatpush1.bf16.msra.mxu0 %v756
    %762 = vmatprep.subr.bf16.mxu0 0
    %763 = vmatpush1.bf16.msra.mxu0 0
    %764 = vmatprep.subr.bf16.mxu0 0
    %765 = vmatpush1.bf16.msra.mxu0 0
    %766 = vmatprep.subr.bf16.mxu0 0
    %767 = vmatpush1.bf16.msra.mxu0 0
    %768 = vmatprep.subr.bf16.mxu0 0
    %769 = vmatpush1.bf16.msra.mxu0 0
    %770 = vmatprep.subr.bf16.mxu0 0
    %771 = vmatpush1.bf16.msra.mxu0 0
    %772 = vmatprep.subr.bf16.mxu0 0
    %773 = vmatpush1.bf16.msra.mxu0 0
    %774 = vmatprep.subr.bf16.mxu0 0
    %775 = vmatpush1.bf16.msra.mxu0 0
    %776 = vmatprep.subr.bf16.mxu0 0
    %777 = vmatpush1.bf16.msra.mxu0 0
    %778 = vmatprep.subr.bf16.mxu0 0
    %779 = vmatpush1.bf16.msra.mxu0 0
    %780 = vmatprep.subr.bf16.mxu0 0
    %781 = vmatpush1.bf16.msra.mxu0 0
    %782 = vmatprep.subr.bf16.mxu0 0
    %783 = vmatpush1.bf16.msra.mxu0 0
    %784 = vmatprep.subr.bf16.mxu0 0
    %785 = vmatpush1.bf16.msra.mxu0 0
    %786 = vmatprep.subr.bf16.mxu0 0
    %787 = vmatpush1.bf16.msra.mxu0 0
    %788 = vmatprep.subr.bf16.mxu0 0
    %789 = vmatpush1.bf16.msra.mxu0 0
    %790 = vmatprep.mubr.bf16.mxu0 0
    %791 = vmatmul.mubr.bf16.gmra.mrb[0].mxu0 %v749
    %v792 = vpop.f32.mrb[0].mxu0
    %v793 = vadd.f32 0.0, %v792
    %v794 = vpop.f32.mrb[0].mxu0
    %v795 = vpop.f32.mrb[0].mxu0
    %v796 = vadd.f32 0.0, %v795
    %v797 = vpop.f32.mrb[0].mxu0
    %798 = vmatprep.mubr.bf16.mxu0 0
    %799 = vmatmul.mubr.bf16.gmra.mrb[0].mxu0 %v752
    %v800 = vpop.f32.mrb[0].mxu0
    %v801 = vadd.f32 0.0, %v800
    %v802 = vpop.f32.mrb[0].mxu0
    %v803 = vpop.f32.mrb[0].mxu0
    %v804 = vpop.f32.mrb[0].mxu0
    %805 = vdwg.mxu0
    %v806 = vpack.c.bf16 %v796, %v793
    %v807 = vpack.c.bf16 %v801, %v801
    %810 = vrot.lane.b32.xlu0 %v645, 96
    %v811 = vpop.permute.xlu0 %810
    %812 = vrot.lane.b32.xlu0 %v646, 96
    %v813 = vpop.permute.xlu0 %812
    %816 = vrot.lane.b32.xlu0 %v647, 96
    %v817 = vpop.permute.xlu0 %816
    %818 = vrot.lane.b32.xlu0 %v648, 96
    %v819 = vpop.permute.xlu0 %818
    %v821 = vsel %vm651, %v811, 0
    %v824 = vsel %vm651, %v813, 0
    %v827 = vsel %vm651, %v817, 0
    %v830 = vsel %vm651, %v819, 0
    %832 = vmatprep.subr.bf16.mxu0 0
    %833 = vmatpush1.bf16.xpose.msra.mxu0 %v827
    %834 = vmatprep.subr.bf16.mxu0 0
    %835 = vmatpush1.bf16.xpose.msra.mxu0 %v830
    %836 = vmatprep.subr.bf16.mxu0 0
    %837 = vmatpush1.bf16.xpose.msra.mxu0 0
    %838 = vmatprep.subr.bf16.mxu0 0
    %839 = vmatpush1.bf16.xpose.msra.mxu0 0
    %840 = vmatprep.subr.bf16.mxu0 0
    %841 = vmatpush1.bf16.xpose.msra.mxu0 0
    %842 = vmatprep.subr.bf16.mxu0 0
    %843 = vmatpush1.bf16.xpose.msra.mxu0 0
    %844 = vmatprep.subr.bf16.mxu0 0
    %845 = vmatpush1.bf16.xpose.msra.mxu0 0
    %846 = vmatprep.subr.bf16.mxu0 0
    %847 = vmatpush1.bf16.xpose.msra.mxu0 0
    %848 = vmatprep.subr.bf16.mxu0 0
    %849 = vmatpush1.bf16.xpose.msra.mxu0 0
    %850 = vmatprep.subr.bf16.mxu0 0
    %851 = vmatpush1.bf16.xpose.msra.mxu0 0
    %852 = vmatprep.subr.bf16.mxu0 0
    %853 = vmatpush1.bf16.xpose.msra.mxu0 0
    %854 = vmatprep.subr.bf16.mxu0 0
    %855 = vmatpush1.bf16.xpose.msra.mxu0 0
    %856 = vmatprep.subr.bf16.mxu0 0
    %857 = vmatpush1.bf16.xpose.msra.mxu0 0
    %858 = vmatprep.subr.bf16.mxu0 0
    %859 = vmatpush1.bf16.xpose.msra.mxu0 0
    %860 = vmatprep.subr.bf16.mxu0 0
    %861 = vmatpush1.bf16.xpose.msra.mxu0 0
    %862 = vmatprep.subr.bf16.mxu0 0
    %863 = vmatpush1.bf16.xpose.msra.mxu0 0
    %864 = vmatprep.mubr.bf16.mxu0 0
    %865 = vmatmul.mubr.bf16.gmra.mrb[0].mxu0 %v821
    %v866 = vpop.f32.mrb[0].mxu0
    %v867 = vadd.f32 %v172, %v866
    %v868 = vpop.f32.mrb[0].mxu0
    %v869 = vpop.f32.mrb[0].mxu0
    %v870 = vadd.f32 %v173, %v869
    %v871 = vpop.f32.mrb[0].mxu0
    %872 = vmatprep.mubr.bf16.mxu0 0
    %873 = vmatmul.mubr.bf16.gmra.mrb[0].mxu0 %v824
    %v874 = vpop.f32.mrb[0].mxu0
    %v875 = vadd.f32 %v174, %v874
    %v876 = vpop.f32.mrb[0].mxu0
    %v877 = vpop.f32.mrb[0].mxu0
    %v878 = vpop.f32.mrb[0].mxu0
    %879 = vdwg.mxu0
    %v880 = vsel %vm712, %v867, -inf
    %881 = vmax.xlane.f32.xlu0 %v880
    %v882 = vpop.xlane.xlu0 %881
    %v883 = vsel %vm712, %v870, -inf
    %884 = vmax.xlane.f32.xlu0 %v883
    %v885 = vpop.xlane.xlu0 %884
    %v886 = vsel %vm712, %v875, -inf
    %887 = vmax.xlane.f32.xlu0 %v886
    %v888 = vpop.xlane.xlu0 %887
    %v889 = vsub.f32 %v867, %v882
    %v890 = vsub.f32 %v870, %v885
    %v891 = vsub.f32 %v875, %v888
    %v892 = vmul.f32 %v889, 1.442695
    %v893 = vpow.pop %v892
    %v894 = vmul.f32 %v890, 1.442695
    %v895 = vpow.pop %v894
    %v896 = vmul.f32 %v891, 1.442695
    %v897 = vpow.pop %v896
    %v898 = vsel %vm712, %v893, 0.0
    %899 = vadd.xlane.f32.xlu0 %v898
    %v900 = vpop.xlane.xlu0 %899
    %v901 = vsel %vm712, %v895, 0.0
    %902 = vadd.xlane.f32.xlu0 %v901
    %v903 = vpop.xlane.xlu0 %902
    %v904 = vsel %vm712, %v897, 0.0
    %905 = vadd.xlane.f32.xlu0 %v904
    %v906 = vpop.xlane.xlu0 %905
    %v907 = vrcp.pop %v900
    %v908 = vrcp.pop %v903
    %v909 = vrcp.pop %v906
    %v910 = vmul.f32 %v893, %v907
    %v911 = vmul.f32 %v895, %v908
    %v912 = vmul.f32 %v897, %v909
    %v913 = vpack.c.bf16 %v911, %v910
    %v914 = vpack.c.bf16 %v912, %v912
    %917 = vrot.lane.b32.xlu0 %v649, 96
    %v918 = vpop.permute.xlu0 %917
    %919 = vrot.lane.b32.xlu0 %v650, 96
    %v920 = vpop.permute.xlu0 %919
    %v923 = vsel %vm712, %v913, 0
    %v926 = vsel %vm712, %v914, 0
    %v929 = vsel %vm754, %v920, 0
    %931 = vmatprep.subr.bf16.mxu0 0
    %932 = vmatpush1.bf16.msra.mxu0 %v918
    %933 = vmatprep.subr.bf16.mxu0 0
    %934 = vmatpush1.bf16.msra.mxu0 %v929
    %935 = vmatprep.subr.bf16.mxu0 0
    %936 = vmatpush1.bf16.msra.mxu0 0
    %937 = vmatprep.subr.bf16.mxu0 0
    %938 = vmatpush1.bf16.msra.mxu0 0
    %939 = vmatprep.subr.bf16.mxu0 0
    %940 = vmatpush1.bf16.msra.mxu0 0
    %941 = vmatprep.subr.bf16.mxu0 0
    %942 = vmatpush1.bf16.msra.mxu0 0
    %943 = vmatprep.subr.bf16.mxu0 0
    %944 = vmatpush1.bf16.msra.mxu0 0
    %945 = vmatprep.subr.bf16.mxu0 0
    %946 = vmatpush1.bf16.msra.mxu0 0
    %947 = vmatprep.subr.bf16.mxu0 0
    %948 = vmatpush1.bf16.msra.mxu0 0
    %949 = vmatprep.subr.bf16.mxu0 0
    %950 = vmatpush1.bf16.msra.mxu0 0
    %951 = vmatprep.subr.bf16.mxu0 0
    %952 = vmatpush1.bf16.msra.mxu0 0
    %953 = vmatprep.subr.bf16.mxu0 0
    %954 = vmatpush1.bf16.msra.mxu0 0
    %955 = vmatprep.subr.bf16.mxu0 0
    %956 = vmatpush1.bf16.msra.mxu0 0
    %957 = vmatprep.subr.bf16.mxu0 0
    %958 = vmatpush1.bf16.msra.mxu0 0
    %959 = vmatprep.subr.bf16.mxu0 0
    %960 = vmatpush1.bf16.msra.mxu0 0
    %961 = vmatprep.subr.bf16.mxu0 0
    %962 = vmatpush1.bf16.msra.mxu0 0
    %963 = vmatprep.mubr.bf16.mxu0 0
    %964 = vmatmul.mubr.bf16.gmra.mrb[0].mxu0 %v923
    %v965 = vpop.f32.mrb[0].mxu0
    %v966 = vadd.f32 0.0, %v965
    %v967 = vpop.f32.mrb[0].mxu0
    %v968 = vpop.f32.mrb[0].mxu0
    %v969 = vadd.f32 0.0, %v968
    %v970 = vpop.f32.mrb[0].mxu0
    %971 = vmatprep.mubr.bf16.mxu0 0
    %972 = vmatmul.mubr.bf16.gmra.mrb[0].mxu0 %v926
    %v973 = vpop.f32.mrb[0].mxu0
    %v974 = vadd.f32 0.0, %v973
    %v975 = vpop.f32.mrb[0].mxu0
    %v976 = vpop.f32.mrb[0].mxu0
    %v977 = vpop.f32.mrb[0].mxu0
    %978 = vdwg.mxu0
    %v979 = vpack.c.bf16 %v969, %v966
    %v980 = vpack.c.bf16 %v974, %v974
    %v985 = vunpack.c.l.b16 %v336
    %v986 = vunpack.c.l.b16 %v337
    %v987 = vunpack.c.l.b16 %v338
    %v988 = vunpack.c.l.b16 %v339
    %v989 = vpack.c.b16 %v986, %v985
    %v990 = vpack.c.b16 %v988, %v987
    %v994 = vsel %vm651, %v979, 0
    %v997 = vsel %vm651, %v980, 0
    %999 = vmatprep.subr.bf16.mxu0 0
    %1000 = vmatpush1.bf16.msra.mxu0 %v989
    %1001 = vmatprep.subr.bf16.mxu0 0
    %1002 = vmatpush1.bf16.msra.mxu0 %v990
    %1003 = vmatprep.subr.bf16.mxu0 0
    %1004 = vmatpush1.bf16.msra.mxu0 0
    %1005 = vmatprep.subr.bf16.mxu0 0
    %1006 = vmatpush1.bf16.msra.mxu0 0
    %1007 = vmatprep.subr.bf16.mxu0 0
    %1008 = vmatpush1.bf16.msra.mxu0 0
    %1009 = vmatprep.subr.bf16.mxu0 0
    %1010 = vmatpush1.bf16.msra.mxu0 0
    %1011 = vmatprep.subr.bf16.mxu0 0
    %1012 = vmatpush1.bf16.msra.mxu0 0
    %1013 = vmatprep.subr.bf16.mxu0 0
    %1014 = vmatpush1.bf16.msra.mxu0 0
    %1015 = vmatprep.subr.bf16.mxu0 0
    %1016 = vmatpush1.bf16.msra.mxu0 0
    %1017 = vmatprep.subr.bf16.mxu0 0
    %1018 = vmatpush1.bf16.msra.mxu0 0
    %1019 = vmatprep.subr.bf16.mxu0 0
    %1020 = vmatpush1.bf16.msra.mxu0 0
    %1021 = vmatprep.subr.bf16.mxu0 0
    %1022 = vmatpush1.bf16.msra.mxu0 0
    %1023 = vmatprep.subr.bf16.mxu0 0
    %1024 = vmatpush1.bf16.msra.mxu0 0
    %1025 = vmatprep.subr.bf16.mxu0 0
    %1026 = vmatpush1.bf16.msra.mxu0 0
    %1027 = vmatprep.subr.bf16.mxu0 0
    %1028 = vmatpush1.bf16.msra.mxu0 0
    %1029 = vmatprep.subr.bf16.mxu0 0
    %1030 = vmatpush1.bf16.msra.mxu0 0
    %1031 = vmatprep.mubr.bf16.mxu0 0
    %1032 = vmatmul.mubr.bf16.gmra.mrb[0].mxu0 %v994
    %v1033 = vpop.f32.mrb[0].mxu0
    %v1034 = vadd.f32 0.0, %v1033
    %v1035 = vpop.f32.mrb[0].mxu0
    %v1036 = vpop.f32.mrb[0].mxu0
    %v1037 = vadd.f32 0.0, %v1036
    %v1038 = vpop.f32.mrb[0].mxu0
    %1039 = vmatprep.mubr.bf16.mxu0 0
    %1040 = vmatmul.mubr.bf16.gmra.mrb[0].mxu0 %v997
    %v1041 = vpop.f32.mrb[0].mxu0
    %v1042 = vadd.f32 0.0, %v1041
    %v1043 = vpop.f32.mrb[0].mxu0
    %v1044 = vpop.f32.mrb[0].mxu0
    %v1045 = vpop.f32.mrb[0].mxu0
    %1046 = vdwg.mxu0
    %v1051 = vunpack.c.l.b16 %v332
    %v1052 = vunpack.c.l.b16 %v333
    %v1053 = vunpack.c.l.b16 %v334
    %v1054 = vunpack.c.l.b16 %v335
    %v1055 = vpack.c.b16 %v1052, %v1051
    %v1056 = vpack.c.b16 %v1054, %v1053
    %v1060 = vsel %vm651, %v806, 0
    %v1063 = vsel %vm651, %v807, 0
    %1065 = vmatprep.subr.bf16.mxu0 0
    %1066 = vmatpush1.bf16.msra.mxu0 %v1055
    %1067 = vmatprep.subr.bf16.mxu0 0
    %1068 = vmatpush1.bf16.msra.mxu0 %v1056
    %1069 = vmatprep.subr.bf16.mxu0 0
    %1070 = vmatpush1.bf16.msra.mxu0 0
    %1071 = vmatprep.subr.bf16.mxu0 0
    %1072 = vmatpush1.bf16.msra.mxu0 0
    %1073 = vmatprep.subr.bf16.mxu0 0
    %1074 = vmatpush1.bf16.msra.mxu0 0
    %1075 = vmatprep.subr.bf16.mxu0 0
    %1076 = vmatpush1.bf16.msra.mxu0 0
    %1077 = vmatprep.subr.bf16.mxu0 0
    %1078 = vmatpush1.bf16.msra.mxu0 0
    %1079 = vmatprep.subr.bf16.mxu0 0
    %1080 = vmatpush1.bf16.msra.mxu0 0
    %1081 = vmatprep.subr.bf16.mxu0 0
    %1082 = vmatpush1.bf16.msra.mxu0 0
    %1083 = vmatprep.subr.bf16.mxu0 0
    %1084 = vmatpush1.bf16.msra.mxu0 0
    %1085 = vmatprep.subr.bf16.mxu0 0
    %1086 = vmatpush1.bf16.msra.mxu0 0
    %1087 = vmatprep.subr.bf16.mxu0 0
    %1088 = vmatpush1.bf16.msra.mxu0 0
    %1089 = vmatprep.subr.bf16.mxu0 0
    %1090 = vmatpush1.bf16.msra.mxu0 0
    %1091 = vmatprep.subr.bf16.mxu0 0
    %1092 = vmatpush1.bf16.msra.mxu0 0
    %1093 = vmatprep.subr.bf16.mxu0 0
    %1094 = vmatpush1.bf16.msra.mxu0 0
    %1095 = vmatprep.subr.bf16.mxu0 0
    %1096 = vmatpush1.bf16.msra.mxu0 0
    %1097 = vmatprep.mubr.bf16.mxu0 0
    %1098 = vmatmul.mubr.bf16.gmra.mrb[0].mxu0 %v1060
    %v1099 = vpop.f32.mrb[0].mxu0
    %v1100 = vadd.f32 %v1034, %v1099
    %v1101 = vpop.f32.mrb[0].mxu0
    %v1102 = vpop.f32.mrb[0].mxu0
    %v1103 = vadd.f32 %v1037, %v1102
    %v1104 = vpop.f32.mrb[0].mxu0
    %1105 = vmatprep.mubr.bf16.mxu0 0
    %1106 = vmatmul.mubr.bf16.gmra.mrb[0].mxu0 %v1063
    %v1107 = vpop.f32.mrb[0].mxu0
    %v1108 = vadd.f32 %v1042, %v1107
    %v1109 = vpop.f32.mrb[0].mxu0
    %v1110 = vpop.f32.mrb[0].mxu0
    %v1111 = vpop.f32.mrb[0].mxu0
    %1112 = vdwg.mxu0
    %1113 = vrot.lane.b32.xlu0 %v645, 64
    %v1114 = vpop.permute.xlu0 %1113
    %1115 = vrot.lane.b32.xlu0 %v646, 64
    %v1116 = vpop.permute.xlu0 %1115
    %1117 = vrot.lane.b32.xlu0 %v647, 64
    %v1118 = vpop.permute.xlu0 %1117
    %1119 = vrot.lane.b32.xlu0 %v648, 64
    %v1120 = vpop.permute.xlu0 %1119
    %v1122 = vsel %vm651, %v1114, 0
    %v1125 = vsel %vm651, %v1116, 0
    %v1128 = vsel %vm651, %v1118, 0
    %v1131 = vsel %vm651, %v1120, 0
    %1133 = vmatprep.subr.bf16.mxu0 0
    %1134 = vmatpush1.bf16.xpose.msra.mxu0 %v1128
    %1135 = vmatprep.subr.bf16.mxu0 0
    %1136 = vmatpush1.bf16.xpose.msra.mxu0 %v1131
    %1137 = vmatprep.subr.bf16.mxu0 0
    %1138 = vmatpush1.bf16.xpose.msra.mxu0 0
    %1139 = vmatprep.subr.bf16.mxu0 0
    %1140 = vmatpush1.bf16.xpose.msra.mxu0 0
    %1141 = vmatprep.subr.bf16.mxu0 0
    %1142 = vmatpush1.bf16.xpose.msra.mxu0 0
    %1143 = vmatprep.subr.bf16.mxu0 0
    %1144 = vmatpush1.bf16.xpose.msra.mxu0 0
    %1145 = vmatprep.subr.bf16.mxu0 0
    %1146 = vmatpush1.bf16.xpose.msra.mxu0 0
    %1147 = vmatprep.subr.bf16.mxu0 0
    %1148 = vmatpush1.bf16.xpose.msra.mxu0 0
    %1149 = vmatprep.subr.bf16.mxu0 0
    %1150 = vmatpush1.bf16.xpose.msra.mxu0 0
    %1151 = vmatprep.subr.bf16.mxu0 0
    %1152 = vmatpush1.bf16.xpose.msra.mxu0 0
    %1153 = vmatprep.subr.bf16.mxu0 0
    %1154 = vmatpush1.bf16.xpose.msra.mxu0 0
    %1155 = vmatprep.subr.bf16.mxu0 0
    %1156 = vmatpush1.bf16.xpose.msra.mxu0 0
    %1157 = vmatprep.subr.bf16.mxu0 0
    %1158 = vmatpush1.bf16.xpose.msra.mxu0 0
    %1159 = vmatprep.subr.bf16.mxu0 0
    %1160 = vmatpush1.bf16.xpose.msra.mxu0 0
    %1161 = vmatprep.subr.bf16.mxu0 0
    %1162 = vmatpush1.bf16.xpose.msra.mxu0 0
    %1163 = vmatprep.subr.bf16.mxu0 0
    %1164 = vmatpush1.bf16.xpose.msra.mxu0 0
    %1165 = vmatprep.mubr.bf16.mxu0 0
    %1166 = vmatmul.mubr.bf16.gmra.mrb[0].mxu0 %v1122
    %v1167 = vpop.f32.mrb[0].mxu0
    %v1168 = vadd.f32 %v172, %v1167
    %v1169 = vpop.f32.mrb[0].mxu0
    %v1170 = vpop.f32.mrb[0].mxu0
    %v1171 = vadd.f32 %v173, %v1170
    %v1172 = vpop.f32.mrb[0].mxu0
    %1173 = vmatprep.mubr.bf16.mxu0 0
    %1174 = vmatmul.mubr.bf16.gmra.mrb[0].mxu0 %v1125
    %v1175 = vpop.f32.mrb[0].mxu0
    %v1176 = vadd.f32 %v174, %v1175
    %v1177 = vpop.f32.mrb[0].mxu0
    %v1178 = vpop.f32.mrb[0].mxu0
    %v1179 = vpop.f32.mrb[0].mxu0
    %1180 = vdwg.mxu0
    %v1181 = vsel %vm712, %v1168, -inf
    %1182 = vmax.xlane.f32.xlu0 %v1181
    %v1183 = vpop.xlane.xlu0 %1182
    %v1184 = vsel %vm712, %v1171, -inf
    %1185 = vmax.xlane.f32.xlu0 %v1184
    %v1186 = vpop.xlane.xlu0 %1185
    %v1187 = vsel %vm712, %v1176, -inf
    %1188 = vmax.xlane.f32.xlu0 %v1187
    %v1189 = vpop.xlane.xlu0 %1188
    %v1190 = vsub.f32 %v1168, %v1183
    %v1191 = vsub.f32 %v1171, %v1186
    %v1192 = vsub.f32 %v1176, %v1189
    %v1193 = vmul.f32 %v1190, 1.442695
    %v1194 = vpow.pop %v1193
    %v1195 = vmul.f32 %v1191, 1.442695
    %v1196 = vpow.pop %v1195
    %v1197 = vmul.f32 %v1192, 1.442695
    %v1198 = vpow.pop %v1197
    %v1199 = vsel %vm712, %v1194, 0.0
    %1200 = vadd.xlane.f32.xlu0 %v1199
    %v1201 = vpop.xlane.xlu0 %1200
    %v1202 = vsel %vm712, %v1196, 0.0
    %1203 = vadd.xlane.f32.xlu0 %v1202
    %v1204 = vpop.xlane.xlu0 %1203
    %v1205 = vsel %vm712, %v1198, 0.0
    %1206 = vadd.xlane.f32.xlu0 %v1205
    %v1207 = vpop.xlane.xlu0 %1206
    %v1208 = vrcp.pop %v1201
    %v1209 = vrcp.pop %v1204
    %v1210 = vrcp.pop %v1207
    %v1211 = vmul.f32 %v1194, %v1208
    %v1212 = vmul.f32 %v1196, %v1209
    %v1213 = vmul.f32 %v1198, %v1210
    %v1214 = vpack.c.bf16 %v1212, %v1211
    %v1215 = vpack.c.bf16 %v1213, %v1213
    %1216 = vrot.lane.b32.xlu0 %v649, 64
    %v1217 = vpop.permute.xlu0 %1216
    %1218 = vrot.lane.b32.xlu0 %v650, 64
    %v1219 = vpop.permute.xlu0 %1218
    %v1222 = vsel %vm712, %v1214, 0
    %v1225 = vsel %vm712, %v1215, 0
    %v1228 = vsel %vm754, %v1219, 0
    %1230 = vmatprep.subr.bf16.mxu0 0
    %1231 = vmatpush1.bf16.msra.mxu0 %v1217
    %1232 = vmatprep.subr.bf16.mxu0 0
    %1233 = vmatpush1.bf16.msra.mxu0 %v1228
    %1234 = vmatprep.subr.bf16.mxu0 0
    %1235 = vmatpush1.bf16.msra.mxu0 0
    %1236 = vmatprep.subr.bf16.mxu0 0
    %1237 = vmatpush1.bf16.msra.mxu0 0
    %1238 = vmatprep.subr.bf16.mxu0 0
    %1239 = vmatpush1.bf16.msra.mxu0 0
    %1240 = vmatprep.subr.bf16.mxu0 0
    %1241 = vmatpush1.bf16.msra.mxu0 0
    %1242 = vmatprep.subr.bf16.mxu0 0
    %1243 = vmatpush1.bf16.msra.mxu0 0
    %1244 = vmatprep.subr.bf16.mxu0 0
    %1245 = vmatpush1.bf16.msra.mxu0 0
    %1246 = vmatprep.subr.bf16.mxu0 0
    %1247 = vmatpush1.bf16.msra.mxu0 0
    %1248 = vmatprep.subr.bf16.mxu0 0
    %1249 = vmatpush1.bf16.msra.mxu0 0
    %1250 = vmatprep.subr.bf16.mxu0 0
    %1251 = vmatpush1.bf16.msra.mxu0 0
    %1252 = vmatprep.subr.bf16.mxu0 0
    %1253 = vmatpush1.bf16.msra.mxu0 0
    %1254 = vmatprep.subr.bf16.mxu0 0
    %1255 = vmatpush1.bf16.msra.mxu0 0
    %1256 = vmatprep.subr.bf16.mxu0 0
    %1257 = vmatpush1.bf16.msra.mxu0 0
    %1258 = vmatprep.subr.bf16.mxu0 0
    %1259 = vmatpush1.bf16.msra.mxu0 0
    %1260 = vmatprep.subr.bf16.mxu0 0
    %1261 = vmatpush1.bf16.msra.mxu0 0
    %1262 = vmatprep.mubr.bf16.mxu0 0
    %1263 = vmatmul.mubr.bf16.gmra.mrb[0].mxu0 %v1222
    %v1264 = vpop.f32.mrb[0].mxu0
    %v1265 = vadd.f32 0.0, %v1264
    %v1266 = vpop.f32.mrb[0].mxu0
    %v1267 = vpop.f32.mrb[0].mxu0
    %v1268 = vadd.f32 0.0, %v1267
    %v1269 = vpop.f32.mrb[0].mxu0
    %1270 = vmatprep.mubr.bf16.mxu0 0
    %1271 = vmatmul.mubr.bf16.gmra.mrb[0].mxu0 %v1225
    %v1272 = vpop.f32.mrb[0].mxu0
    %v1273 = vadd.f32 0.0, %v1272
    %v1274 = vpop.f32.mrb[0].mxu0
    %v1275 = vpop.f32.mrb[0].mxu0
    %v1276 = vpop.f32.mrb[0].mxu0
    %1277 = vdwg.mxu0
    %v1278 = vpack.c.bf16 %v1268, %v1265
    %v1279 = vpack.c.bf16 %v1273, %v1273
    %v1284 = vunpack.c.l.b16 %v340
    %v1285 = vunpack.c.l.b16 %v341
    %v1286 = vunpack.c.l.b16 %v342
    %v1287 = vunpack.c.l.b16 %v343
    %v1288 = vpack.c.b16 %v1285, %v1284
    %v1289 = vpack.c.b16 %v1287, %v1286
    %v1293 = vsel %vm651, %v1278, 0
    %v1296 = vsel %vm651, %v1279, 0
    %1298 = vmatprep.subr.bf16.mxu0 0
    %1299 = vmatpush1.bf16.msra.mxu0 %v1288
    %1300 = vmatprep.subr.bf16.mxu0 0
    %1301 = vmatpush1.bf16.msra.mxu0 %v1289
    %1302 = vmatprep.subr.bf16.mxu0 0
    %1303 = vmatpush1.bf16.msra.mxu0 0
    %1304 = vmatprep.subr.bf16.mxu0 0
    %1305 = vmatpush1.bf16.msra.mxu0 0
    %1306 = vmatprep.subr.bf16.mxu0 0
    %1307 = vmatpush1.bf16.msra.mxu0 0
    %1308 = vmatprep.subr.bf16.mxu0 0
    %1309 = vmatpush1.bf16.msra.mxu0 0
    %1310 = vmatprep.subr.bf16.mxu0 0
    %1311 = vmatpush1.bf16.msra.mxu0 0
    %1312 = vmatprep.subr.bf16.mxu0 0
    %1313 = vmatpush1.bf16.msra.mxu0 0
    %1314 = vmatprep.subr.bf16.mxu0 0
    %1315 = vmatpush1.bf16.msra.mxu0 0
    %1316 = vmatprep.subr.bf16.mxu0 0
    %1317 = vmatpush1.bf16.msra.mxu0 0
    %1318 = vmatprep.subr.bf16.mxu0 0
    %1319 = vmatpush1.bf16.msra.mxu0 0
    %1320 = vmatprep.subr.bf16.mxu0 0
    %1321 = vmatpush1.bf16.msra.mxu0 0
    %1322 = vmatprep.subr.bf16.mxu0 0
    %1323 = vmatpush1.bf16.msra.mxu0 0
    %1324 = vmatprep.subr.bf16.mxu0 0
    %1325 = vmatpush1.bf16.msra.mxu0 0
    %1326 = vmatprep.subr.bf16.mxu0 0
    %1327 = vmatpush1.bf16.msra.mxu0 0
    %1328 = vmatprep.subr.bf16.mxu0 0
    %1329 = vmatpush1.bf16.msra.mxu0 0
    %1330 = vmatprep.mubr.bf16.mxu0 0
    %1331 = vmatmul.mubr.bf16.gmra.mrb[0].mxu0 %v1293
    %v1332 = vpop.f32.mrb[0].mxu0
    %v1333 = vadd.f32 0.0, %v1332
    %v1334 = vpop.f32.mrb[0].mxu0
    %v1335 = vpop.f32.mrb[0].mxu0
    %v1336 = vadd.f32 0.0, %v1335
    %v1337 = vpop.f32.mrb[0].mxu0
    %1338 = vmatprep.mubr.bf16.mxu0 0
    %1339 = vmatmul.mubr.bf16.gmra.mrb[0].mxu0 %v1296
    %v1340 = vpop.f32.mrb[0].mxu0
    %v1341 = vadd.f32 0.0, %v1340
    %v1342 = vpop.f32.mrb[0].mxu0
    %v1343 = vpop.f32.mrb[0].mxu0
    %v1344 = vpop.f32.mrb[0].mxu0
    %1345 = vdwg.mxu0
    %v1346 = vadd.f32 %v1100, %v1333
    %v1347 = vadd.f32 %v1103, %v1336
    %v1348 = vadd.f32 %v1108, %v1341
    %1349 = vrot.lane.b32.xlu0 %v645, 32
    %v1350 = vpop.permute.xlu0 %1349
    %1351 = vrot.lane.b32.xlu0 %v646, 32
    %v1352 = vpop.permute.xlu0 %1351
    %1353 = vrot.lane.b32.xlu0 %v647, 32
    %v1354 = vpop.permute.xlu0 %1353
    %1355 = vrot.lane.b32.xlu0 %v648, 32
    %v1356 = vpop.permute.xlu0 %1355
    %v1358 = vsel %vm651, %v1350, 0
    %v1361 = vsel %vm651, %v1352, 0
    %v1364 = vsel %vm651, %v1354, 0
    %v1367 = vsel %vm651, %v1356, 0
    %1369 = vmatprep.subr.bf16.mxu0 0
    %1370 = vmatpush1.bf16.xpose.msra.mxu0 %v1364
    %1371 = vmatprep.subr.bf16.mxu0 0
    %1372 = vmatpush1.bf16.xpose.msra.mxu0 %v1367
    %1373 = vmatprep.subr.bf16.mxu0 0
    %1374 = vmatpush1.bf16.xpose.msra.mxu0 0
    %1375 = vmatprep.subr.bf16.mxu0 0
    %1376 = vmatpush1.bf16.xpose.msra.mxu0 0
    %1377 = vmatprep.subr.bf16.mxu0 0
    %1378 = vmatpush1.bf16.xpose.msra.mxu0 0
    %1379 = vmatprep.subr.bf16.mxu0 0
    %1380 = vmatpush1.bf16.xpose.msra.mxu0 0
    %1381 = vmatprep.subr.bf16.mxu0 0
    %1382 = vmatpush1.bf16.xpose.msra.mxu0 0
    %1383 = vmatprep.subr.bf16.mxu0 0
    %1384 = vmatpush1.bf16.xpose.msra.mxu0 0
    %1385 = vmatprep.subr.bf16.mxu0 0
    %1386 = vmatpush1.bf16.xpose.msra.mxu0 0
    %1387 = vmatprep.subr.bf16.mxu0 0
    %1388 = vmatpush1.bf16.xpose.msra.mxu0 0
    %1389 = vmatprep.subr.bf16.mxu0 0
    %1390 = vmatpush1.bf16.xpose.msra.mxu0 0
    %1391 = vmatprep.subr.bf16.mxu0 0
    %1392 = vmatpush1.bf16.xpose.msra.mxu0 0
    %1393 = vmatprep.subr.bf16.mxu0 0
    %1394 = vmatpush1.bf16.xpose.msra.mxu0 0
    %1395 = vmatprep.subr.bf16.mxu0 0
    %1396 = vmatpush1.bf16.xpose.msra.mxu0 0
    %1397 = vmatprep.subr.bf16.mxu0 0
    %1398 = vmatpush1.bf16.xpose.msra.mxu0 0
    %1399 = vmatprep.subr.bf16.mxu0 0
    %1400 = vmatpush1.bf16.xpose.msra.mxu0 0
    %1401 = vmatprep.mubr.bf16.mxu0 0
    %1402 = vmatmul.mubr.bf16.gmra.mrb[0].mxu0 %v1358
    %v1403 = vpop.f32.mrb[0].mxu0
    %v1404 = vadd.f32 %v172, %v1403
    %v1405 = vpop.f32.mrb[0].mxu0
    %v1406 = vpop.f32.mrb[0].mxu0
    %v1407 = vadd.f32 %v173, %v1406
    %v1408 = vpop.f32.mrb[0].mxu0
    %1409 = vmatprep.mubr.bf16.mxu0 0
    %1410 = vmatmul.mubr.bf16.gmra.mrb[0].mxu0 %v1361
    %v1411 = vpop.f32.mrb[0].mxu0
    %v1412 = vadd.f32 %v174, %v1411
    %v1413 = vpop.f32.mrb[0].mxu0
    %v1414 = vpop.f32.mrb[0].mxu0
    %v1415 = vpop.f32.mrb[0].mxu0
    %1416 = vdwg.mxu0
    %v1417 = vsel %vm712, %v1404, -inf
    %1418 = vmax.xlane.f32.xlu0 %v1417
    %v1419 = vpop.xlane.xlu0 %1418
    %v1420 = vsel %vm712, %v1407, -inf
    %1421 = vmax.xlane.f32.xlu0 %v1420
    %v1422 = vpop.xlane.xlu0 %1421
    %v1423 = vsel %vm712, %v1412, -inf
    %1424 = vmax.xlane.f32.xlu0 %v1423
    %v1425 = vpop.xlane.xlu0 %1424
    %v1426 = vsub.f32 %v1404, %v1419
    %v1427 = vsub.f32 %v1407, %v1422
    %v1428 = vsub.f32 %v1412, %v1425
    %v1429 = vmul.f32 %v1426, 1.442695
    %v1430 = vpow.pop %v1429
    %v1431 = vmul.f32 %v1427, 1.442695
    %v1432 = vpow.pop %v1431
    %v1433 = vmul.f32 %v1428, 1.442695
    %v1434 = vpow.pop %v1433
    %v1435 = vsel %vm712, %v1430, 0.0
    %1436 = vadd.xlane.f32.xlu0 %v1435
    %v1437 = vpop.xlane.xlu0 %1436
    %v1438 = vsel %vm712, %v1432, 0.0
    %1439 = vadd.xlane.f32.xlu0 %v1438
    %v1440 = vpop.xlane.xlu0 %1439
    %v1441 = vsel %vm712, %v1434, 0.0
    %1442 = vadd.xlane.f32.xlu0 %v1441
    %v1443 = vpop.xlane.xlu0 %1442
    %v1444 = vrcp.pop %v1437
    %v1445 = vrcp.pop %v1440
    %v1446 = vrcp.pop %v1443
    %v1447 = vmul.f32 %v1430, %v1444
    %v1448 = vmul.f32 %v1432, %v1445
    %v1449 = vmul.f32 %v1434, %v1446
    %v1450 = vpack.c.bf16 %v1448, %v1447
    %v1451 = vpack.c.bf16 %v1449, %v1449
    %1452 = vrot.lane.b32.xlu0 %v649, 32
    %v1453 = vpop.permute.xlu0 %1452
    %1454 = vrot.lane.b32.xlu0 %v650, 32
    %v1455 = vpop.permute.xlu0 %1454
    %v1458 = vsel %vm712, %v1450, 0
    %v1461 = vsel %vm712, %v1451, 0
    %v1464 = vsel %vm754, %v1455, 0
    %1466 = vmatprep.subr.bf16.mxu0 0
    %1467 = vmatpush1.bf16.msra.mxu0 %v1453
    %1468 = vmatprep.subr.bf16.mxu0 0
    %1469 = vmatpush1.bf16.msra.mxu0 %v1464
    %1470 = vmatprep.subr.bf16.mxu0 0
    %1471 = vmatpush1.bf16.msra.mxu0 0
    %1472 = vmatprep.subr.bf16.mxu0 0
    %1473 = vmatpush1.bf16.msra.mxu0 0
    %1474 = vmatprep.subr.bf16.mxu0 0
    %1475 = vmatpush1.bf16.msra.mxu0 0
    %1476 = vmatprep.subr.bf16.mxu0 0
    %1477 = vmatpush1.bf16.msra.mxu0 0
    %1478 = vmatprep.subr.bf16.mxu0 0
    %1479 = vmatpush1.bf16.msra.mxu0 0
    %1480 = vmatprep.subr.bf16.mxu0 0
    %1481 = vmatpush1.bf16.msra.mxu0 0
    %1482 = vmatprep.subr.bf16.mxu0 0
    %1483 = vmatpush1.bf16.msra.mxu0 0
    %1484 = vmatprep.subr.bf16.mxu0 0
    %1485 = vmatpush1.bf16.msra.mxu0 0
    %1486 = vmatprep.subr.bf16.mxu0 0
    %1487 = vmatpush1.bf16.msra.mxu0 0
    %1488 = vmatprep.subr.bf16.mxu0 0
    %1489 = vmatpush1.bf16.msra.mxu0 0
    %1490 = vmatprep.subr.bf16.mxu0 0
    %1491 = vmatpush1.bf16.msra.mxu0 0
    %1492 = vmatprep.subr.bf16.mxu0 0
    %1493 = vmatpush1.bf16.msra.mxu0 0
    %1494 = vmatprep.subr.bf16.mxu0 0
    %1495 = vmatpush1.bf16.msra.mxu0 0
    %1496 = vmatprep.subr.bf16.mxu0 0
    %1497 = vmatpush1.bf16.msra.mxu0 0
    %1498 = vmatprep.mubr.bf16.mxu0 0
    %1499 = vmatmul.mubr.bf16.gmra.mrb[0].mxu0 %v1458
    %v1500 = vpop.f32.mrb[0].mxu0
    %v1501 = vadd.f32 0.0, %v1500
    %v1502 = vpop.f32.mrb[0].mxu0
    %v1503 = vpop.f32.mrb[0].mxu0
    %v1504 = vadd.f32 0.0, %v1503
    %v1505 = vpop.f32.mrb[0].mxu0
    %1506 = vmatprep.mubr.bf16.mxu0 0
    %1507 = vmatmul.mubr.bf16.gmra.mrb[0].mxu0 %v1461
    %v1508 = vpop.f32.mrb[0].mxu0
    %v1509 = vadd.f32 0.0, %v1508
    %v1510 = vpop.f32.mrb[0].mxu0
    %v1511 = vpop.f32.mrb[0].mxu0
    %v1512 = vpop.f32.mrb[0].mxu0
    %1513 = vdwg.mxu0
    %v1514 = vpack.c.bf16 %v1504, %v1501
    %v1515 = vpack.c.bf16 %v1509, %v1509
    %v1520 = vunpack.c.l.b16 %v344
    %v1521 = vunpack.c.l.b16 %v345
    %v1522 = vunpack.c.l.b16 %v346
    %v1523 = vunpack.c.l.b16 %v347
    %v1524 = vpack.c.b16 %v1521, %v1520
    %v1525 = vpack.c.b16 %v1523, %v1522
    %v1529 = vsel %vm651, %v1514, 0
    %v1532 = vsel %vm651, %v1515, 0
    %1534 = vmatprep.subr.bf16.mxu0 0
    %1535 = vmatpush1.bf16.msra.mxu0 %v1524
    %1536 = vmatprep.subr.bf16.mxu0 0
    %1537 = vmatpush1.bf16.msra.mxu0 %v1525
    %1538 = vmatprep.subr.bf16.mxu0 0
    %1539 = vmatpush1.bf16.msra.mxu0 0
    %1540 = vmatprep.subr.bf16.mxu0 0
    %1541 = vmatpush1.bf16.msra.mxu0 0
    %1542 = vmatprep.subr.bf16.mxu0 0
    %1543 = vmatpush1.bf16.msra.mxu0 0
    %1544 = vmatprep.subr.bf16.mxu0 0
    %1545 = vmatpush1.bf16.msra.mxu0 0
    %1546 = vmatprep.subr.bf16.mxu0 0
    %1547 = vmatpush1.bf16.msra.mxu0 0
    %1548 = vmatprep.subr.bf16.mxu0 0
    %1549 = vmatpush1.bf16.msra.mxu0 0
    %1550 = vmatprep.subr.bf16.mxu0 0
    %1551 = vmatpush1.bf16.msra.mxu0 0
    %1552 = vmatprep.subr.bf16.mxu0 0
    %1553 = vmatpush1.bf16.msra.mxu0 0
    %1554 = vmatprep.subr.bf16.mxu0 0
    %1555 = vmatpush1.bf16.msra.mxu0 0
    %1556 = vmatprep.subr.bf16.mxu0 0
    %1557 = vmatpush1.bf16.msra.mxu0 0
    %1558 = vmatprep.subr.bf16.mxu0 0
    %1559 = vmatpush1.bf16.msra.mxu0 0
    %1560 = vmatprep.subr.bf16.mxu0 0
    %1561 = vmatpush1.bf16.msra.mxu0 0
    %1562 = vmatprep.subr.bf16.mxu0 0
    %1563 = vmatpush1.bf16.msra.mxu0 0
    %1564 = vmatprep.subr.bf16.mxu0 0
    %1565 = vmatpush1.bf16.msra.mxu0 0
    %1566 = vmatprep.mubr.bf16.mxu0 0
    %1567 = vmatmul.mubr.bf16.gmra.mrb[0].mxu0 %v1529
    %v1568 = vpop.f32.mrb[0].mxu0
    %v1569 = vadd.f32 0.0, %v1568
    %v1570 = vpop.f32.mrb[0].mxu0
    %v1571 = vpop.f32.mrb[0].mxu0
    %v1572 = vadd.f32 0.0, %v1571
    %v1573 = vpop.f32.mrb[0].mxu0
    %1574 = vmatprep.mubr.bf16.mxu0 0
    %1575 = vmatmul.mubr.bf16.gmra.mrb[0].mxu0 %v1532
    %v1576 = vpop.f32.mrb[0].mxu0
    %v1577 = vadd.f32 0.0, %v1576
    %v1578 = vpop.f32.mrb[0].mxu0
    %v1579 = vpop.f32.mrb[0].mxu0
    %v1580 = vpop.f32.mrb[0].mxu0
    %1581 = vdwg.mxu0
    %v1582 = vadd.f32 %v1346, %v1569
    %v1583 = vadd.f32 %v1347, %v1572
    %v1584 = vadd.f32 %v1348, %v1577
    %v1586 = vlaneseq
    %v1587 = vshrl.u32 %v1586, 7
    %v1588 = vsub.s32 0, %v1587
    %v1589 = vrot.slane %v348, %v1588
    %v1591 = vadd.f32 %v1582, %v1589
    %v1592 = vadd.f32 %v1583, %v1589
    %v1593 = vadd.f32 %v1584, %v1589
    %v1594 = vadd.f32 %v286, %v1591
    %v1595 = vadd.f32 %v289, %v1592
    %v1596 = vadd.f32 %v294, %v1593
    %1597 = vadd.xlane.f32.xlu0 %v1594
    %v1598 = vpop.xlane.xlu0 %1597
    %1599 = vadd.xlane.f32.xlu0 %v1595
    %v1600 = vpop.xlane.xlu0 %1599
    %1601 = vadd.xlane.f32.xlu0 %v1596
    %v1602 = vpop.xlane.xlu0 %1601
    %v1603 = vrcp.pop 128.0
    %v1604 = vmul.f32 %v1598, %v1603
    %v1605 = vmul.f32 %v1600, %v1603
    %v1606 = vmul.f32 %v1602, %v1603
    %v1607 = vsub.f32 %v1594, %v1604
    %v1608 = vsub.f32 %v1595, %v1605
    %v1609 = vsub.f32 %v1596, %v1606
    %v1610 = vmul.f32 %v1607, %v1607
    %v1611 = vmul.f32 %v1608, %v1608
    %v1612 = vmul.f32 %v1609, %v1609
    %1613 = vadd.xlane.f32.xlu0 %v1610
    %v1614 = vpop.xlane.xlu0 %1613
    %1615 = vadd.xlane.f32.xlu0 %v1611
    %v1616 = vpop.xlane.xlu0 %1615
    %1617 = vadd.xlane.f32.xlu0 %v1612
    %v1618 = vpop.xlane.xlu0 %1617
    %v1619 = vmul.f32 %v1614, %v1603
    %v1620 = vmul.f32 %v1616, %v1603
    %v1621 = vmul.f32 %v1618, %v1603
    %v1622 = vadd.f32 %v1619, 1e-05
    %v1623 = vadd.f32 %v1620, 1e-05
    %v1624 = vadd.f32 %v1621, 1e-05
    %v1625 = vrsqrt.pop %v1622
    %v1626 = vrsqrt.pop %v1623
    %v1627 = vrsqrt.pop %v1624
    %v1628 = vmul.f32 %v1607, %v1625
    %v1629 = vmul.f32 %v1608, %v1626
    %v1630 = vmul.f32 %v1609, %v1627
    %v1631 = vlaneseq
    %v1632 = vshrl.u32 %v1631, 7
    %v1633 = vsub.s32 0, %v1632
    %v1634 = vrot.slane %v399, %v1633
    %v1635 = vmul.f32 %v1628, %v1634
    %v1636 = vmul.f32 %v1629, %v1634
    %v1637 = vmul.f32 %v1630, %v1634
    %v1638 = vlaneseq
    %v1639 = vshrl.u32 %v1638, 7
    %v1640 = vsub.s32 1, %v1639
    %v1641 = vrot.slane %v399, %v1640
    %v1642 = vadd.f32 %v1635, %v1641
    %v1643 = vadd.f32 %v1636, %v1641
    %v1644 = vadd.f32 %v1637, %v1641
    %v1645 = vpack.c.bf16 %v1643, %v1642
    %v1646 = vpack.c.bf16 %v1644, %v1644
    %v1648 = vlaneseq
    %v1649 = vshrl.u32 %v1648, 7
    %v1650 = vsub.s32 0, %v1649
    %v1651 = vrot.slane %v365, %v1650
    %v1652 = vlaneseq
    %v1653 = vshrl.u32 %v1652, 7
    %v1654 = vsub.s32 1, %v1653
    %v1655 = vrot.slane %v365, %v1654
    %v1674 = vunpack.c.l.b16 %v349
    %v1675 = vunpack.c.h.b16 %v349
    %v1676 = vunpack.c.l.b16 %v350
    %v1677 = vunpack.c.h.b16 %v350
    %v1678 = vunpack.c.l.b16 %v351
    %v1679 = vunpack.c.h.b16 %v351
    %v1680 = vunpack.c.l.b16 %v352
    %v1681 = vunpack.c.h.b16 %v352
    %v1682 = vunpack.c.l.b16 %v353
    %v1683 = vunpack.c.h.b16 %v353
    %v1684 = vunpack.c.l.b16 %v354
    %v1685 = vunpack.c.h.b16 %v354
    %v1686 = vunpack.c.l.b16 %v355
    %v1687 = vunpack.c.h.b16 %v355
    %v1688 = vunpack.c.l.b16 %v356
    %v1689 = vunpack.c.h.b16 %v356
    %v1690 = vunpack.c.l.b16 %v357
    %v1691 = vunpack.c.h.b16 %v357
    %v1692 = vunpack.c.l.b16 %v358
    %v1693 = vunpack.c.h.b16 %v358
    %v1694 = vunpack.c.l.b16 %v359
    %v1695 = vunpack.c.h.b16 %v359
    %v1696 = vunpack.c.l.b16 %v360
    %v1697 = vunpack.c.h.b16 %v360
    %v1698 = vunpack.c.l.b16 %v361
    %v1699 = vunpack.c.h.b16 %v361
    %v1700 = vunpack.c.l.b16 %v362
    %v1701 = vunpack.c.h.b16 %v362
    %v1702 = vunpack.c.l.b16 %v363
    %v1703 = vunpack.c.h.b16 %v363
    %v1704 = vunpack.c.l.b16 %v364
    %v1705 = vunpack.c.h.b16 %v364
    %v1706 = vpack.c.b16 %v1676, %v1674
    %v1707 = vpack.c.b16 %v1677, %v1675
    %v1708 = vpack.c.b16 %v1680, %v1678
    %v1709 = vpack.c.b16 %v1681, %v1679
    %v1710 = vpack.c.b16 %v1684, %v1682
    %v1711 = vpack.c.b16 %v1685, %v1683
    %v1712 = vpack.c.b16 %v1688, %v1686
    %v1713 = vpack.c.b16 %v1689, %v1687
    %v1714 = vpack.c.b16 %v1692, %v1690
    %v1715 = vpack.c.b16 %v1693, %v1691
    %v1716 = vpack.c.b16 %v1696, %v1694
    %v1717 = vpack.c.b16 %v1697, %v1695
    %v1718 = vpack.c.b16 %v1700, %v1698
    %v1719 = vpack.c.b16 %v1701, %v1699
    %v1720 = vpack.c.b16 %v1704, %v1702
    %v1721 = vpack.c.b16 %v1705, %v1703
    %1738 = vmatprep.subr.bf16.mxu0 %v1707
    %1739 = vmatpush1.bf16.msra.mxu0 %v1706
    %1740 = vmatprep.subr.bf16.mxu0 %v1709
    %1741 = vmatpush1.bf16.msra.mxu0 %v1708
    %1742 = vmatprep.subr.bf16.mxu0 %v1711
    %1743 = vmatpush1.bf16.msra.mxu0 %v1710
    %1744 = vmatprep.subr.bf16.mxu0 %v1713
    %1745 = vmatpush1.bf16.msra.mxu0 %v1712
    %1746 = vmatprep.subr.bf16.mxu0 %v1715
    %1747 = vmatpush1.bf16.msra.mxu0 %v1714
    %1748 = vmatprep.subr.bf16.mxu0 %v1717
    %1749 = vmatpush1.bf16.msra.mxu0 %v1716
    %1750 = vmatprep.subr.bf16.mxu0 %v1719
    %1751 = vmatpush1.bf16.msra.mxu0 %v1718
    %1752 = vmatprep.subr.bf16.mxu0 %v1721
    %1753 = vmatpush1.bf16.msra.mxu0 %v1720
    %1754 = vmatprep.subr.bf16.mxu0 0
    %1755 = vmatpush1.bf16.msra.mxu0 0
    %1756 = vmatprep.subr.bf16.mxu0 0
    %1757 = vmatpush1.bf16.msra.mxu0 0
    %1758 = vmatprep.subr.bf16.mxu0 0
    %1759 = vmatpush1.bf16.msra.mxu0 0
    %1760 = vmatprep.subr.bf16.mxu0 0
    %1761 = vmatpush1.bf16.msra.mxu0 0
    %1762 = vmatprep.subr.bf16.mxu0 0
    %1763 = vmatpush1.bf16.msra.mxu0 0
    %1764 = vmatprep.subr.bf16.mxu0 0
    %1765 = vmatpush1.bf16.msra.mxu0 0
    %1766 = vmatprep.subr.bf16.mxu0 0
    %1767 = vmatpush1.bf16.msra.mxu0 0
    %1768 = vmatprep.subr.bf16.mxu0 0
    %1769 = vmatpush1.bf16.msra.mxu0 0
    %1770 = vmatprep.mubr.bf16.mxu0 0
    %1771 = vmatmul.mubr.bf16.gmra.mrb[0].mxu0 %v1645
    %v1772 = vpop.f32.mrb[0].mxu0
    %v1773 = vadd.f32 %v1651, %v1772
    %v1774 = vpop.f32.mrb[0].mxu0
    %v1775 = vadd.f32 %v1655, %v1774
    %v1776 = vpop.f32.mrb[0].mxu0
    %v1777 = vadd.f32 %v1651, %v1776
    %v1778 = vpop.f32.mrb[0].mxu0
    %v1779 = vadd.f32 %v1655, %v1778
    %1780 = vmatprep.mubr.bf16.mxu0 0
    %1781 = vmatmul.mubr.bf16.gmra.mrb[0].mxu0 %v1646
    %v1782 = vpop.f32.mrb[0].mxu0
    %v1783 = vadd.f32 %v1651, %v1782
    %v1784 = vpop.f32.mrb[0].mxu0
    %v1785 = vadd.f32 %v1655, %v1784
    %v1786 = vpop.f32.mrb[0].mxu0
    %v1787 = vpop.f32.mrb[0].mxu0
    %1788 = vdwg.mxu0
    %v1789 = vmul.f32 %v1773, 0.5
    %v1790 = vmul.f32 %v1775, 0.5
    %v1791 = vmul.f32 %v1777, 0.5
    %v1792 = vmul.f32 %v1779, 0.5
    %v1793 = vmul.f32 %v1783, 0.5
    %v1794 = vmul.f32 %v1785, 0.5
    %v1795 = vmul.f32 %v1773, 0.70710677
    %v1796 = vmul.f32 %v1775, 0.70710677
    %v1797 = vmul.f32 %v1777, 0.70710677
    %v1798 = vmul.f32 %v1779, 0.70710677
    %v1799 = vmul.f32 %v1783, 0.70710677
    %v1800 = vmul.f32 %v1785, 0.70710677
    %v1801 = verf.f32.pop %v1795
    %v1802 = verf.f32.pop %v1796
    %v1803 = verf.f32.pop %v1797
    %v1804 = verf.f32.pop %v1798
    %v1805 = verf.f32.pop %v1799
    %v1806 = verf.f32.pop %v1800
    %v1807 = vadd.f32 %v1801, 1.0
    %v1808 = vadd.f32 %v1802, 1.0
    %v1809 = vadd.f32 %v1803, 1.0
    %v1810 = vadd.f32 %v1804, 1.0
    %v1811 = vadd.f32 %v1805, 1.0
    %v1812 = vadd.f32 %v1806, 1.0
    %v1813 = vmul.f32 %v1789, %v1807
    %v1814 = vmul.f32 %v1790, %v1808
    %v1815 = vmul.f32 %v1791, %v1809
    %v1816 = vmul.f32 %v1792, %v1810
    %v1817 = vmul.f32 %v1793, %v1811
    %v1818 = vmul.f32 %v1794, %v1812
    %v1819 = vpack.c.bf16 %v1815, %v1813
    %v1820 = vpack.c.bf16 %v1816, %v1814
    %v1821 = vpack.c.bf16 %v1817, %v1817
    %v1822 = vpack.c.bf16 %v1818, %v1818
    %v1824 = vlaneseq
    %v1825 = vshrl.u32 %v1824, 7
    %v1826 = vsub.s32 0, %v1825
    %v1827 = vrot.slane %v398, %v1826
    %v1861 = vunpack.c.l.b16 %v366
    %v1862 = vunpack.c.l.b16 %v367
    %v1863 = vunpack.c.l.b16 %v368
    %v1864 = vunpack.c.l.b16 %v369
    %v1865 = vunpack.c.l.b16 %v370
    %v1866 = vunpack.c.l.b16 %v371
    %v1867 = vunpack.c.l.b16 %v372
    %v1868 = vunpack.c.l.b16 %v373
    %v1869 = vunpack.c.l.b16 %v374
    %v1870 = vunpack.c.l.b16 %v375
    %v1871 = vunpack.c.l.b16 %v376
    %v1872 = vunpack.c.l.b16 %v377
    %v1873 = vunpack.c.l.b16 %v378
    %v1874 = vunpack.c.l.b16 %v379
    %v1875 = vunpack.c.l.b16 %v380
    %v1876 = vunpack.c.l.b16 %v381
    %v1877 = vunpack.c.l.b16 %v382
    %v1878 = vunpack.c.l.b16 %v383
    %v1879 = vunpack.c.l.b16 %v384
    %v1880 = vunpack.c.l.b16 %v385
    %v1881 = vunpack.c.l.b16 %v386
    %v1882 = vunpack.c.l.b16 %v387
    %v1883 = vunpack.c.l.b16 %v388
    %v1884 = vunpack.c.l.b16 %v389
    %v1885 = vunpack.c.l.b16 %v390
    %v1886 = vunpack.c.l.b16 %v391
    %v1887 = vunpack.c.l.b16 %v392
    %v1888 = vunpack.c.l.b16 %v393
    %v1889 = vunpack.c.l.b16 %v394
    %v1890 = vunpack.c.l.b16 %v395
    %v1891 = vunpack.c.l.b16 %v396
    %v1892 = vunpack.c.l.b16 %v397
    %v1893 = vpack.c.b16 %v1862, %v1861
    %v1894 = vpack.c.b16 %v1864, %v1863
    %v1895 = vpack.c.b16 %v1866, %v1865
    %v1896 = vpack.c.b16 %v1868, %v1867
    %v1897 = vpack.c.b16 %v1870, %v1869
    %v1898 = vpack.c.b16 %v1872, %v1871
    %v1899 = vpack.c.b16 %v1874, %v1873
    %v1900 = vpack.c.b16 %v1876, %v1875
    %v1901 = vpack.c.b16 %v1878, %v1877
    %v1902 = vpack.c.b16 %v1880, %v1879
    %v1903 = vpack.c.b16 %v1882, %v1881
    %v1904 = vpack.c.b16 %v1884, %v1883
    %v1905 = vpack.c.b16 %v1886, %v1885
    %v1906 = vpack.c.b16 %v1888, %v1887
    %v1907 = vpack.c.b16 %v1890, %v1889
    %v1908 = vpack.c.b16 %v1892, %v1891
    %1925 = vmatprep.subr.bf16.mxu0 0
    %1926 = vmatpush1.bf16.msra.mxu0 %v1893
    %1927 = vmatprep.subr.bf16.mxu0 0
    %1928 = vmatpush1.bf16.msra.mxu0 %v1894
    %1929 = vmatprep.subr.bf16.mxu0 0
    %1930 = vmatpush1.bf16.msra.mxu0 %v1895
    %1931 = vmatprep.subr.bf16.mxu0 0
    %1932 = vmatpush1.bf16.msra.mxu0 %v1896
    %1933 = vmatprep.subr.bf16.mxu0 0
    %1934 = vmatpush1.bf16.msra.mxu0 %v1897
    %1935 = vmatprep.subr.bf16.mxu0 0
    %1936 = vmatpush1.bf16.msra.mxu0 %v1898
    %1937 = vmatprep.subr.bf16.mxu0 0
    %1938 = vmatpush1.bf16.msra.mxu0 %v1899
    %1939 = vmatprep.subr.bf16.mxu0 0
    %1940 = vmatpush1.bf16.msra.mxu0 %v1900
    %1941 = vmatprep.subr.bf16.mxu0 0
    %1942 = vmatpush1.bf16.msra.mxu0 %v1901
    %1943 = vmatprep.subr.bf16.mxu0 0
    %1944 = vmatpush1.bf16.msra.mxu0 %v1902
    %1945 = vmatprep.subr.bf16.mxu0 0
    %1946 = vmatpush1.bf16.msra.mxu0 %v1903
    %1947 = vmatprep.subr.bf16.mxu0 0
    %1948 = vmatpush1.bf16.msra.mxu0 %v1904
    %1949 = vmatprep.subr.bf16.mxu0 0
    %1950 = vmatpush1.bf16.msra.mxu0 %v1905
    %1951 = vmatprep.subr.bf16.mxu0 0
    %1952 = vmatpush1.bf16.msra.mxu0 %v1906
    %1953 = vmatprep.subr.bf16.mxu0 0
    %1954 = vmatpush1.bf16.msra.mxu0 %v1907
    %1955 = vmatprep.subr.bf16.mxu0 0
    %1956 = vmatpush1.bf16.msra.mxu0 %v1908
    %1957 = vmatprep.mubr.bf16.mxu0 %v1820
    %1958 = vmatmul.mubr.bf16.gmra.mrb[0].mxu0 %v1819
    %v1959 = vpop.f32.mrb[0].mxu0
    %v1960 = vadd.f32 %v1827, %v1959
    %v1961 = vpop.f32.mrb[0].mxu0
    %v1962 = vpop.f32.mrb[0].mxu0
    %v1963 = vadd.f32 %v1827, %v1962
    %v1964 = vpop.f32.mrb[0].mxu0
    %1965 = vmatprep.mubr.bf16.mxu0 %v1822
    %1966 = vmatmul.mubr.bf16.gmra.mrb[0].mxu0 %v1821
    %v1967 = vpop.f32.mrb[0].mxu0
    %v1968 = vadd.f32 %v1827, %v1967
    %v1969 = vpop.f32.mrb[0].mxu0
    %v1970 = vpop.f32.mrb[0].mxu0
    %v1971 = vpop.f32.mrb[0].mxu0
    %1972 = vdwg.mxu0
    %v1973 = vadd.f32 %v1642, %v1960
    %v1974 = vadd.f32 %v1643, %v1963
    %v1975 = vadd.f32 %v1644, %v1968
    %1976 = vadd.xlane.f32.xlu0 %v1973
    %v1977 = vpop.xlane.xlu0 %1976
    %1978 = vadd.xlane.f32.xlu0 %v1974
    %v1979 = vpop.xlane.xlu0 %1978
    %1980 = vadd.xlane.f32.xlu0 %v1975
    %v1981 = vpop.xlane.xlu0 %1980
    %v1982 = vmul.f32 %v1977, %v1603
    %v1983 = vmul.f32 %v1979, %v1603
    %v1984 = vmul.f32 %v1981, %v1603
    %v1985 = vsub.f32 %v1973, %v1982
    %v1986 = vsub.f32 %v1974, %v1983
    %v1987 = vsub.f32 %v1975, %v1984
    %v1988 = vmul.f32 %v1985, %v1985
    %v1989 = vmul.f32 %v1986, %v1986
    %v1990 = vmul.f32 %v1987, %v1987
    %1991 = vadd.xlane.f32.xlu0 %v1988
    %v1992 = vpop.xlane.xlu0 %1991
    %1993 = vadd.xlane.f32.xlu0 %v1989
    %v1994 = vpop.xlane.xlu0 %1993
    %1995 = vadd.xlane.f32.xlu0 %v1990
    %v1996 = vpop.xlane.xlu0 %1995
    %v1997 = vmul.f32 %v1992, %v1603
    %v1998 = vmul.f32 %v1994, %v1603
    %v1999 = vmul.f32 %v1996, %v1603
    %v2000 = vadd.f32 %v1997, 1e-05
    %v2001 = vadd.f32 %v1998, 1e-05
    %v2002 = vadd.f32 %v1999, 1e-05
    %v2003 = vrsqrt.pop %v2000
    %v2004 = vrsqrt.pop %v2001
    %v2005 = vrsqrt.pop %v2002
    %v2006 = vmul.f32 %v1985, %v2003
    %v2007 = vmul.f32 %v1986, %v2004
    %v2008 = vmul.f32 %v1987, %v2005
    %v2009 = vlaneseq
    %v2010 = vshrl.u32 %v2009, 7
    %v2011 = vsub.s32 2, %v2010
    %v2012 = vrot.slane %v399, %v2011
    %v2013 = vmul.f32 %v2006, %v2012
    %v2014 = vmul.f32 %v2007, %v2012
    %v2015 = vmul.f32 %v2008, %v2012
    %v2016 = vlaneseq
    %v2017 = vshrl.u32 %v2016, 7
    %v2018 = vsub.s32 3, %v2017
    %v2019 = vrot.slane %v399, %v2018
    %v2020 = vadd.f32 %v2013, %v2019
    %v2021 = vadd.f32 %v2014, %v2019
    %v2022 = vadd.f32 %v2015, %v2019
    %s2023 = scalar_lea.vmem [#allocation10], 192
    %v2024 = vld [vmem:[%s2023] sm:$0xff]
    %v2025 = vld [vmem:[%s2023 + $0x8] sm:$0xf]
    %v2026 = vld [vmem:[%s2023 + $0xc] sm:$0xff]
    %v2027 = vld [vmem:[%s2023 + $0x14] sm:$0xf]
    %v2028 = vld [vmem:[%s2023 + $0x18] sm:$0xff]
    %v2029 = vld [vmem:[%s2023 + $0x20] sm:$0xf]
    %v2030 = vld [vmem:[%s2023 + $0x24] sm:$0xff]
    %v2031 = vld [vmem:[%s2023 + $0x2c] sm:$0xf]
    %v2032 = vld [vmem:[%s2023 + $0x30] sm:$0xff]
    %v2033 = vld [vmem:[%s2023 + $0x38] sm:$0xf]
    %v2034 = vld [vmem:[%s2023 + $0x3c] sm:$0xff]
    %v2035 = vld [vmem:[%s2023 + $0x44] sm:$0xf]
    %v2036 = vld [vmem:[%s2023 + $0x48] sm:$0xff]
    %v2037 = vld [vmem:[%s2023 + $0x50] sm:$0xf]
    %v2038 = vld [vmem:[%s2023 + $0x54] sm:$0xff]
    %v2039 = vld [vmem:[%s2023 + $0x5c] sm:$0xf]
    %v2040 = vld [vmem:[%s2023 + $0x60] sm:$0xff]
    %v2041 = vld [vmem:[%s2023 + $0x68] sm:$0xf]
    %v2042 = vld [vmem:[%s2023 + $0x6c] sm:$0xff]
    %v2043 = vld [vmem:[%s2023 + $0x74] sm:$0xf]
    %v2044 = vld [vmem:[%s2023 + $0x78] sm:$0xff]
    %v2045 = vld [vmem:[%s2023 + $0x80] sm:$0xf]
    %v2046 = vld [vmem:[%s2023 + $0x84] sm:$0xff]
    %v2047 = vld [vmem:[%s2023 + $0x8c] sm:$0xf]
    %v2048 = vld [vmem:[%s2023 + $0x90] sm:$0xff]
    %v2049 = vld [vmem:[%s2023 + $0x98] sm:$0xf]
    %v2050 = vld [vmem:[%s2023 + $0x9c] sm:$0xff]
    %v2051 = vld [vmem:[%s2023 + $0xa4] sm:$0xf]
    %v2052 = vld [vmem:[%s2023 + $0xa8] sm:$0xff]
    %v2053 = vld [vmem:[%s2023 + $0xb0] sm:$0xf]
    %v2054 = vld [vmem:[%s2023 + $0xb4] sm:$0xff]
    %v2055 = vld [vmem:[%s2023 + $0xbc] sm:$0xf]
    %s2056 = scalar_lea.vmem %s5, 3
    %v2057 = vld [vmem:[%s2056] sm:$0x7]
    %s2058 = scalar_lea.vmem [#allocation11], 64
    %v2059 = vld [vmem:[%s2058] sm:$0xf]
    %v2060 = vld [vmem:[%s2058 + $0x4] sm:$0xf]
    %v2061 = vld [vmem:[%s2058 + $0x8] sm:$0xf]
    %v2062 = vld [vmem:[%s2058 + $0xc] sm:$0xf]
    %v2063 = vld [vmem:[%s2058 + $0x10] sm:$0xf]
    %v2064 = vld [vmem:[%s2058 + $0x14] sm:$0xf]
    %v2065 = vld [vmem:[%s2058 + $0x18] sm:$0xf]
    %v2066 = vld [vmem:[%s2058 + $0x1c] sm:$0xf]
    %v2067 = vld [vmem:[%s2058 + $0x20] sm:$0xf]
    %v2068 = vld [vmem:[%s2058 + $0x24] sm:$0xf]
    %v2069 = vld [vmem:[%s2058 + $0x28] sm:$0xf]
    %v2070 = vld [vmem:[%s2058 + $0x2c] sm:$0xf]
    %v2071 = vld [vmem:[%s2058 + $0x30] sm:$0xf]
    %v2072 = vld [vmem:[%s2058 + $0x34] sm:$0xf]
    %v2073 = vld [vmem:[%s2058 + $0x38] sm:$0xf]
    %v2074 = vld [vmem:[%s2058 + $0x3c] sm:$0xf]
    %s2075 = scalar_lea.vmem %s7, 1
    %v2076 = vld [vmem:[%s2075] sm:$0x1]
    %s2077 = scalar_lea.vmem [#allocation13], 128
    %v2078 = vld [vmem:[%s2077] sm:$0xff]
    %v2079 = vld [vmem:[%s2077 + $0x8] sm:$0xff]
    %v2080 = vld [vmem:[%s2077 + $0x10] sm:$0xff]
    %v2081 = vld [vmem:[%s2077 + $0x18] sm:$0xff]
    %v2082 = vld [vmem:[%s2077 + $0x20] sm:$0xff]
    %v2083 = vld [vmem:[%s2077 + $0x28] sm:$0xff]
    %v2084 = vld [vmem:[%s2077 + $0x30] sm:$0xff]
    %v2085 = vld [vmem:[%s2077 + $0x38] sm:$0xff]
    %v2086 = vld [vmem:[%s2077 + $0x40] sm:$0xff]
    %v2087 = vld [vmem:[%s2077 + $0x48] sm:$0xff]
    %v2088 = vld [vmem:[%s2077 + $0x50] sm:$0xff]
    %v2089 = vld [vmem:[%s2077 + $0x58] sm:$0xff]
    %v2090 = vld [vmem:[%s2077 + $0x60] sm:$0xff]
    %v2091 = vld [vmem:[%s2077 + $0x68] sm:$0xff]
    %v2092 = vld [vmem:[%s2077 + $0x70] sm:$0xff]
    %v2093 = vld [vmem:[%s2077 + $0x78] sm:$0xff]
    %s2094 = scalar_lea.vmem %s9, 2
    %v2095 = vld [vmem:[%s2094] sm:$0x3]
    %s2096 = scalar_lea.vmem [#allocation14], 128
    %v2097 = vld [vmem:[%s2096] sm:$0xf]
    %v2098 = vld [vmem:[%s2096 + $0x4] sm:$0xf]
    %v2099 = vld [vmem:[%s2096 + $0x8] sm:$0xf]
    %v2100 = vld [vmem:[%s2096 + $0xc] sm:$0xf]
    %v2101 = vld [vmem:[%s2096 + $0x10] sm:$0xf]
    %v2102 = vld [vmem:[%s2096 + $0x14] sm:$0xf]
    %v2103 = vld [vmem:[%s2096 + $0x18] sm:$0xf]
    %v2104 = vld [vmem:[%s2096 + $0x1c] sm:$0xf]
    %v2105 = vld [vmem:[%s2096 + $0x20] sm:$0xf]
    %v2106 = vld [vmem:[%s2096 + $0x24] sm:$0xf]
    %v2107 = vld [vmem:[%s2096 + $0x28] sm:$0xf]
    %v2108 = vld [vmem:[%s2096 + $0x2c] sm:$0xf]
    %v2109 = vld [vmem:[%s2096 + $0x30] sm:$0xf]
    %v2110 = vld [vmem:[%s2096 + $0x34] sm:$0xf]
    %v2111 = vld [vmem:[%s2096 + $0x38] sm:$0xf]
    %v2112 = vld [vmem:[%s2096 + $0x3c] sm:$0xf]
    %v2113 = vld [vmem:[%s2096 + $0x40] sm:$0xf]
    %v2114 = vld [vmem:[%s2096 + $0x44] sm:$0xf]
    %v2115 = vld [vmem:[%s2096 + $0x48] sm:$0xf]
    %v2116 = vld [vmem:[%s2096 + $0x4c] sm:$0xf]
    %v2117 = vld [vmem:[%s2096 + $0x50] sm:$0xf]
    %v2118 = vld [vmem:[%s2096 + $0x54] sm:$0xf]
    %v2119 = vld [vmem:[%s2096 + $0x58] sm:$0xf]
    %v2120 = vld [vmem:[%s2096 + $0x5c] sm:$0xf]
    %v2121 = vld [vmem:[%s2096 + $0x60] sm:$0xf]
    %v2122 = vld [vmem:[%s2096 + $0x64] sm:$0xf]
    %v2123 = vld [vmem:[%s2096 + $0x68] sm:$0xf]
    %v2124 = vld [vmem:[%s2096 + $0x6c] sm:$0xf]
    %v2125 = vld [vmem:[%s2096 + $0x70] sm:$0xf]
    %v2126 = vld [vmem:[%s2096 + $0x74] sm:$0xf]
    %v2127 = vld [vmem:[%s2096 + $0x78] sm:$0xf]
    %v2128 = vld [vmem:[%s2096 + $0x7c] sm:$0xf]
    %s2129 = scalar_lea.vmem %s11, 1
    %v2130 = vld [vmem:[%s2129] sm:$0x1]
    %s2131 = scalar_lea.vmem %s12, 4
    %v2132 = vld [vmem:[%s2131] sm:$0xf]
    %v2133 = vpack.c.bf16 %v2021, %v2020
    %v2134 = vpack.c.bf16 %v2022, %v2022
    %v2136 = vlaneseq
    %v2137 = vshrl.u32 %v2136, 7
    %v2138 = vsub.s32 0, %v2137
    %v2139 = vrot.slane %v2057, %v2138
    %v2140 = vlaneseq
    %v2141 = vshrl.u32 %v2140, 7
    %v2142 = vsub.s32 1, %v2141
    %v2143 = vrot.slane %v2057, %v2142
    %v2144 = vlaneseq
    %v2145 = vshrl.u32 %v2144, 7
    %v2146 = vsub.s32 2, %v2145
    %v2147 = vrot.slane %v2057, %v2146
    %v2183 = vunpack.c.l.b16 %v2024
    %v2184 = vunpack.c.h.b16 %v2024
    %v2185 = vunpack.c.l.b16 %v2025
    %v2186 = vunpack.c.l.b16 %v2026
    %v2187 = vunpack.c.h.b16 %v2026
    %v2188 = vunpack.c.l.b16 %v2027
    %v2189 = vunpack.c.l.b16 %v2028
    %v2190 = vunpack.c.h.b16 %v2028
    %v2191 = vunpack.c.l.b16 %v2029
    %v2192 = vunpack.c.l.b16 %v2030
    %v2193 = vunpack.c.h.b16 %v2030
    %v2194 = vunpack.c.l.b16 %v2031
    %v2195 = vunpack.c.l.b16 %v2032
    %v2196 = vunpack.c.h.b16 %v2032
    %v2197 = vunpack.c.l.b16 %v2033
    %v2198 = vunpack.c.l.b16 %v2034
    %v2199 = vunpack.c.h.b16 %v2034
    %v2200 = vunpack.c.l.b16 %v2035
    %v2201 = vunpack.c.l.b16 %v2036
    %v2202 = vunpack.c.h.b16 %v2036
    %v2203 = vunpack.c.l.b16 %v2037
    %v2204 = vunpack.c.l.b16 %v2038
    %v2205 = vunpack.c.h.b16 %v2038
    %v2206 = vunpack.c.l.b16 %v2039
    %v2207 = vunpack.c.l.b16 %v2040
    %v2208 = vunpack.c.h.b16 %v2040
    %v2209 = vunpack.c.l.b16 %v2041
    %v2210 = vunpack.c.l.b16 %v2042
    %v2211 = vunpack.c.h.b16 %v2042
    %v2212 = vunpack.c.l.b16 %v2043
    %v2213 = vunpack.c.l.b16 %v2044
    %v2214 = vunpack.c.h.b16 %v2044
    %v2215 = vunpack.c.l.b16 %v2045
    %v2216 = vunpack.c.l.b16 %v2046
    %v2217 = vunpack.c.h.b16 %v2046
    %v2218 = vunpack.c.l.b16 %v2047
    %v2219 = vunpack.c.l.b16 %v2048
    %v2220 = vunpack.c.h.b16 %v2048
    %v2221 = vunpack.c.l.b16 %v2049
    %v2222 = vunpack.c.l.b16 %v2050
    %v2223 = vunpack.c.h.b16 %v2050
    %v2224 = vunpack.c.l.b16 %v2051
    %v2225 = vunpack.c.l.b16 %v2052
    %v2226 = vunpack.c.h.b16 %v2052
    %v2227 = vunpack.c.l.b16 %v2053
    %v2228 = vunpack.c.l.b16 %v2054
    %v2229 = vunpack.c.h.b16 %v2054
    %v2230 = vunpack.c.l.b16 %v2055
    %v2231 = vpack.c.b16 %v2186, %v2183
    %v2232 = vpack.c.b16 %v2187, %v2184
    %v2233 = vpack.c.b16 %v2188, %v2185
    %v2234 = vpack.c.b16 %v2192, %v2189
    %v2235 = vpack.c.b16 %v2193, %v2190
    %v2236 = vpack.c.b16 %v2194, %v2191
    %v2237 = vpack.c.b16 %v2198, %v2195
    %v2238 = vpack.c.b16 %v2199, %v2196
    %v2239 = vpack.c.b16 %v2200, %v2197
    %v2240 = vpack.c.b16 %v2204, %v2201
    %v2241 = vpack.c.b16 %v2205, %v2202
    %v2242 = vpack.c.b16 %v2206, %v2203
    %v2243 = vpack.c.b16 %v2210, %v2207
    %v2244 = vpack.c.b16 %v2211, %v2208
    %v2245 = vpack.c.b16 %v2212, %v2209
    %v2246 = vpack.c.b16 %v2216, %v2213
    %v2247 = vpack.c.b16 %v2217, %v2214
    %v2248 = vpack.c.b16 %v2218, %v2215
    %v2249 = vpack.c.b16 %v2222, %v2219
    %v2250 = vpack.c.b16 %v2223, %v2220
    %v2251 = vpack.c.b16 %v2224, %v2221
    %v2252 = vpack.c.b16 %v2228, %v2225
    %v2253 = vpack.c.b16 %v2229, %v2226
    %v2254 = vpack.c.b16 %v2230, %v2227
    %2279 = vmatprep.subr.bf16.mxu0 %v2232
    %2280 = vmatpush1.bf16.msra.mxu0 %v2231
    %2281 = vmatprep.subr.bf16.mxu0 %v2235
    %2282 = vmatpush1.bf16.msra.mxu0 %v2234
    %2283 = vmatprep.subr.bf16.mxu0 %v2238
    %2284 = vmatpush1.bf16.msra.mxu0 %v2237
    %2285 = vmatprep.subr.bf16.mxu0 %v2241
    %2286 = vmatpush1.bf16.msra.mxu0 %v2240
    %2287 = vmatprep.subr.bf16.mxu0 %v2244
    %2288 = vmatpush1.bf16.msra.mxu0 %v2243
    %2289 = vmatprep.subr.bf16.mxu0 %v2247
    %2290 = vmatpush1.bf16.msra.mxu0 %v2246
    %2291 = vmatprep.subr.bf16.mxu0 %v2250
    %2292 = vmatpush1.bf16.msra.mxu0 %v2249
    %2293 = vmatprep.subr.bf16.mxu0 %v2253
    %2294 = vmatpush1.bf16.msra.mxu0 %v2252
    %2295 = vmatprep.subr.bf16.mxu0 0
    %2296 = vmatpush1.bf16.msra.mxu0 0
    %2297 = vmatprep.subr.bf16.mxu0 0
    %2298 = vmatpush1.bf16.msra.mxu0 0
    %2299 = vmatprep.subr.bf16.mxu0 0
    %2300 = vmatpush1.bf16.msra.mxu0 0
    %2301 = vmatprep.subr.bf16.mxu0 0
    %2302 = vmatpush1.bf16.msra.mxu0 0
    %2303 = vmatprep.subr.bf16.mxu0 0
    %2304 = vmatpush1.bf16.msra.mxu0 0
    %2305 = vmatprep.subr.bf16.mxu0 0
    %2306 = vmatpush1.bf16.msra.mxu0 0
    %2307 = vmatprep.subr.bf16.mxu0 0
    %2308 = vmatpush1.bf16.msra.mxu0 0
    %2309 = vmatprep.subr.bf16.mxu0 0
    %2310 = vmatpush1.bf16.msra.mxu0 0
    %2311 = vmatprep.mubr.bf16.mxu0 0
    %2312 = vmatmul.mubr.bf16.gmra.mrb[0].mxu0 %v2133
    %v2313 = vpop.f32.mrb[0].mxu0
    %v2314 = vadd.f32 %v2139, %v2313
    %v2315 = vpop.f32.mrb[0].mxu0
    %v2316 = vadd.f32 %v2143, %v2315
    %v2317 = vpop.f32.mrb[0].mxu0
    %v2318 = vadd.f32 %v2139, %v2317
    %v2319 = vpop.f32.mrb[0].mxu0
    %v2320 = vadd.f32 %v2143, %v2319
    %2321 = vmatprep.mubr.bf16.mxu0 0
    %2322 = vmatmul.mubr.bf16.gmra.mrb[0].mxu0 %v2134
    %v2323 = vpop.f32.mrb[0].mxu0
    %v2324 = vadd.f32 %v2139, %v2323
    %v2325 = vpop.f32.mrb[0].mxu0
    %v2326 = vadd.f32 %v2143, %v2325
    %v2327 = vpop.f32.mrb[0].mxu0
    %v2328 = vpop.f32.mrb[0].mxu0
    %2329 = vdwg.mxu0
    %2330 = vmatprep.subr.bf16.mxu0 0
    %2331 = vmatpush1.bf16.msra.mxu0 %v2233
    %2332 = vmatprep.subr.bf16.mxu0 0
    %2333 = vmatpush1.bf16.msra.mxu0 %v2236
    %2334 = vmatprep.subr.bf16.mxu0 0
    %2335 = vmatpush1.bf16.msra.mxu0 %v2239
    %2336 = vmatprep.subr.bf16.mxu0 0
    %2337 = vmatpush1.bf16.msra.mxu0 %v2242
    %2338 = vmatprep.subr.bf16.mxu0 0
    %2339 = vmatpush1.bf16.msra.mxu0 %v2245
    %2340 = vmatprep.subr.bf16.mxu0 0
    %2341 = vmatpush1.bf16.msra.mxu0 %v2248
    %2342 = vmatprep.subr.bf16.mxu0 0
    %2343 = vmatpush1.bf16.msra.mxu0 %v2251
    %2344 = vmatprep.subr.bf16.mxu0 0
    %2345 = vmatpush1.bf16.msra.mxu0 %v2254
    %2346 = vmatprep.subr.bf16.mxu0 0
    %2347 = vmatpush1.bf16.msra.mxu0 0
    %2348 = vmatprep.subr.bf16.mxu0 0
    %2349 = vmatpush1.bf16.msra.mxu0 0
    %2350 = vmatprep.subr.bf16.mxu0 0
    %2351 = vmatpush1.bf16.msra.mxu0 0
    %2352 = vmatprep.subr.bf16.mxu0 0
    %2353 = vmatpush1.bf16.msra.mxu0 0
    %2354 = vmatprep.subr.bf16.mxu0 0
    %2355 = vmatpush1.bf16.msra.mxu0 0
    %2356 = vmatprep.subr.bf16.mxu0 0
    %2357 = vmatpush1.bf16.msra.mxu0 0
    %2358 = vmatprep.subr.bf16.mxu0 0
    %2359 = vmatpush1.bf16.msra.mxu0 0
    %2360 = vmatprep.subr.bf16.mxu0 0
    %2361 = vmatpush1.bf16.msra.mxu0 0
    %2362 = vmatprep.mubr.bf16.mxu0 0
    %2363 = vmatmul.mubr.bf16.gmra.mrb[0].mxu0 %v2133
    %v2364 = vpop.f32.mrb[0].mxu0
    %v2365 = vadd.f32 %v2147, %v2364
    %v2366 = vpop.f32.mrb[0].mxu0
    %v2367 = vpop.f32.mrb[0].mxu0
    %v2368 = vadd.f32 %v2147, %v2367
    %v2369 = vpop.f32.mrb[0].mxu0
    %2370 = vmatprep.mubr.bf16.mxu0 0
    %2371 = vmatmul.mubr.bf16.gmra.mrb[0].mxu0 %v2134
    %v2372 = vpop.f32.mrb[0].mxu0
    %v2373 = vadd.f32 %v2147, %v2372
    %v2374 = vpop.f32.mrb[0].mxu0
    %v2375 = vpop.f32.mrb[0].mxu0
    %v2376 = vpop.f32.mrb[0].mxu0
    %2377 = vdwg.mxu0
    %v2378 = vpack.c.bf16 %v2318, %v2314
    %v2379 = vpack.c.bf16 %v2324, %v2324
    %v2380 = vpack.c.bf16 %v2320, %v2316
    %v2381 = vpack.c.bf16 %v2326, %v2326
    %v2382 = vpack.c.bf16 %v2368, %v2365
    %v2383 = vpack.c.bf16 %v2373, %v2373
    %v2385 = vsel %vm651, %v2378, 0
    %v2388 = vsel %vm651, %v2379, 0
    %v2391 = vsel %vm651, %v2380, 0
    %v2394 = vsel %vm651, %v2381, 0
    %2396 = vmatprep.subr.bf16.mxu0 0
    %2397 = vmatpush1.bf16.xpose.msra.mxu0 %v2391
    %2398 = vmatprep.subr.bf16.mxu0 0
    %2399 = vmatpush1.bf16.xpose.msra.mxu0 %v2394
    %2400 = vmatprep.subr.bf16.mxu0 0
    %2401 = vmatpush1.bf16.xpose.msra.mxu0 0
    %2402 = vmatprep.subr.bf16.mxu0 0
    %2403 = vmatpush1.bf16.xpose.msra.mxu0 0
    %2404 = vmatprep.subr.bf16.mxu0 0
    %2405 = vmatpush1.bf16.xpose.msra.mxu0 0
    %2406 = vmatprep.subr.bf16.mxu0 0
    %2407 = vmatpush1.bf16.xpose.msra.mxu0 0
    %2408 = vmatprep.subr.bf16.mxu0 0
    %2409 = vmatpush1.bf16.xpose.msra.mxu0 0
    %2410 = vmatprep.subr.bf16.mxu0 0
    %2411 = vmatpush1.bf16.xpose.msra.mxu0 0
    %2412 = vmatprep.subr.bf16.mxu0 0
    %2413 = vmatpush1.bf16.xpose.msra.mxu0 0
    %2414 = vmatprep.subr.bf16.mxu0 0
    %2415 = vmatpush1.bf16.xpose.msra.mxu0 0
    %2416 = vmatprep.subr.bf16.mxu0 0
    %2417 = vmatpush1.bf16.xpose.msra.mxu0 0
    %2418 = vmatprep.subr.bf16.mxu0 0
    %2419 = vmatpush1.bf16.xpose.msra.mxu0 0
    %2420 = vmatprep.subr.bf16.mxu0 0
    %2421 = vmatpush1.bf16.xpose.msra.mxu0 0
    %2422 = vmatprep.subr.bf16.mxu0 0
    %2423 = vmatpush1.bf16.xpose.msra.mxu0 0
    %2424 = vmatprep.subr.bf16.mxu0 0
    %2425 = vmatpush1.bf16.xpose.msra.mxu0 0
    %2426 = vmatprep.subr.bf16.mxu0 0
    %2427 = vmatpush1.bf16.xpose.msra.mxu0 0
    %2428 = vmatprep.mubr.bf16.mxu0 0
    %2429 = vmatmul.mubr.bf16.gmra.mrb[0].mxu0 %v2385
    %v2430 = vpop.f32.mrb[0].mxu0
    %v2431 = vadd.f32 %v172, %v2430
    %v2432 = vpop.f32.mrb[0].mxu0
    %v2433 = vpop.f32.mrb[0].mxu0
    %v2434 = vadd.f32 %v173, %v2433
    %v2435 = vpop.f32.mrb[0].mxu0
    %2436 = vmatprep.mubr.bf16.mxu0 0
    %2437 = vmatmul.mubr.bf16.gmra.mrb[0].mxu0 %v2388
    %v2438 = vpop.f32.mrb[0].mxu0
    %v2439 = vadd.f32 %v174, %v2438
    %v2440 = vpop.f32.mrb[0].mxu0
    %v2441 = vpop.f32.mrb[0].mxu0
    %v2442 = vpop.f32.mrb[0].mxu0
    %2443 = vdwg.mxu0
    %v2444 = vsel %vm712, %v2431, -inf
    %2445 = vmax.xlane.f32.xlu0 %v2444
    %v2446 = vpop.xlane.xlu0 %2445
    %v2447 = vsel %vm712, %v2434, -inf
    %2448 = vmax.xlane.f32.xlu0 %v2447
    %v2449 = vpop.xlane.xlu0 %2448
    %v2450 = vsel %vm712, %v2439, -inf
    %2451 = vmax.xlane.f32.xlu0 %v2450
    %v2452 = vpop.xlane.xlu0 %2451
    %v2453 = vsub.f32 %v2431, %v2446
    %v2454 = vsub.f32 %v2434, %v2449
    %v2455 = vsub.f32 %v2439, %v2452
    %v2456 = vmul.f32 %v2453, 1.442695
    %v2457 = vpow.pop %v2456
    %v2458 = vmul.f32 %v2454, 1.442695
    %v2459 = vpow.pop %v2458
    %v2460 = vmul.f32 %v2455, 1.442695
    %v2461 = vpow.pop %v2460
    %v2462 = vsel %vm712, %v2457, 0.0
    %2463 = vadd.xlane.f32.xlu0 %v2462
    %v2464 = vpop.xlane.xlu0 %2463
    %v2465 = vsel %vm712, %v2459, 0.0
    %2466 = vadd.xlane.f32.xlu0 %v2465
    %v2467 = vpop.xlane.xlu0 %2466
    %v2468 = vsel %vm712, %v2461, 0.0
    %2469 = vadd.xlane.f32.xlu0 %v2468
    %v2470 = vpop.xlane.xlu0 %2469
    %v2471 = vrcp.pop %v2464
    %v2472 = vrcp.pop %v2467
    %v2473 = vrcp.pop %v2470
    %v2474 = vmul.f32 %v2457, %v2471
    %v2475 = vmul.f32 %v2459, %v2472
    %v2476 = vmul.f32 %v2461, %v2473
    %v2477 = vpack.c.bf16 %v2475, %v2474
    %v2478 = vpack.c.bf16 %v2476, %v2476
    %v2480 = vsel %vm712, %v2477, 0
    %v2483 = vsel %vm712, %v2478, 0
    %v2486 = vsel %vm754, %v2383, 0
    %2488 = vmatprep.subr.bf16.mxu0 0
    %2489 = vmatpush1.bf16.msra.mxu0 %v2382
    %2490 = vmatprep.subr.bf16.mxu0 0
    %2491 = vmatpush1.bf16.msra.mxu0 %v2486
    %2492 = vmatprep.subr.bf16.mxu0 0
    %2493 = vmatpush1.bf16.msra.mxu0 0
    %2494 = vmatprep.subr.bf16.mxu0 0
    %2495 = vmatpush1.bf16.msra.mxu0 0
    %2496 = vmatprep.subr.bf16.mxu0 0
    %2497 = vmatpush1.bf16.msra.mxu0 0
    %2498 = vmatprep.subr.bf16.mxu0 0
    %2499 = vmatpush1.bf16.msra.mxu0 0
    %2500 = vmatprep.subr.bf16.mxu0 0
    %2501 = vmatpush1.bf16.msra.mxu0 0
    %2502 = vmatprep.subr.bf16.mxu0 0
    %2503 = vmatpush1.bf16.msra.mxu0 0
    %2504 = vmatprep.subr.bf16.mxu0 0
    %2505 = vmatpush1.bf16.msra.mxu0 0
    %2506 = vmatprep.subr.bf16.mxu0 0
    %2507 = vmatpush1.bf16.msra.mxu0 0
    %2508 = vmatprep.subr.bf16.mxu0 0
    %2509 = vmatpush1.bf16.msra.mxu0 0
    %2510 = vmatprep.subr.bf16.mxu0 0
    %2511 = vmatpush1.bf16.msra.mxu0 0
    %2512 = vmatprep.subr.bf16.mxu0 0
    %2513 = vmatpush1.bf16.msra.mxu0 0
    %2514 = vmatprep.subr.bf16.mxu0 0
    %2515 = vmatpush1.bf16.msra.mxu0 0
    %2516 = vmatprep.subr.bf16.mxu0 0
    %2517 = vmatpush1.bf16.msra.mxu0 0
    %2518 = vmatprep.subr.bf16.mxu0 0
    %2519 = vmatpush1.bf16.msra.mxu0 0
    %2520 = vmatprep.mubr.bf16.mxu0 0
    %2521 = vmatmul.mubr.bf16.gmra.mrb[0].mxu0 %v2480
    %v2522 = vpop.f32.mrb[0].mxu0
    %v2523 = vadd.f32 0.0, %v2522
    %v2524 = vpop.f32.mrb[0].mxu0
    %v2525 = vpop.f32.mrb[0].mxu0
    %v2526 = vadd.f32 0.0, %v2525
    %v2527 = vpop.f32.mrb[0].mxu0
    %2528 = vmatprep.mubr.bf16.mxu0 0
    %2529 = vmatmul.mubr.bf16.gmra.mrb[0].mxu0 %v2483
    %v2530 = vpop.f32.mrb[0].mxu0
    %v2531 = vadd.f32 0.0, %v2530
    %v2532 = vpop.f32.mrb[0].mxu0
    %v2533 = vpop.f32.mrb[0].mxu0
    %v2534 = vpop.f32.mrb[0].mxu0
    %2535 = vdwg.mxu0
    %v2536 = vpack.c.bf16 %v2526, %v2523
    %v2537 = vpack.c.bf16 %v2531, %v2531
    %2540 = vrot.lane.b32.xlu0 %v2378, 96
    %v2541 = vpop.permute.xlu0 %2540
    %2542 = vrot.lane.b32.xlu0 %v2379, 96
    %v2543 = vpop.permute.xlu0 %2542
    %2546 = vrot.lane.b32.xlu0 %v2380, 96
    %v2547 = vpop.permute.xlu0 %2546
    %2548 = vrot.lane.b32.xlu0 %v2381, 96
    %v2549 = vpop.permute.xlu0 %2548
    %v2551 = vsel %vm651, %v2541, 0
    %v2554 = vsel %vm651, %v2543, 0
    %v2557 = vsel %vm651, %v2547, 0
    %v2560 = vsel %vm651, %v2549, 0
    %2562 = vmatprep.subr.bf16.mxu0 0
    %2563 = vmatpush1.bf16.xpose.msra.mxu0 %v2557
    %2564 = vmatprep.subr.bf16.mxu0 0
    %2565 = vmatpush1.bf16.xpose.msra.mxu0 %v2560
    %2566 = vmatprep.subr.bf16.mxu0 0
    %2567 = vmatpush1.bf16.xpose.msra.mxu0 0
    %2568 = vmatprep.subr.bf16.mxu0 0
    %2569 = vmatpush1.bf16.xpose.msra.mxu0 0
    %2570 = vmatprep.subr.bf16.mxu0 0
    %2571 = vmatpush1.bf16.xpose.msra.mxu0 0
    %2572 = vmatprep.subr.bf16.mxu0 0
    %2573 = vmatpush1.bf16.xpose.msra.mxu0 0
    %2574 = vmatprep.subr.bf16.mxu0 0
    %2575 = vmatpush1.bf16.xpose.msra.mxu0 0
    %2576 = vmatprep.subr.bf16.mxu0 0
    %2577 = vmatpush1.bf16.xpose.msra.mxu0 0
    %2578 = vmatprep.subr.bf16.mxu0 0
    %2579 = vmatpush1.bf16.xpose.msra.mxu0 0
    %2580 = vmatprep.subr.bf16.mxu0 0
    %2581 = vmatpush1.bf16.xpose.msra.mxu0 0
    %2582 = vmatprep.subr.bf16.mxu0 0
    %2583 = vmatpush1.bf16.xpose.msra.mxu0 0
    %2584 = vmatprep.subr.bf16.mxu0 0
    %2585 = vmatpush1.bf16.xpose.msra.mxu0 0
    %2586 = vmatprep.subr.bf16.mxu0 0
    %2587 = vmatpush1.bf16.xpose.msra.mxu0 0
    %2588 = vmatprep.subr.bf16.mxu0 0
    %2589 = vmatpush1.bf16.xpose.msra.mxu0 0
    %2590 = vmatprep.subr.bf16.mxu0 0
    %2591 = vmatpush1.bf16.xpose.msra.mxu0 0
    %2592 = vmatprep.subr.bf16.mxu0 0
    %2593 = vmatpush1.bf16.xpose.msra.mxu0 0
    %2594 = vmatprep.mubr.bf16.mxu0 0
    %2595 = vmatmul.mubr.bf16.gmra.mrb[0].mxu0 %v2551
    %v2596 = vpop.f32.mrb[0].mxu0
    %v2597 = vadd.f32 %v172, %v2596
    %v2598 = vpop.f32.mrb[0].mxu0
    %v2599 = vpop.f32.mrb[0].mxu0
    %v2600 = vadd.f32 %v173, %v2599
    %v2601 = vpop.f32.mrb[0].mxu0
    %2602 = vmatprep.mubr.bf16.mxu0 0
    %2603 = vmatmul.mubr.bf16.gmra.mrb[0].mxu0 %v2554
    %v2604 = vpop.f32.mrb[0].mxu0
    %v2605 = vadd.f32 %v174, %v2604
    %v2606 = vpop.f32.mrb[0].mxu0
    %v2607 = vpop.f32.mrb[0].mxu0
    %v2608 = vpop.f32.mrb[0].mxu0
    %2609 = vdwg.mxu0
    %v2610 = vsel %vm712, %v2597, -inf
    %2611 = vmax.xlane.f32.xlu0 %v2610
    %v2612 = vpop.xlane.xlu0 %2611
    %v2613 = vsel %vm712, %v2600, -inf
    %2614 = vmax.xlane.f32.xlu0 %v2613
    %v2615 = vpop.xlane.xlu0 %2614
    %v2616 = vsel %vm712, %v2605, -inf
    %2617 = vmax.xlane.f32.xlu0 %v2616
    %v2618 = vpop.xlane.xlu0 %2617
    %v2619 = vsub.f32 %v2597, %v2612
    %v2620 = vsub.f32 %v2600, %v2615
    %v2621 = vsub.f32 %v2605, %v2618
    %v2622 = vmul.f32 %v2619, 1.442695
    %v2623 = vpow.pop %v2622
    %v2624 = vmul.f32 %v2620, 1.442695
    %v2625 = vpow.pop %v2624
    %v2626 = vmul.f32 %v2621, 1.442695
    %v2627 = vpow.pop %v2626
    %v2628 = vsel %vm712, %v2623, 0.0
    %2629 = vadd.xlane.f32.xlu0 %v2628
    %v2630 = vpop.xlane.xlu0 %2629
    %v2631 = vsel %vm712, %v2625, 0.0
    %2632 = vadd.xlane.f32.xlu0 %v2631
    %v2633 = vpop.xlane.xlu0 %2632
    %v2634 = vsel %vm712, %v2627, 0.0
    %2635 = vadd.xlane.f32.xlu0 %v2634
    %v2636 = vpop.xlane.xlu0 %2635
    %v2637 = vrcp.pop %v2630
    %v2638 = vrcp.pop %v2633
    %v2639 = vrcp.pop %v2636
    %v2640 = vmul.f32 %v2623, %v2637
    %v2641 = vmul.f32 %v2625, %v2638
    %v2642 = vmul.f32 %v2627, %v2639
    %v2643 = vpack.c.bf16 %v2641, %v2640
    %v2644 = vpack.c.bf16 %v2642, %v2642
    %2647 = vrot.lane.b32.xlu0 %v2382, 96
    %v2648 = vpop.permute.xlu0 %2647
    %2649 = vrot.lane.b32.xlu0 %v2383, 96
    %v2650 = vpop.permute.xlu0 %2649
    %v2653 = vsel %vm712, %v2643, 0
    %v2656 = vsel %vm712, %v2644, 0
    %v2659 = vsel %vm754, %v2650, 0
    %2661 = vmatprep.subr.bf16.mxu0 0
    %2662 = vmatpush1.bf16.msra.mxu0 %v2648
    %2663 = vmatprep.subr.bf16.mxu0 0
    %2664 = vmatpush1.bf16.msra.mxu0 %v2659
    %2665 = vmatprep.subr.bf16.mxu0 0
    %2666 = vmatpush1.bf16.msra.mxu0 0
    %2667 = vmatprep.subr.bf16.mxu0 0
    %2668 = vmatpush1.bf16.msra.mxu0 0
    %2669 = vmatprep.subr.bf16.mxu0 0
    %2670 = vmatpush1.bf16.msra.mxu0 0
    %2671 = vmatprep.subr.bf16.mxu0 0
    %2672 = vmatpush1.bf16.msra.mxu0 0
    %2673 = vmatprep.subr.bf16.mxu0 0
    %2674 = vmatpush1.bf16.msra.mxu0 0
    %2675 = vmatprep.subr.bf16.mxu0 0
    %2676 = vmatpush1.bf16.msra.mxu0 0
    %2677 = vmatprep.subr.bf16.mxu0 0
    %2678 = vmatpush1.bf16.msra.mxu0 0
    %2679 = vmatprep.subr.bf16.mxu0 0
    %2680 = vmatpush1.bf16.msra.mxu0 0
    %2681 = vmatprep.subr.bf16.mxu0 0
    %2682 = vmatpush1.bf16.msra.mxu0 0
    %2683 = vmatprep.subr.bf16.mxu0 0
    %2684 = vmatpush1.bf16.msra.mxu0 0
    %2685 = vmatprep.subr.bf16.mxu0 0
    %2686 = vmatpush1.bf16.msra.mxu0 0
    %2687 = vmatprep.subr.bf16.mxu0 0
    %2688 = vmatpush1.bf16.msra.mxu0 0
    %2689 = vmatprep.subr.bf16.mxu0 0
    %2690 = vmatpush1.bf16.msra.mxu0 0
    %2691 = vmatprep.subr.bf16.mxu0 0
    %2692 = vmatpush1.bf16.msra.mxu0 0
    %2693 = vmatprep.mubr.bf16.mxu0 0
    %2694 = vmatmul.mubr.bf16.gmra.mrb[0].mxu0 %v2653
    %v2695 = vpop.f32.mrb[0].mxu0
    %v2696 = vadd.f32 0.0, %v2695
    %v2697 = vpop.f32.mrb[0].mxu0
    %v2698 = vpop.f32.mrb[0].mxu0
    %v2699 = vadd.f32 0.0, %v2698
    %v2700 = vpop.f32.mrb[0].mxu0
    %2701 = vmatprep.mubr.bf16.mxu0 0
    %2702 = vmatmul.mubr.bf16.gmra.mrb[0].mxu0 %v2656
    %v2703 = vpop.f32.mrb[0].mxu0
    %v2704 = vadd.f32 0.0, %v2703
    %v2705 = vpop.f32.mrb[0].mxu0
    %v2706 = vpop.f32.mrb[0].mxu0
    %v2707 = vpop.f32.mrb[0].mxu0
    %2708 = vdwg.mxu0
    %v2709 = vpack.c.bf16 %v2699, %v2696
    %v2710 = vpack.c.bf16 %v2704, %v2704
    %v2715 = vunpack.c.l.b16 %v2063
    %v2716 = vunpack.c.l.b16 %v2064
    %v2717 = vunpack.c.l.b16 %v2065
    %v2718 = vunpack.c.l.b16 %v2066
    %v2719 = vpack.c.b16 %v2716, %v2715
    %v2720 = vpack.c.b16 %v2718, %v2717
    %v2724 = vsel %vm651, %v2709, 0
    %v2727 = vsel %vm651, %v2710, 0
    %2729 = vmatprep.subr.bf16.mxu0 0
    %2730 = vmatpush1.bf16.msra.mxu0 %v2719
    %2731 = vmatprep.subr.bf16.mxu0 0
    %2732 = vmatpush1.bf16.msra.mxu0 %v2720
    %2733 = vmatprep.subr.bf16.mxu0 0
    %2734 = vmatpush1.bf16.msra.mxu0 0
    %2735 = vmatprep.subr.bf16.mxu0 0
    %2736 = vmatpush1.bf16.msra.mxu0 0
    %2737 = vmatprep.subr.bf16.mxu0 0
    %2738 = vmatpush1.bf16.msra.mxu0 0
    %2739 = vmatprep.subr.bf16.mxu0 0
    %2740 = vmatpush1.bf16.msra.mxu0 0
    %2741 = vmatprep.subr.bf16.mxu0 0
    %2742 = vmatpush1.bf16.msra.mxu0 0
    %2743 = vmatprep.subr.bf16.mxu0 0
    %2744 = vmatpush1.bf16.msra.mxu0 0
    %2745 = vmatprep.subr.bf16.mxu0 0
    %2746 = vmatpush1.bf16.msra.mxu0 0
    %2747 = vmatprep.subr.bf16.mxu0 0
    %2748 = vmatpush1.bf16.msra.mxu0 0
    %2749 = vmatprep.subr.bf16.mxu0 0
    %2750 = vmatpush1.bf16.msra.mxu0 0
    %2751 = vmatprep.subr.bf16.mxu0 0
    %2752 = vmatpush1.bf16.msra.mxu0 0
    %2753 = vmatprep.subr.bf16.mxu0 0
    %2754 = vmatpush1.bf16.msra.mxu0 0
    %2755 = vmatprep.subr.bf16.mxu0 0
    %2756 = vmatpush1.bf16.msra.mxu0 0
    %2757 = vmatprep.subr.bf16.mxu0 0
    %2758 = vmatpush1.bf16.msra.mxu0 0
    %2759 = vmatprep.subr.bf16.mxu0 0
    %2760 = vmatpush1.bf16.msra.mxu0 0
    %2761 = vmatprep.mubr.bf16.mxu0 0
    %2762 = vmatmul.mubr.bf16.gmra.mrb[0].mxu0 %v2724
    %v2763 = vpop.f32.mrb[0].mxu0
    %v2764 = vadd.f32 0.0, %v2763
    %v2765 = vpop.f32.mrb[0].mxu0
    %v2766 = vpop.f32.mrb[0].mxu0
    %v2767 = vadd.f32 0.0, %v2766
    %v2768 = vpop.f32.mrb[0].mxu0
    %2769 = vmatprep.mubr.bf16.mxu0 0
    %2770 = vmatmul.mubr.bf16.gmra.mrb[0].mxu0 %v2727
    %v2771 = vpop.f32.mrb[0].mxu0
    %v2772 = vadd.f32 0.0, %v2771
    %v2773 = vpop.f32.mrb[0].mxu0
    %v2774 = vpop.f32.mrb[0].mxu0
    %v2775 = vpop.f32.mrb[0].mxu0
    %2776 = vdwg.mxu0
    %v2781 = vunpack.c.l.b16 %v2059
    %v2782 = vunpack.c.l.b16 %v2060
    %v2783 = vunpack.c.l.b16 %v2061
    %v2784 = vunpack.c.l.b16 %v2062
    %v2785 = vpack.c.b16 %v2782, %v2781
    %v2786 = vpack.c.b16 %v2784, %v2783
    %v2790 = vsel %vm651, %v2536, 0
    %v2793 = vsel %vm651, %v2537, 0
    %2795 = vmatprep.subr.bf16.mxu0 0
    %2796 = vmatpush1.bf16.msra.mxu0 %v2785
    %2797 = vmatprep.subr.bf16.mxu0 0
    %2798 = vmatpush1.bf16.msra.mxu0 %v2786
    %2799 = vmatprep.subr.bf16.mxu0 0
    %2800 = vmatpush1.bf16.msra.mxu0 0
    %2801 = vmatprep.subr.bf16.mxu0 0
    %2802 = vmatpush1.bf16.msra.mxu0 0
    %2803 = vmatprep.subr.bf16.mxu0 0
    %2804 = vmatpush1.bf16.msra.mxu0 0
    %2805 = vmatprep.subr.bf16.mxu0 0
    %2806 = vmatpush1.bf16.msra.mxu0 0
    %2807 = vmatprep.subr.bf16.mxu0 0
    %2808 = vmatpush1.bf16.msra.mxu0 0
    %2809 = vmatprep.subr.bf16.mxu0 0
    %2810 = vmatpush1.bf16.msra.mxu0 0
    %2811 = vmatprep.subr.bf16.mxu0 0
    %2812 = vmatpush1.bf16.msra.mxu0 0
    %2813 = vmatprep.subr.bf16.mxu0 0
    %2814 = vmatpush1.bf16.msra.mxu0 0
    %2815 = vmatprep.subr.bf16.mxu0 0
    %2816 = vmatpush1.bf16.msra.mxu0 0
    %2817 = vmatprep.subr.bf16.mxu0 0
    %2818 = vmatpush1.bf16.msra.mxu0 0
    %2819 = vmatprep.subr.bf16.mxu0 0
    %2820 = vmatpush1.bf16.msra.mxu0 0
    %2821 = vmatprep.subr.bf16.mxu0 0
    %2822 = vmatpush1.bf16.msra.mxu0 0
    %2823 = vmatprep.subr.bf16.mxu0 0
    %2824 = vmatpush1.bf16.msra.mxu0 0
    %2825 = vmatprep.subr.bf16.mxu0 0
    %2826 = vmatpush1.bf16.msra.mxu0 0
    %2827 = vmatprep.mubr.bf16.mxu0 0
    %2828 = vmatmul.mubr.bf16.gmra.mrb[0].mxu0 %v2790
    %v2829 = vpop.f32.mrb[0].mxu0
    %v2830 = vadd.f32 %v2764, %v2829
    %v2831 = vpop.f32.mrb[0].mxu0
    %v2832 = vpop.f32.mrb[0].mxu0
    %v2833 = vadd.f32 %v2767, %v2832
    %v2834 = vpop.f32.mrb[0].mxu0
    %2835 = vmatprep.mubr.bf16.mxu0 0
    %2836 = vmatmul.mubr.bf16.gmra.mrb[0].mxu0 %v2793
    %v2837 = vpop.f32.mrb[0].mxu0
    %v2838 = vadd.f32 %v2772, %v2837
    %v2839 = vpop.f32.mrb[0].mxu0
    %v2840 = vpop.f32.mrb[0].mxu0
    %v2841 = vpop.f32.mrb[0].mxu0
    %2842 = vdwg.mxu0
    %2843 = vrot.lane.b32.xlu0 %v2378, 64
    %v2844 = vpop.permute.xlu0 %2843
    %2845 = vrot.lane.b32.xlu0 %v2379, 64
    %v2846 = vpop.permute.xlu0 %2845
    %2847 = vrot.lane.b32.xlu0 %v2380, 64
    %v2848 = vpop.permute.xlu0 %2847
    %2849 = vrot.lane.b32.xlu0 %v2381, 64
    %v2850 = vpop.permute.xlu0 %2849
    %v2852 = vsel %vm651, %v2844, 0
    %v2855 = vsel %vm651, %v2846, 0
    %v2858 = vsel %vm651, %v2848, 0
    %v2861 = vsel %vm651, %v2850, 0
    %2863 = vmatprep.subr.bf16.mxu0 0
    %2864 = vmatpush1.bf16.xpose.msra.mxu0 %v2858
    %2865 = vmatprep.subr.bf16.mxu0 0
    %2866 = vmatpush1.bf16.xpose.msra.mxu0 %v2861
    %2867 = vmatprep.subr.bf16.mxu0 0
    %2868 = vmatpush1.bf16.xpose.msra.mxu0 0
    %2869 = vmatprep.subr.bf16.mxu0 0
    %2870 = vmatpush1.bf16.xpose.msra.mxu0 0
    %2871 = vmatprep.subr.bf16.mxu0 0
    %2872 = vmatpush1.bf16.xpose.msra.mxu0 0
    %2873 = vmatprep.subr.bf16.mxu0 0
    %2874 = vmatpush1.bf16.xpose.msra.mxu0 0
    %2875 = vmatprep.subr.bf16.mxu0 0
    %2876 = vmatpush1.bf16.xpose.msra.mxu0 0
    %2877 = vmatprep.subr.bf16.mxu0 0
    %2878 = vmatpush1.bf16.xpose.msra.mxu0 0
    %2879 = vmatprep.subr.bf16.mxu0 0
    %2880 = vmatpush1.bf16.xpose.msra.mxu0 0
    %2881 = vmatprep.subr.bf16.mxu0 0
    %2882 = vmatpush1.bf16.xpose.msra.mxu0 0
    %2883 = vmatprep.subr.bf16.mxu0 0
    %2884 = vmatpush1.bf16.xpose.msra.mxu0 0
    %2885 = vmatprep.subr.bf16.mxu0 0
    %2886 = vmatpush1.bf16.xpose.msra.mxu0 0
    %2887 = vmatprep.subr.bf16.mxu0 0
    %2888 = vmatpush1.bf16.xpose.msra.mxu0 0
    %2889 = vmatprep.subr.bf16.mxu0 0
    %2890 = vmatpush1.bf16.xpose.msra.mxu0 0
    %2891 = vmatprep.subr.bf16.mxu0 0
    %2892 = vmatpush1.bf16.xpose.msra.mxu0 0
    %2893 = vmatprep.subr.bf16.mxu0 0
    %2894 = vmatpush1.bf16.xpose.msra.mxu0 0
    %2895 = vmatprep.mubr.bf16.mxu0 0
    %2896 = vmatmul.mubr.bf16.gmra.mrb[0].mxu0 %v2852
    %v2897 = vpop.f32.mrb[0].mxu0
    %v2898 = vadd.f32 %v172, %v2897
    %v2899 = vpop.f32.mrb[0].mxu0
    %v2900 = vpop.f32.mrb[0].mxu0
    %v2901 = vadd.f32 %v173, %v2900
    %v2902 = vpop.f32.mrb[0].mxu0
    %2903 = vmatprep.mubr.bf16.mxu0 0
    %2904 = vmatmul.mubr.bf16.gmra.mrb[0].mxu0 %v2855
    %v2905 = vpop.f32.mrb[0].mxu0
    %v2906 = vadd.f32 %v174, %v2905
    %v2907 = vpop.f32.mrb[0].mxu0
    %v2908 = vpop.f32.mrb[0].mxu0
    %v2909 = vpop.f32.mrb[0].mxu0
    %2910 = vdwg.mxu0
    %v2911 = vsel %vm712, %v2898, -inf
    %2912 = vmax.xlane.f32.xlu0 %v2911
    %v2913 = vpop.xlane.xlu0 %2912
    %v2914 = vsel %vm712, %v2901, -inf
    %2915 = vmax.xlane.f32.xlu0 %v2914
    %v2916 = vpop.xlane.xlu0 %2915
    %v2917 = vsel %vm712, %v2906, -inf
    %2918 = vmax.xlane.f32.xlu0 %v2917
    %v2919 = vpop.xlane.xlu0 %2918
    %v2920 = vsub.f32 %v2898, %v2913
    %v2921 = vsub.f32 %v2901, %v2916
    %v2922 = vsub.f32 %v2906, %v2919
    %v2923 = vmul.f32 %v2920, 1.442695
    %v2924 = vpow.pop %v2923
    %v2925 = vmul.f32 %v2921, 1.442695
    %v2926 = vpow.pop %v2925
    %v2927 = vmul.f32 %v2922, 1.442695
    %v2928 = vpow.pop %v2927
    %v2929 = vsel %vm712, %v2924, 0.0
    %2930 = vadd.xlane.f32.xlu0 %v2929
    %v2931 = vpop.xlane.xlu0 %2930
    %v2932 = vsel %vm712, %v2926, 0.0
    %2933 = vadd.xlane.f32.xlu0 %v2932
    %v2934 = vpop.xlane.xlu0 %2933
    %v2935 = vsel %vm712, %v2928, 0.0
    %2936 = vadd.xlane.f32.xlu0 %v2935
    %v2937 = vpop.xlane.xlu0 %2936
    %v2938 = vrcp.pop %v2931
    %v2939 = vrcp.pop %v2934
    %v2940 = vrcp.pop %v2937
    %v2941 = vmul.f32 %v2924, %v2938
    %v2942 = vmul.f32 %v2926, %v2939
    %v2943 = vmul.f32 %v2928, %v2940
    %v2944 = vpack.c.bf16 %v2942, %v2941
    %v2945 = vpack.c.bf16 %v2943, %v2943
    %2946 = vrot.lane.b32.xlu0 %v2382, 64
    %v2947 = vpop.permute.xlu0 %2946
    %2948 = vrot.lane.b32.xlu0 %v2383, 64
    %v2949 = vpop.permute.xlu0 %2948
    %v2952 = vsel %vm712, %v2944, 0
    %v2955 = vsel %vm712, %v2945, 0
    %v2958 = vsel %vm754, %v2949, 0
    %2960 = vmatprep.subr.bf16.mxu0 0
    %2961 = vmatpush1.bf16.msra.mxu0 %v2947
    %2962 = vmatprep.subr.bf16.mxu0 0
    %2963 = vmatpush1.bf16.msra.mxu0 %v2958
    %2964 = vmatprep.subr.bf16.mxu0 0
    %2965 = vmatpush1.bf16.msra.mxu0 0
    %2966 = vmatprep.subr.bf16.mxu0 0
    %2967 = vmatpush1.bf16.msra.mxu0 0
    %2968 = vmatprep.subr.bf16.mxu0 0
    %2969 = vmatpush1.bf16.msra.mxu0 0
    %2970 = vmatprep.subr.bf16.mxu0 0
    %2971 = vmatpush1.bf16.msra.mxu0 0
    %2972 = vmatprep.subr.bf16.mxu0 0
    %2973 = vmatpush1.bf16.msra.mxu0 0
    %2974 = vmatprep.subr.bf16.mxu0 0
    %2975 = vmatpush1.bf16.msra.mxu0 0
    %2976 = vmatprep.subr.bf16.mxu0 0
    %2977 = vmatpush1.bf16.msra.mxu0 0
    %2978 = vmatprep.subr.bf16.mxu0 0
    %2979 = vmatpush1.bf16.msra.mxu0 0
    %2980 = vmatprep.subr.bf16.mxu0 0
    %2981 = vmatpush1.bf16.msra.mxu0 0
    %2982 = vmatprep.subr.bf16.mxu0 0
    %2983 = vmatpush1.bf16.msra.mxu0 0
    %2984 = vmatprep.subr.bf16.mxu0 0
    %2985 = vmatpush1.bf16.msra.mxu0 0
    %2986 = vmatprep.subr.bf16.mxu0 0
    %2987 = vmatpush1.bf16.msra.mxu0 0
    %2988 = vmatprep.subr.bf16.mxu0 0
    %2989 = vmatpush1.bf16.msra.mxu0 0
    %2990 = vmatprep.subr.bf16.mxu0 0
    %2991 = vmatpush1.bf16.msra.mxu0 0
    %2992 = vmatprep.mubr.bf16.mxu0 0
    %2993 = vmatmul.mubr.bf16.gmra.mrb[0].mxu0 %v2952
    %v2994 = vpop.f32.mrb[0].mxu0
    %v2995 = vadd.f32 0.0, %v2994
    %v2996 = vpop.f32.mrb[0].mxu0
    %v2997 = vpop.f32.mrb[0].mxu0
    %v2998 = vadd.f32 0.0, %v2997
    %v2999 = vpop.f32.mrb[0].mxu0
    %3000 = vmatprep.mubr.bf16.mxu0 0
    %3001 = vmatmul.mubr.bf16.gmra.mrb[0].mxu0 %v2955
    %v3002 = vpop.f32.mrb[0].mxu0
    %v3003 = vadd.f32 0.0, %v3002
    %v3004 = vpop.f32.mrb[0].mxu0
    %v3005 = vpop.f32.mrb[0].mxu0
    %v3006 = vpop.f32.mrb[0].mxu0
    %3007 = vdwg.mxu0
    %v3008 = vpack.c.bf16 %v2998, %v2995
    %v3009 = vpack.c.bf16 %v3003, %v3003
    %v3014 = vunpack.c.l.b16 %v2067
    %v3015 = vunpack.c.l.b16 %v2068
    %v3016 = vunpack.c.l.b16 %v2069
    %v3017 = vunpack.c.l.b16 %v2070
    %v3018 = vpack.c.b16 %v3015, %v3014
    %v3019 = vpack.c.b16 %v3017, %v3016
    %v3023 = vsel %vm651, %v3008, 0
    %v3026 = vsel %vm651, %v3009, 0
    %3028 = vmatprep.subr.bf16.mxu0 0
    %3029 = vmatpush1.bf16.msra.mxu0 %v3018
    %3030 = vmatprep.subr.bf16.mxu0 0
    %3031 = vmatpush1.bf16.msra.mxu0 %v3019
    %3032 = vmatprep.subr.bf16.mxu0 0
    %3033 = vmatpush1.bf16.msra.mxu0 0
    %3034 = vmatprep.subr.bf16.mxu0 0
    %3035 = vmatpush1.bf16.msra.mxu0 0
    %3036 = vmatprep.subr.bf16.mxu0 0
    %3037 = vmatpush1.bf16.msra.mxu0 0
    %3038 = vmatprep.subr.bf16.mxu0 0
    %3039 = vmatpush1.bf16.msra.mxu0 0
    %3040 = vmatprep.subr.bf16.mxu0 0
    %3041 = vmatpush1.bf16.msra.mxu0 0
    %3042 = vmatprep.subr.bf16.mxu0 0
    %3043 = vmatpush1.bf16.msra.mxu0 0
    %3044 = vmatprep.subr.bf16.mxu0 0
    %3045 = vmatpush1.bf16.msra.mxu0 0
    %3046 = vmatprep.subr.bf16.mxu0 0
    %3047 = vmatpush1.bf16.msra.mxu0 0
    %3048 = vmatprep.subr.bf16.mxu0 0
    %3049 = vmatpush1.bf16.msra.mxu0 0
    %3050 = vmatprep.subr.bf16.mxu0 0
    %3051 = vmatpush1.bf16.msra.mxu0 0
    %3052 = vmatprep.subr.bf16.mxu0 0
    %3053 = vmatpush1.bf16.msra.mxu0 0
    %3054 = vmatprep.subr.bf16.mxu0 0
    %3055 = vmatpush1.bf16.msra.mxu0 0
    %3056 = vmatprep.subr.bf16.mxu0 0
    %3057 = vmatpush1.bf16.msra.mxu0 0
    %3058 = vmatprep.subr.bf16.mxu0 0
    %3059 = vmatpush1.bf16.msra.mxu0 0
    %3060 = vmatprep.mubr.bf16.mxu0 0
    %3061 = vmatmul.mubr.bf16.gmra.mrb[0].mxu0 %v3023
    %v3062 = vpop.f32.mrb[0].mxu0
    %v3063 = vadd.f32 0.0, %v3062
    %v3064 = vpop.f32.mrb[0].mxu0
    %v3065 = vpop.f32.mrb[0].mxu0
    %v3066 = vadd.f32 0.0, %v3065
    %v3067 = vpop.f32.mrb[0].mxu0
    %3068 = vmatprep.mubr.bf16.mxu0 0
    %3069 = vmatmul.mubr.bf16.gmra.mrb[0].mxu0 %v3026
    %v3070 = vpop.f32.mrb[0].mxu0
    %v3071 = vadd.f32 0.0, %v3070
    %v3072 = vpop.f32.mrb[0].mxu0
    %v3073 = vpop.f32.mrb[0].mxu0
    %v3074 = vpop.f32.mrb[0].mxu0
    %3075 = vdwg.mxu0
    %v3076 = vadd.f32 %v2830, %v3063
    %v3077 = vadd.f32 %v2833, %v3066
    %v3078 = vadd.f32 %v2838, %v3071
    %3079 = vrot.lane.b32.xlu0 %v2378, 32
    %v3080 = vpop.permute.xlu0 %3079
    %3081 = vrot.lane.b32.xlu0 %v2379, 32
    %v3082 = vpop.permute.xlu0 %3081
    %3083 = vrot.lane.b32.xlu0 %v2380, 32
    %v3084 = vpop.permute.xlu0 %3083
    %3085 = vrot.lane.b32.xlu0 %v2381, 32
    %v3086 = vpop.permute.xlu0 %3085
    %v3088 = vsel %vm651, %v3080, 0
    %v3091 = vsel %vm651, %v3082, 0
    %v3094 = vsel %vm651, %v3084, 0
    %v3097 = vsel %vm651, %v3086, 0
    %3099 = vmatprep.subr.bf16.mxu0 0
    %3100 = vmatpush1.bf16.xpose.msra.mxu0 %v3094
    %3101 = vmatprep.subr.bf16.mxu0 0
    %3102 = vmatpush1.bf16.xpose.msra.mxu0 %v3097
    %3103 = vmatprep.subr.bf16.mxu0 0
    %3104 = vmatpush1.bf16.xpose.msra.mxu0 0
    %3105 = vmatprep.subr.bf16.mxu0 0
    %3106 = vmatpush1.bf16.xpose.msra.mxu0 0
    %3107 = vmatprep.subr.bf16.mxu0 0
    %3108 = vmatpush1.bf16.xpose.msra.mxu0 0
    %3109 = vmatprep.subr.bf16.mxu0 0
    %3110 = vmatpush1.bf16.xpose.msra.mxu0 0
    %3111 = vmatprep.subr.bf16.mxu0 0
    %3112 = vmatpush1.bf16.xpose.msra.mxu0 0
    %3113 = vmatprep.subr.bf16.mxu0 0
    %3114 = vmatpush1.bf16.xpose.msra.mxu0 0
    %3115 = vmatprep.subr.bf16.mxu0 0
    %3116 = vmatpush1.bf16.xpose.msra.mxu0 0
    %3117 = vmatprep.subr.bf16.mxu0 0
    %3118 = vmatpush1.bf16.xpose.msra.mxu0 0
    %3119 = vmatprep.subr.bf16.mxu0 0
    %3120 = vmatpush1.bf16.xpose.msra.mxu0 0
    %3121 = vmatprep.subr.bf16.mxu0 0
    %3122 = vmatpush1.bf16.xpose.msra.mxu0 0
    %3123 = vmatprep.subr.bf16.mxu0 0
    %3124 = vmatpush1.bf16.xpose.msra.mxu0 0
    %3125 = vmatprep.subr.bf16.mxu0 0
    %3126 = vmatpush1.bf16.xpose.msra.mxu0 0
    %3127 = vmatprep.subr.bf16.mxu0 0
    %3128 = vmatpush1.bf16.xpose.msra.mxu0 0
    %3129 = vmatprep.subr.bf16.mxu0 0
    %3130 = vmatpush1.bf16.xpose.msra.mxu0 0
    %3131 = vmatprep.mubr.bf16.mxu0 0
    %3132 = vmatmul.mubr.bf16.gmra.mrb[0].mxu0 %v3088
    %v3133 = vpop.f32.mrb[0].mxu0
    %v3134 = vadd.f32 %v172, %v3133
    %v3135 = vpop.f32.mrb[0].mxu0
    %v3136 = vpop.f32.mrb[0].mxu0
    %v3137 = vadd.f32 %v173, %v3136
    %v3138 = vpop.f32.mrb[0].mxu0
    %3139 = vmatprep.mubr.bf16.mxu0 0
    %3140 = vmatmul.mubr.bf16.gmra.mrb[0].mxu0 %v3091
    %v3141 = vpop.f32.mrb[0].mxu0
    %v3142 = vadd.f32 %v174, %v3141
    %v3143 = vpop.f32.mrb[0].mxu0
    %v3144 = vpop.f32.mrb[0].mxu0
    %v3145 = vpop.f32.mrb[0].mxu0
    %3146 = vdwg.mxu0
    %v3147 = vsel %vm712, %v3134, -inf
    %3148 = vmax.xlane.f32.xlu0 %v3147
    %v3149 = vpop.xlane.xlu0 %3148
    %v3150 = vsel %vm712, %v3137, -inf
    %3151 = vmax.xlane.f32.xlu0 %v3150
    %v3152 = vpop.xlane.xlu0 %3151
    %v3153 = vsel %vm712, %v3142, -inf
    %3154 = vmax.xlane.f32.xlu0 %v3153
    %v3155 = vpop.xlane.xlu0 %3154
    %v3156 = vsub.f32 %v3134, %v3149
    %v3157 = vsub.f32 %v3137, %v3152
    %v3158 = vsub.f32 %v3142, %v3155
    %v3159 = vmul.f32 %v3156, 1.442695
    %v3160 = vpow.pop %v3159
    %v3161 = vmul.f32 %v3157, 1.442695
    %v3162 = vpow.pop %v3161
    %v3163 = vmul.f32 %v3158, 1.442695
    %v3164 = vpow.pop %v3163
    %v3165 = vsel %vm712, %v3160, 0.0
    %3166 = vadd.xlane.f32.xlu0 %v3165
    %v3167 = vpop.xlane.xlu0 %3166
    %v3168 = vsel %vm712, %v3162, 0.0
    %3169 = vadd.xlane.f32.xlu0 %v3168
    %v3170 = vpop.xlane.xlu0 %3169
    %v3171 = vsel %vm712, %v3164, 0.0
    %3172 = vadd.xlane.f32.xlu0 %v3171
    %v3173 = vpop.xlane.xlu0 %3172
    %v3174 = vrcp.pop %v3167
    %v3175 = vrcp.pop %v3170
    %v3176 = vrcp.pop %v3173
    %v3177 = vmul.f32 %v3160, %v3174
    %v3178 = vmul.f32 %v3162, %v3175
    %v3179 = vmul.f32 %v3164, %v3176
    %v3180 = vpack.c.bf16 %v3178, %v3177
    %v3181 = vpack.c.bf16 %v3179, %v3179
    %3182 = vrot.lane.b32.xlu0 %v2382, 32
    %v3183 = vpop.permute.xlu0 %3182
    %3184 = vrot.lane.b32.xlu0 %v2383, 32
    %v3185 = vpop.permute.xlu0 %3184
    %v3188 = vsel %vm712, %v3180, 0
    %v3191 = vsel %vm712, %v3181, 0
    %v3194 = vsel %vm754, %v3185, 0
    %3196 = vmatprep.subr.bf16.mxu0 0
    %3197 = vmatpush1.bf16.msra.mxu0 %v3183
    %3198 = vmatprep.subr.bf16.mxu0 0
    %3199 = vmatpush1.bf16.msra.mxu0 %v3194
    %3200 = vmatprep.subr.bf16.mxu0 0
    %3201 = vmatpush1.bf16.msra.mxu0 0
    %3202 = vmatprep.subr.bf16.mxu0 0
    %3203 = vmatpush1.bf16.msra.mxu0 0
    %3204 = vmatprep.subr.bf16.mxu0 0
    %3205 = vmatpush1.bf16.msra.mxu0 0
    %3206 = vmatprep.subr.bf16.mxu0 0
    %3207 = vmatpush1.bf16.msra.mxu0 0
    %3208 = vmatprep.subr.bf16.mxu0 0
    %3209 = vmatpush1.bf16.msra.mxu0 0
    %3210 = vmatprep.subr.bf16.mxu0 0
    %3211 = vmatpush1.bf16.msra.mxu0 0
    %3212 = vmatprep.subr.bf16.mxu0 0
    %3213 = vmatpush1.bf16.msra.mxu0 0
    %3214 = vmatprep.subr.bf16.mxu0 0
    %3215 = vmatpush1.bf16.msra.mxu0 0
    %3216 = vmatprep.subr.bf16.mxu0 0
    %3217 = vmatpush1.bf16.msra.mxu0 0
    %3218 = vmatprep.subr.bf16.mxu0 0
    %3219 = vmatpush1.bf16.msra.mxu0 0
    %3220 = vmatprep.subr.bf16.mxu0 0
    %3221 = vmatpush1.bf16.msra.mxu0 0
    %3222 = vmatprep.subr.bf16.mxu0 0
    %3223 = vmatpush1.bf16.msra.mxu0 0
    %3224 = vmatprep.subr.bf16.mxu0 0
    %3225 = vmatpush1.bf16.msra.mxu0 0
    %3226 = vmatprep.subr.bf16.mxu0 0
    %3227 = vmatpush1.bf16.msra.mxu0 0
    %3228 = vmatprep.mubr.bf16.mxu0 0
    %3229 = vmatmul.mubr.bf16.gmra.mrb[0].mxu0 %v3188
    %v3230 = vpop.f32.mrb[0].mxu0
    %v3231 = vadd.f32 0.0, %v3230
    %v3232 = vpop.f32.mrb[0].mxu0
    %v3233 = vpop.f32.mrb[0].mxu0
    %v3234 = vadd.f32 0.0, %v3233
    %v3235 = vpop.f32.mrb[0].mxu0
    %3236 = vmatprep.mubr.bf16.mxu0 0
    %3237 = vmatmul.mubr.bf16.gmra.mrb[0].mxu0 %v3191
    %v3238 = vpop.f32.mrb[0].mxu0
    %v3239 = vadd.f32 0.0, %v3238
    %v3240 = vpop.f32.mrb[0].mxu0
    %v3241 = vpop.f32.mrb[0].mxu0
    %v3242 = vpop.f32.mrb[0].mxu0
    %3243 = vdwg.mxu0
    %v3244 = vpack.c.bf16 %v3234, %v3231
    %v3245 = vpack.c.bf16 %v3239, %v3239
    %v3250 = vunpack.c.l.b16 %v2071
    %v3251 = vunpack.c.l.b16 %v2072
    %v3252 = vunpack.c.l.b16 %v2073
    %v3253 = vunpack.c.l.b16 %v2074
    %v3254 = vpack.c.b16 %v3251, %v3250
    %v3255 = vpack.c.b16 %v3253, %v3252
    %v3259 = vsel %vm651, %v3244, 0
    %v3262 = vsel %vm651, %v3245, 0
    %3264 = vmatprep.subr.bf16.mxu0 0
    %3265 = vmatpush1.bf16.msra.mxu0 %v3254
    %3266 = vmatprep.subr.bf16.mxu0 0
    %3267 = vmatpush1.bf16.msra.mxu0 %v3255
    %3268 = vmatprep.subr.bf16.mxu0 0
    %3269 = vmatpush1.bf16.msra.mxu0 0
    %3270 = vmatprep.subr.bf16.mxu0 0
    %3271 = vmatpush1.bf16.msra.mxu0 0
    %3272 = vmatprep.subr.bf16.mxu0 0
    %3273 = vmatpush1.bf16.msra.mxu0 0
    %3274 = vmatprep.subr.bf16.mxu0 0
    %3275 = vmatpush1.bf16.msra.mxu0 0
    %3276 = vmatprep.subr.bf16.mxu0 0
    %3277 = vmatpush1.bf16.msra.mxu0 0
    %3278 = vmatprep.subr.bf16.mxu0 0
    %3279 = vmatpush1.bf16.msra.mxu0 0
    %3280 = vmatprep.subr.bf16.mxu0 0
    %3281 = vmatpush1.bf16.msra.mxu0 0
    %3282 = vmatprep.subr.bf16.mxu0 0
    %3283 = vmatpush1.bf16.msra.mxu0 0
    %3284 = vmatprep.subr.bf16.mxu0 0
    %3285 = vmatpush1.bf16.msra.mxu0 0
    %3286 = vmatprep.subr.bf16.mxu0 0
    %3287 = vmatpush1.bf16.msra.mxu0 0
    %3288 = vmatprep.subr.bf16.mxu0 0
    %3289 = vmatpush1.bf16.msra.mxu0 0
    %3290 = vmatprep.subr.bf16.mxu0 0
    %3291 = vmatpush1.bf16.msra.mxu0 0
    %3292 = vmatprep.subr.bf16.mxu0 0
    %3293 = vmatpush1.bf16.msra.mxu0 0
    %3294 = vmatprep.subr.bf16.mxu0 0
    %3295 = vmatpush1.bf16.msra.mxu0 0
    %3296 = vmatprep.mubr.bf16.mxu0 0
    %3297 = vmatmul.mubr.bf16.gmra.mrb[0].mxu0 %v3259
    %v3298 = vpop.f32.mrb[0].mxu0
    %v3299 = vadd.f32 0.0, %v3298
    %v3300 = vpop.f32.mrb[0].mxu0
    %v3301 = vpop.f32.mrb[0].mxu0
    %v3302 = vadd.f32 0.0, %v3301
    %v3303 = vpop.f32.mrb[0].mxu0
    %3304 = vmatprep.mubr.bf16.mxu0 0
    %3305 = vmatmul.mubr.bf16.gmra.mrb[0].mxu0 %v3262
    %v3306 = vpop.f32.mrb[0].mxu0
    %v3307 = vadd.f32 0.0, %v3306
    %v3308 = vpop.f32.mrb[0].mxu0
    %v3309 = vpop.f32.mrb[0].mxu0
    %v3310 = vpop.f32.mrb[0].mxu0
    %3311 = vdwg.mxu0
    %v3312 = vadd.f32 %v3076, %v3299
    %v3313 = vadd.f32 %v3077, %v3302
    %v3314 = vadd.f32 %v3078, %v3307
    %v3316 = vlaneseq
    %v3317 = vshrl.u32 %v3316, 7
    %v3318 = vsub.s32 0, %v3317
    %v3319 = vrot.slane %v2076, %v3318
    %v3321 = vadd.f32 %v3312, %v3319
    %v3322 = vadd.f32 %v3313, %v3319
    %v3323 = vadd.f32 %v3314, %v3319
    %v3324 = vadd.f32 %v2020, %v3321
    %v3325 = vadd.f32 %v2021, %v3322
    %v3326 = vadd.f32 %v2022, %v3323
    %3327 = vadd.xlane.f32.xlu0 %v3324
    %v3328 = vpop.xlane.xlu0 %3327
    %3329 = vadd.xlane.f32.xlu0 %v3325
    %v3330 = vpop.xlane.xlu0 %3329
    %3331 = vadd.xlane.f32.xlu0 %v3326
    %v3332 = vpop.xlane.xlu0 %3331
    %v3333 = vmul.f32 %v3328, %v1603
    %v3334 = vmul.f32 %v3330, %v1603
    %v3335 = vmul.f32 %v3332, %v1603
    %v3336 = vsub.f32 %v3324, %v3333
    %v3337 = vsub.f32 %v3325, %v3334
    %v3338 = vsub.f32 %v3326, %v3335
    %v3339 = vmul.f32 %v3336, %v3336
    %v3340 = vmul.f32 %v3337, %v3337
    %v3341 = vmul.f32 %v3338, %v3338
    %3342 = vadd.xlane.f32.xlu0 %v3339
    %v3343 = vpop.xlane.xlu0 %3342
    %3344 = vadd.xlane.f32.xlu0 %v3340
    %v3345 = vpop.xlane.xlu0 %3344
    %3346 = vadd.xlane.f32.xlu0 %v3341
    %v3347 = vpop.xlane.xlu0 %3346
    %v3348 = vmul.f32 %v3343, %v1603
    %v3349 = vmul.f32 %v3345, %v1603
    %v3350 = vmul.f32 %v3347, %v1603
    %v3351 = vadd.f32 %v3348, 1e-05
    %v3352 = vadd.f32 %v3349, 1e-05
    %v3353 = vadd.f32 %v3350, 1e-05
    %v3354 = vrsqrt.pop %v3351
    %v3355 = vrsqrt.pop %v3352
    %v3356 = vrsqrt.pop %v3353
    %v3357 = vmul.f32 %v3336, %v3354
    %v3358 = vmul.f32 %v3337, %v3355
    %v3359 = vmul.f32 %v3338, %v3356
    %v3360 = vlaneseq
    %v3361 = vshrl.u32 %v3360, 7
    %v3362 = vsub.s32 0, %v3361
    %v3363 = vrot.slane %v2132, %v3362
    %v3364 = vmul.f32 %v3357, %v3363
    %v3365 = vmul.f32 %v3358, %v3363
    %v3366 = vmul.f32 %v3359, %v3363
    %v3367 = vlaneseq
    %v3368 = vshrl.u32 %v3367, 7
    %v3369 = vsub.s32 1, %v3368
    %v3370 = vrot.slane %v2132, %v3369
    %v3371 = vadd.f32 %v3364, %v3370
    %v3372 = vadd.f32 %v3365, %v3370
    %v3373 = vadd.f32 %v3366, %v3370
    %v3374 = vpack.c.bf16 %v3372, %v3371
    %v3375 = vpack.c.bf16 %v3373, %v3373
    %v3377 = vlaneseq
    %v3378 = vshrl.u32 %v3377, 7
    %v3379 = vsub.s32 0, %v3378
    %v3380 = vrot.slane %v2095, %v3379
    %v3381 = vlaneseq
    %v3382 = vshrl.u32 %v3381, 7
    %v3383 = vsub.s32 1, %v3382
    %v3384 = vrot.slane %v2095, %v3383
    %v3403 = vunpack.c.l.b16 %v2078
    %v3404 = vunpack.c.h.b16 %v2078
    %v3405 = vunpack.c.l.b16 %v2079
    %v3406 = vunpack.c.h.b16 %v2079
    %v3407 = vunpack.c.l.b16 %v2080
    %v3408 = vunpack.c.h.b16 %v2080
    %v3409 = vunpack.c.l.b16 %v2081
    %v3410 = vunpack.c.h.b16 %v2081
    %v3411 = vunpack.c.l.b16 %v2082
    %v3412 = vunpack.c.h.b16 %v2082
    %v3413 = vunpack.c.l.b16 %v2083
    %v3414 = vunpack.c.h.b16 %v2083
    %v3415 = vunpack.c.l.b16 %v2084
    %v3416 = vunpack.c.h.b16 %v2084
    %v3417 = vunpack.c.l.b16 %v2085
    %v3418 = vunpack.c.h.b16 %v2085
    %v3419 = vunpack.c.l.b16 %v2086
    %v3420 = vunpack.c.h.b16 %v2086
    %v3421 = vunpack.c.l.b16 %v2087
    %v3422 = vunpack.c.h.b16 %v2087
    %v3423 = vunpack.c.l.b16 %v2088
    %v3424 = vunpack.c.h.b16 %v2088
    %v3425 = vunpack.c.l.b16 %v2089
    %v3426 = vunpack.c.h.b16 %v2089
    %v3427 = vunpack.c.l.b16 %v2090
    %v3428 = vunpack.c.h.b16 %v2090
    %v3429 = vunpack.c.l.b16 %v2091
    %v3430 = vunpack.c.h.b16 %v2091
    %v3431 = vunpack.c.l.b16 %v2092
    %v3432 = vunpack.c.h.b16 %v2092
    %v3433 = vunpack.c.l.b16 %v2093
    %v3434 = vunpack.c.h.b16 %v2093
    %v3435 = vpack.c.b16 %v3405, %v3403
    %v3436 = vpack.c.b16 %v3406, %v3404
    %v3437 = vpack.c.b16 %v3409, %v3407
    %v3438 = vpack.c.b16 %v3410, %v3408
    %v3439 = vpack.c.b16 %v3413, %v3411
    %v3440 = vpack.c.b16 %v3414, %v3412
    %v3441 = vpack.c.b16 %v3417, %v3415
    %v3442 = vpack.c.b16 %v3418, %v3416
    %v3443 = vpack.c.b16 %v3421, %v3419
    %v3444 = vpack.c.b16 %v3422, %v3420
    %v3445 = vpack.c.b16 %v3425, %v3423
    %v3446 = vpack.c.b16 %v3426, %v3424
    %v3447 = vpack.c.b16 %v3429, %v3427
    %v3448 = vpack.c.b16 %v3430, %v3428
    %v3449 = vpack.c.b16 %v3433, %v3431
    %v3450 = vpack.c.b16 %v3434, %v3432
    %3467 = vmatprep.subr.bf16.mxu0 %v3436
    %3468 = vmatpush1.bf16.msra.mxu0 %v3435
    %3469 = vmatprep.subr.bf16.mxu0 %v3438
    %3470 = vmatpush1.bf16.msra.mxu0 %v3437
    %3471 = vmatprep.subr.bf16.mxu0 %v3440
    %3472 = vmatpush1.bf16.msra.mxu0 %v3439
    %3473 = vmatprep.subr.bf16.mxu0 %v3442
    %3474 = vmatpush1.bf16.msra.mxu0 %v3441
    %3475 = vmatprep.subr.bf16.mxu0 %v3444
    %3476 = vmatpush1.bf16.msra.mxu0 %v3443
    %3477 = vmatprep.subr.bf16.mxu0 %v3446
    %3478 = vmatpush1.bf16.msra.mxu0 %v3445
    %3479 = vmatprep.subr.bf16.mxu0 %v3448
    %3480 = vmatpush1.bf16.msra.mxu0 %v3447
    %3481 = vmatprep.subr.bf16.mxu0 %v3450
    %3482 = vmatpush1.bf16.msra.mxu0 %v3449
    %3483 = vmatprep.subr.bf16.mxu0 0
    %3484 = vmatpush1.bf16.msra.mxu0 0
    %3485 = vmatprep.subr.bf16.mxu0 0
    %3486 = vmatpush1.bf16.msra.mxu0 0
    %3487 = vmatprep.subr.bf16.mxu0 0
    %3488 = vmatpush1.bf16.msra.mxu0 0
    %3489 = vmatprep.subr.bf16.mxu0 0
    %3490 = vmatpush1.bf16.msra.mxu0 0
    %3491 = vmatprep.subr.bf16.mxu0 0
    %3492 = vmatpush1.bf16.msra.mxu0 0
    %3493 = vmatprep.subr.bf16.mxu0 0
    %3494 = vmatpush1.bf16.msra.mxu0 0
    %3495 = vmatprep.subr.bf16.mxu0 0
    %3496 = vmatpush1.bf16.msra.mxu0 0
    %3497 = vmatprep.subr.bf16.mxu0 0
    %3498 = vmatpush1.bf16.msra.mxu0 0
    %3499 = vmatprep.mubr.bf16.mxu0 0
    %3500 = vmatmul.mubr.bf16.gmra.mrb[0].mxu0 %v3374
    %v3501 = vpop.f32.mrb[0].mxu0
    %v3502 = vadd.f32 %v3380, %v3501
    %v3503 = vpop.f32.mrb[0].mxu0
    %v3504 = vadd.f32 %v3384, %v3503
    %v3505 = vpop.f32.mrb[0].mxu0
    %v3506 = vadd.f32 %v3380, %v3505
    %v3507 = vpop.f32.mrb[0].mxu0
    %v3508 = vadd.f32 %v3384, %v3507
    %3509 = vmatprep.mubr.bf16.mxu0 0
    %3510 = vmatmul.mubr.bf16.gmra.mrb[0].mxu0 %v3375
    %v3511 = vpop.f32.mrb[0].mxu0
    %v3512 = vadd.f32 %v3380, %v3511
    %v3513 = vpop.f32.mrb[0].mxu0
    %v3514 = vadd.f32 %v3384, %v3513
    %v3515 = vpop.f32.mrb[0].mxu0
    %v3516 = vpop.f32.mrb[0].mxu0
    %3517 = vdwg.mxu0
    %v3518 = vmul.f32 %v3502, 0.5
    %v3519 = vmul.f32 %v3504, 0.5
    %v3520 = vmul.f32 %v3506, 0.5
    %v3521 = vmul.f32 %v3508, 0.5
    %v3522 = vmul.f32 %v3512, 0.5
    %v3523 = vmul.f32 %v3514, 0.5
    %v3524 = vmul.f32 %v3502, 0.70710677
    %v3525 = vmul.f32 %v3504, 0.70710677
    %v3526 = vmul.f32 %v3506, 0.70710677
    %v3527 = vmul.f32 %v3508, 0.70710677
    %v3528 = vmul.f32 %v3512, 0.70710677
    %v3529 = vmul.f32 %v3514, 0.70710677
    %v3530 = verf.f32.pop %v3524
    %v3531 = verf.f32.pop %v3525
    %v3532 = verf.f32.pop %v3526
    %v3533 = verf.f32.pop %v3527
    %v3534 = verf.f32.pop %v3528
    %v3535 = verf.f32.pop %v3529
    %v3536 = vadd.f32 %v3530, 1.0
    %v3537 = vadd.f32 %v3531, 1.0
    %v3538 = vadd.f32 %v3532, 1.0
    %v3539 = vadd.f32 %v3533, 1.0
    %v3540 = vadd.f32 %v3534, 1.0
    %v3541 = vadd.f32 %v3535, 1.0
    %v3542 = vmul.f32 %v3518, %v3536
    %v3543 = vmul.f32 %v3519, %v3537
    %v3544 = vmul.f32 %v3520, %v3538
    %v3545 = vmul.f32 %v3521, %v3539
    %v3546 = vmul.f32 %v3522, %v3540
    %v3547 = vmul.f32 %v3523, %v3541
    %v3548 = vpack.c.bf16 %v3544, %v3542
    %v3549 = vpack.c.bf16 %v3545, %v3543
    %v3550 = vpack.c.bf16 %v3546, %v3546
    %v3551 = vpack.c.bf16 %v3547, %v3547
    %v3553 = vlaneseq
    %v3554 = vshrl.u32 %v3553, 7
    %v3555 = vsub.s32 0, %v3554
    %v3556 = vrot.slane %v2130, %v3555
    %v3590 = vunpack.c.l.b16 %v2097
    %v3591 = vunpack.c.l.b16 %v2098
    %v3592 = vunpack.c.l.b16 %v2099
    %v3593 = vunpack.c.l.b16 %v2100
    %v3594 = vunpack.c.l.b16 %v2101
    %v3595 = vunpack.c.l.b16 %v2102
    %v3596 = vunpack.c.l.b16 %v2103
    %v3597 = vunpack.c.l.b16 %v2104
    %v3598 = vunpack.c.l.b16 %v2105
    %v3599 = vunpack.c.l.b16 %v2106
    %v3600 = vunpack.c.l.b16 %v2107
    %v3601 = vunpack.c.l.b16 %v2108
    %v3602 = vunpack.c.l.b16 %v2109
    %v3603 = vunpack.c.l.b16 %v2110
    %v3604 = vunpack.c.l.b16 %v2111
    %v3605 = vunpack.c.l.b16 %v2112
    %v3606 = vunpack.c.l.b16 %v2113
    %v3607 = vunpack.c.l.b16 %v2114
    %v3608 = vunpack.c.l.b16 %v2115
    %v3609 = vunpack.c.l.b16 %v2116
    %v3610 = vunpack.c.l.b16 %v2117
    %v3611 = vunpack.c.l.b16 %v2118
    %v3612 = vunpack.c.l.b16 %v2119
    %v3613 = vunpack.c.l.b16 %v2120
    %v3614 = vunpack.c.l.b16 %v2121
    %v3615 = vunpack.c.l.b16 %v2122
    %v3616 = vunpack.c.l.b16 %v2123
    %v3617 = vunpack.c.l.b16 %v2124
    %v3618 = vunpack.c.l.b16 %v2125
    %v3619 = vunpack.c.l.b16 %v2126
    %v3620 = vunpack.c.l.b16 %v2127
    %v3621 = vunpack.c.l.b16 %v2128
    %v3622 = vpack.c.b16 %v3591, %v3590
    %v3623 = vpack.c.b16 %v3593, %v3592
    %v3624 = vpack.c.b16 %v3595, %v3594
    %v3625 = vpack.c.b16 %v3597, %v3596
    %v3626 = vpack.c.b16 %v3599, %v3598
    %v3627 = vpack.c.b16 %v3601, %v3600
    %v3628 = vpack.c.b16 %v3603, %v3602
    %v3629 = vpack.c.b16 %v3605, %v3604
    %v3630 = vpack.c.b16 %v3607, %v3606
    %v3631 = vpack.c.b16 %v3609, %v3608
    %v3632 = vpack.c.b16 %v3611, %v3610
    %v3633 = vpack.c.b16 %v3613, %v3612
    %v3634 = vpack.c.b16 %v3615, %v3614
    %v3635 = vpack.c.b16 %v3617, %v3616
    %v3636 = vpack.c.b16 %v3619, %v3618
    %v3637 = vpack.c.b16 %v3621, %v3620
    %3654 = vmatprep.subr.bf16.mxu0 0
    %3655 = vmatpush1.bf16.msra.mxu0 %v3622
    %3656 = vmatprep.subr.bf16.mxu0 0
    %3657 = vmatpush1.bf16.msra.mxu0 %v3623
    %3658 = vmatprep.subr.bf16.mxu0 0
    %3659 = vmatpush1.bf16.msra.mxu0 %v3624
    %3660 = vmatprep.subr.bf16.mxu0 0
    %3661 = vmatpush1.bf16.msra.mxu0 %v3625
    %3662 = vmatprep.subr.bf16.mxu0 0
    %3663 = vmatpush1.bf16.msra.mxu0 %v3626
    %3664 = vmatprep.subr.bf16.mxu0 0
    %3665 = vmatpush1.bf16.msra.mxu0 %v3627
    %3666 = vmatprep.subr.bf16.mxu0 0
    %3667 = vmatpush1.bf16.msra.mxu0 %v3628
    %3668 = vmatprep.subr.bf16.mxu0 0
    %3669 = vmatpush1.bf16.msra.mxu0 %v3629
    %3670 = vmatprep.subr.bf16.mxu0 0
    %3671 = vmatpush1.bf16.msra.mxu0 %v3630
    %3672 = vmatprep.subr.bf16.mxu0 0
    %3673 = vmatpush1.bf16.msra.mxu0 %v3631
    %3674 = vmatprep.subr.bf16.mxu0 0
    %3675 = vmatpush1.bf16.msra.mxu0 %v3632
    %3676 = vmatprep.subr.bf16.mxu0 0
    %3677 = vmatpush1.bf16.msra.mxu0 %v3633
    %3678 = vmatprep.subr.bf16.mxu0 0
    %3679 = vmatpush1.bf16.msra.mxu0 %v3634
    %3680 = vmatprep.subr.bf16.mxu0 0
    %3681 = vmatpush1.bf16.msra.mxu0 %v3635
    %3682 = vmatprep.subr.bf16.mxu0 0
    %3683 = vmatpush1.bf16.msra.mxu0 %v3636
    %3684 = vmatprep.subr.bf16.mxu0 0
    %3685 = vmatpush1.bf16.msra.mxu0 %v3637
    %3686 = vmatprep.mubr.bf16.mxu0 %v3549
    %3687 = vmatmul.mubr.bf16.gmra.mrb[0].mxu0 %v3548
    %v3688 = vpop.f32.mrb[0].mxu0
    %v3689 = vadd.f32 %v3556, %v3688
    %v3690 = vpop.f32.mrb[0].mxu0
    %v3691 = vpop.f32.mrb[0].mxu0
    %v3692 = vadd.f32 %v3556, %v3691
    %v3693 = vpop.f32.mrb[0].mxu0
    %3694 = vmatprep.mubr.bf16.mxu0 %v3551
    %3695 = vmatmul.mubr.bf16.gmra.mrb[0].mxu0 %v3550
    %v3696 = vpop.f32.mrb[0].mxu0
    %v3697 = vadd.f32 %v3556, %v3696
    %v3698 = vpop.f32.mrb[0].mxu0
    %v3699 = vpop.f32.mrb[0].mxu0
    %v3700 = vpop.f32.mrb[0].mxu0
    %3701 = vdwg.mxu0
    %v3702 = vadd.f32 %v3371, %v3689
    %v3703 = vadd.f32 %v3372, %v3692
    %v3704 = vadd.f32 %v3373, %v3697
    %3705 = vadd.xlane.f32.xlu0 %v3702
    %v3706 = vpop.xlane.xlu0 %3705
    %3707 = vadd.xlane.f32.xlu0 %v3703
    %v3708 = vpop.xlane.xlu0 %3707
    %3709 = vadd.xlane.f32.xlu0 %v3704
    %v3710 = vpop.xlane.xlu0 %3709
    %v3711 = vmul.f32 %v3706, %v1603
    %v3712 = vmul.f32 %v3708, %v1603
    %v3713 = vmul.f32 %v3710, %v1603
    %v3714 = vsub.f32 %v3702, %v3711
    %v3715 = vsub.f32 %v3703, %v3712
    %v3716 = vsub.f32 %v3704, %v3713
    %v3717 = vmul.f32 %v3714, %v3714
    %v3718 = vmul.f32 %v3715, %v3715
    %v3719 = vmul.f32 %v3716, %v3716
    %3720 = vadd.xlane.f32.xlu0 %v3717
    %v3721 = vpop.xlane.xlu0 %3720
    %3722 = vadd.xlane.f32.xlu0 %v3718
    %v3723 = vpop.xlane.xlu0 %3722
    %3724 = vadd.xlane.f32.xlu0 %v3719
    %v3725 = vpop.xlane.xlu0 %3724
    %v3726 = vmul.f32 %v3721, %v1603
    %v3727 = vmul.f32 %v3723, %v1603
    %v3728 = vmul.f32 %v3725, %v1603
    %v3729 = vadd.f32 %v3726, 1e-05
    %v3730 = vadd.f32 %v3727, 1e-05
    %v3731 = vadd.f32 %v3728, 1e-05
    %v3732 = vrsqrt.pop %v3729
    %v3733 = vrsqrt.pop %v3730
    %v3734 = vrsqrt.pop %v3731
    %v3735 = vmul.f32 %v3714, %v3732
    %v3736 = vmul.f32 %v3715, %v3733
    %v3737 = vmul.f32 %v3716, %v3734
    %v3738 = vlaneseq
    %v3739 = vshrl.u32 %v3738, 7
    %v3740 = vsub.s32 2, %v3739
    %v3741 = vrot.slane %v2132, %v3740
    %v3742 = vmul.f32 %v3735, %v3741
    %v3743 = vmul.f32 %v3736, %v3741
    %v3744 = vmul.f32 %v3737, %v3741
    %v3745 = vlaneseq
    %v3746 = vshrl.u32 %v3745, 7
    %v3747 = vsub.s32 3, %v3746
    %v3748 = vrot.slane %v2132, %v3747
    %v3749 = vadd.f32 %v3742, %v3748
    %v3750 = vadd.f32 %v3743, %v3748
    %v3751 = vadd.f32 %v3744, %v3748
    %v3752 = vpack.c.bf16 %v3750, %v3749
    %v3753 = vpack.c.bf16 %v3751, %v3751
    %v3754 = vld [vmem:[#allocation16] sm:$0xf]
    %v3755 = vld [vmem:[#allocation16 + $0x4] sm:$0xf]
    %v3756 = vld [vmem:[#allocation16 + $0x8] sm:$0xf]
    %v3757 = vld [vmem:[#allocation16 + $0xc] sm:$0xf]
    %v3758 = vld [vmem:[#allocation16 + $0x10] sm:$0xf]
    %v3759 = vld [vmem:[#allocation16 + $0x14] sm:$0xf]
    %v3760 = vld [vmem:[#allocation16 + $0x18] sm:$0xf]
    %v3761 = vld [vmem:[#allocation16 + $0x1c] sm:$0xf]
    %v3762 = vld [vmem:[#allocation16 + $0x20] sm:$0xf]
    %v3763 = vld [vmem:[#allocation16 + $0x24] sm:$0xf]
    %v3764 = vld [vmem:[#allocation16 + $0x28] sm:$0xf]
    %v3765 = vld [vmem:[#allocation16 + $0x2c] sm:$0xf]
    %v3766 = vld [vmem:[#allocation16 + $0x30] sm:$0xf]
    %v3767 = vld [vmem:[#allocation16 + $0x34] sm:$0xf]
    %v3768 = vld [vmem:[#allocation16 + $0x38] sm:$0xf]
    %v3769 = vld [vmem:[#allocation16 + $0x3c] sm:$0xf]
    %v3770 = vld [vmem:[%s14] sm:$0x1]
    %v3772 = vlaneseq
    %v3773 = vshrl.u32 %v3772, 7
    %v3774 = vsub.s32 0, %v3773
    %v3775 = vrot.slane %v3770, %v3774
    %v3793 = vunpack.c.l.b16 %v3754
    %v3794 = vunpack.c.l.b16 %v3755
    %v3795 = vunpack.c.l.b16 %v3756
    %v3796 = vunpack.c.l.b16 %v3757
    %v3797 = vunpack.c.l.b16 %v3758
    %v3798 = vunpack.c.l.b16 %v3759
    %v3799 = vunpack.c.l.b16 %v3760
    %v3800 = vunpack.c.l.b16 %v3761
    %v3801 = vunpack.c.l.b16 %v3762
    %v3802 = vunpack.c.l.b16 %v3763
    %v3803 = vunpack.c.l.b16 %v3764
    %v3804 = vunpack.c.l.b16 %v3765
    %v3805 = vunpack.c.l.b16 %v3766
    %v3806 = vunpack.c.l.b16 %v3767
    %v3807 = vunpack.c.l.b16 %v3768
    %v3808 = vunpack.c.l.b16 %v3769
    %v3809 = vpack.c.b16 %v3794, %v3793
    %v3810 = vpack.c.b16 %v3796, %v3795
    %v3811 = vpack.c.b16 %v3798, %v3797
    %v3812 = vpack.c.b16 %v3800, %v3799
    %v3813 = vpack.c.b16 %v3802, %v3801
    %v3814 = vpack.c.b16 %v3804, %v3803
    %v3815 = vpack.c.b16 %v3806, %v3805
    %v3816 = vpack.c.b16 %v3808, %v3807
    %3825 = vmatprep.subr.bf16.mxu0 0
    %3826 = vmatpush1.bf16.msra.mxu0 %v3809
    %3827 = vmatprep.subr.bf16.mxu0 0
    %3828 = vmatpush1.bf16.msra.mxu0 %v3810
    %3829 = vmatprep.subr.bf16.mxu0 0
    %3830 = vmatpush1.bf16.msra.mxu0 %v3811
    %3831 = vmatprep.subr.bf16.mxu0 0
    %3832 = vmatpush1.bf16.msra.mxu0 %v3812
    %3833 = vmatprep.subr.bf16.mxu0 0
    %3834 = vmatpush1.bf16.msra.mxu0 %v3813
    %3835 = vmatprep.subr.bf16.mxu0 0
    %3836 = vmatpush1.bf16.msra.mxu0 %v3814
    %3837 = vmatprep.subr.bf16.mxu0 0
    %3838 = vmatpush1.bf16.msra.mxu0 %v3815
    %3839 = vmatprep.subr.bf16.mxu0 0
    %3840 = vmatpush1.bf16.msra.mxu0 %v3816
    %3841 = vmatprep.subr.bf16.mxu0 0
    %3842 = vmatpush1.bf16.msra.mxu0 0
    %3843 = vmatprep.subr.bf16.mxu0 0
    %3844 = vmatpush1.bf16.msra.mxu0 0
    %3845 = vmatprep.subr.bf16.mxu0 0
    %3846 = vmatpush1.bf16.msra.mxu0 0
    %3847 = vmatprep.subr.bf16.mxu0 0
    %3848 = vmatpush1.bf16.msra.mxu0 0
    %3849 = vmatprep.subr.bf16.mxu0 0
    %3850 = vmatpush1.bf16.msra.mxu0 0
    %3851 = vmatprep.subr.bf16.mxu0 0
    %3852 = vmatpush1.bf16.msra.mxu0 0
    %3853 = vmatprep.subr.bf16.mxu0 0
    %3854 = vmatpush1.bf16.msra.mxu0 0
    %3855 = vmatprep.subr.bf16.mxu0 0
    %3856 = vmatpush1.bf16.msra.mxu0 0
    %3857 = vmatprep.mubr.bf16.mxu0 0
    %3858 = vmatmul.mubr.bf16.gmra.mrb[0].mxu0 %v3752
    %v3859 = vpop.f32.mrb[0].mxu0
    %v3860 = vadd.f32 %v3775, %v3859
    %v3861 = vpop.f32.mrb[0].mxu0
    %v3862 = vpop.f32.mrb[0].mxu0
    %v3863 = vadd.f32 %v3775, %v3862
    %v3864 = vpop.f32.mrb[0].mxu0
    %3865 = vmatprep.mubr.bf16.mxu0 0
    %3866 = vmatmul.mubr.bf16.gmra.mrb[0].mxu0 %v3753
    %v3867 = vpop.f32.mrb[0].mxu0
    %v3868 = vadd.f32 %v3775, %v3867
    %v3869 = vpop.f32.mrb[0].mxu0
    %v3870 = vpop.f32.mrb[0].mxu0
    %v3871 = vpop.f32.mrb[0].mxu0
    %3872 = vdwg.mxu0
    %3873 = vst [vmem:[#allocation17] sm:$0xff] %v3860
    %3874 = vst [vmem:[#allocation17 + $0x8] sm:$0xff] %v3863
    %3875 = vst [vmem:[#allocation17 + $0x10] sm:$0xff] %v3868
    // Predicated region
    $region98: #{tpu_custom_call.1} parent=1 // pred_check
      _
    $region99: #{tpu_custom_call.1} parent=1 // pred_check_branch
      %3877 = sbr.rel (0) target = $region101
    $region100: #{tpu_custom_call.1} parent=1 // pred_region
      %s3879 = ssub.s32 384, 384
      %3880 = vsyncadd [#allocation4], %s3879
      %s3881 = sshll.u32 [#allocation17], 4
      %s3882 = int_to_ptr.vmem [resolvable:$true] %s3881
      %3887 = dma.vmem_to_hbm [thread:$0]  %s3882, 384, %s15, [#allocation4], 128, 128, 8
    $region101: #{tpu_custom_call.1} parent=1 // pred_fallthru
      _
    // Predicated region
    $region102: #{tpu_custom_call.1} parent=1 // pred_check
      _
    $region103: #{tpu_custom_call.1} parent=1 // pred_check_branch
      %3889 = sbr.rel (0) target = $region105
    $region104: #{tpu_custom_call.1} parent=1 // pred_region
      %3890 = dma.done [#allocation4], 384
    $region105: #{tpu_custom_call.1} parent=1 // pred_fallthru
      _
    %3891 = vsyncpa [#allocation3], 1
    %3892 = vsyncpa [#allocation6], 1
    %3893 = vsyncpa [#allocation9], 1
    %3894 = vsyncpa [#allocation12], 1
    %3895 = vsyncpa [#allocation15], 1
    %3896 = vsyncpa [#allocation4], 1

</llo_original>
